<compile_context>
chip_gen: v7x
topology: tpu7x:2x2x1
jax: 0.10.0
libtpu: 0.0.40
codegen_flags: <defaults>
</compile_context>

<pallas_src>
import jax
import jax.numpy as jnp
import numpy as np
from jax.experimental import pallas as pl
from jax.experimental.pallas import tpu as pltpu

# ---- model dimensions implied by the module's __init__ ---------------------
PARAMS_TLS = 8          # params_tls: input feature count for nn_tcl
NUM_PHASES = 4          # num_phases: output logits
H_TCL      = 1          # hidden_size_tcl
H_COMB     = 2          # combined_input = hidden_size + global_output
FC1        = 4          # combined_out
FC2        = 2

LANES   = 128           # lane axis = traffic-light batch (B <= 128)
IN_ROWS = 16            # per-step input rows: 0..7 features, 8 wait time, rest pad
S_ROWS  = 8             # packed state rows: h_tcl, c_tcl, h_c(2), c_c(2), pad(2)
T_CHUNK = 4             # time steps unrolled per grid step

# ---- packed scalar-parameter layout (one 1-D SMEM f32 buffer) ---------------
C_WG    = 0                                   # nn_global weight          (1)
C_BG    = C_WG + 1                            # nn_global bias            (1)
C_WIH_T = C_BG + 1                            # tcl LSTM W_ih  (4,8) row-major
C_WHH_T = C_WIH_T + 4 * H_TCL * PARAMS_TLS    # tcl LSTM W_hh  (4,1)
C_B_T   = C_WHH_T + 4 * H_TCL * H_TCL         # tcl LSTM bias  (4,)  (b_ih+b_hh)
C_WIH_C = C_B_T + 4 * H_TCL                   # comb LSTM W_ih (8,2) row-major
C_WHH_C = C_WIH_C + 4 * H_COMB * H_COMB       # comb LSTM W_hh (8,2)
C_B_C   = C_WHH_C + 4 * H_COMB * H_COMB       # comb LSTM bias (8,)
C_W1    = C_B_C + 4 * H_COMB                  # fc1 weight (4,2)
C_B1    = C_W1 + FC1 * H_COMB                 # fc1 bias   (4,)
C_W2    = C_B1 + FC1                          # fc2 weight (2,4)
C_B2    = C_W2 + FC2 * FC1                    # fc2 bias   (2,)
C_WO    = C_B2 + FC2                          # out weight (4,2)
C_BO    = C_WO + NUM_PHASES * FC2             # out bias   (4,)
P_END   = C_BO + NUM_PHASES
PBUF    = 128
assert P_END <= PBUF


def traffic_kernel(p_ref, tlen_ref, s0_ref, x_ref, out_ref, s_ref, g_ref):
    """One grid step = T_CHUNK decision steps for up to 128 lights (lanes).

    p_ref:    SMEM f32[PBUF]            packed scalar parameters
    tlen_ref: SMEM int32[1]             true (unpadded) number of steps
    s0_ref:   VMEM (8,128)              initial packed recurrent state
    x_ref:    VMEM (T_CHUNK,16,128)     per-step inputs (features + wait time)
    out_ref:  VMEM (T_CHUNK,4,128)      per-step logits (lane = light)
    s_ref:    VMEM (8,128)              resident running/final state (output)
    g_ref:    VMEM (8,128)              scratch: stacked gate pre-activations
    """
    ci = pl.program_id(0)

    @pl.when(ci == 0)
    def _():
        s_ref[...] = s0_ref[...]   # rows: h_tcl, c_tcl, h_c(2), c_c(2), pad(2)

    # Hoist all scalar parameter loads once per grid step.
    W = [p_ref[i] for i in range(P_END)]
    t_len = tlen_ref[0]

    for tc in range(T_CHUNK):
        step = ci * T_CHUNK + tc
        valid = step < t_len          # padded tail steps must not advance state

        xs = [x_ref[tc, k:k + 1, :] for k in range(PARAMS_TLS)]    # 8 x (1,B)
        wait = x_ref[tc, PARAMS_TLS:PARAMS_TLS + 1, :]             # (1,B)

        h_t  = s_ref[0:1, :]
        c_t  = s_ref[1:2, :]
        h_c0 = s_ref[2:3, :]
        h_c1 = s_ref[3:4, :]
        c_c  = s_ref[4:6, :]                                       # (2,B)

        # ---- nn_global: Linear(1, 1) ------------------------------------
        out_g = wait * W[C_WG] + W[C_BG]                           # (1,B)

        # ---- nn_tcl: LSTM cell (input 8 -> hidden 1); gate order i,f,g,o.
        # Pre-activations stacked in scratch -> one tanh push per cell,
        # sigmoid(x) = 0.5*tanh(0.5*x) + 0.5.
        for gi in range(4):
            v = xs[0] * W[C_WIH_T + gi * PARAMS_TLS + 0]
            for k in range(1, PARAMS_TLS):
                v = v + xs[k] * W[C_WIH_T + gi * PARAMS_TLS + k]
            v = v + h_t * W[C_WHH_T + gi] + W[C_B_T + gi]
            if gi != 2:                       # i, f, o go through sigmoid
                v = v * 0.5
            g_ref[gi:gi + 1, :] = v
        gt = jnp.tanh(g_ref[0:4, :])                               # (4,B)
        i_t  = 0.5 * gt[0:1] + 0.5
        f_t  = 0.5 * gt[1:2] + 0.5
        gg_t = gt[2:3]
        o_t  = 0.5 * gt[3:4] + 0.5
        c_t_new = f_t * c_t + i_t * gg_t                           # (1,B)
        h_t_new = o_t * jnp.tanh(c_t_new)                          # (1,B)

        # ---- nn_combined: LSTM cell (input [out_g, h_t] -> hidden 2) -----
        # concat-free: x_c @ W_ih == out_g*W_ih[:,0] + h_t*W_ih[:,1]
        for gu in range(4 * H_COMB):          # rows i0,i1,f0,f1,g0,g1,o0,o1
            v = (out_g     * W[C_WIH_C + gu * H_COMB + 0]
                 + h_t_new * W[C_WIH_C + gu * H_COMB + 1]
                 + h_c0    * W[C_WHH_C + gu * H_COMB + 0]
                 + h_c1    * W[C_WHH_C + gu * H_COMB + 1]
                 + W[C_B_C + gu])
            if not (4 <= gu < 6):             # i, f, o units -> sigmoid
                v = v * 0.5
            g_ref[gu:gu + 1, :] = v
        gc = jnp.tanh(g_ref[0:8, :])                               # (8,B)
        i_c  = 0.5 * gc[0:2] + 0.5
        f_c  = 0.5 * gc[2:4] + 0.5
        gg_c = gc[4:6]
        o_c  = 0.5 * gc[6:8] + 0.5
        c_c_new = f_c * c_c + i_c * gg_c                           # (2,B)
        h_c_new = o_c * jnp.tanh(c_c_new)                          # (2,B)
        hc0 = h_c_new[0:1]
        hc1 = h_c_new[1:2]

        # ---- nn_fc_layers: Linear(2,4) -> ReLU -> Linear(4,2) -> ReLU -----
        y1 = []
        for j in range(FC1):
            v = (hc0 * W[C_W1 + j * H_COMB + 0]
                 + hc1 * W[C_W1 + j * H_COMB + 1] + W[C_B1 + j])
            y1.append(jnp.maximum(v, 0.0))
        y2 = []
        for j in range(FC2):
            v = y1[0] * W[C_W2 + j * FC1 + 0] + W[C_B2 + j]
            for k in range(1, FC1):
                v = v + y1[k] * W[C_W2 + j * FC1 + k]
            y2.append(jnp.maximum(v, 0.0))

        # ---- nn_output: Linear(2, num_phases); lane-dense (1,B) row stores
        for ph in range(NUM_PHASES):
            out_ref[tc, ph:ph + 1, :] = (
                y2[0] * W[C_WO + ph * FC2 + 0]
                + y2[1] * W[C_WO + ph * FC2 + 1] + W[C_BO + ph])

        # ---- recurrent state update (state block stays resident in VMEM) --
        @pl.when(valid)
        def _():
            s_ref[0:1, :] = h_t_new
            s_ref[1:2, :] = c_t_new
            s_ref[2:4, :] = h_c_new
            s_ref[4:6, :] = c_c_new


def traffic_rollout(packed_params, init_state, feat_seq, wait_seq):
    """Roll TrafficLightOptimizerNeuron.forward over T steps for B lights.

    packed_params: f32[128]        (pack_params)
    init_state:    f32[8, 128]     rows [h_tcl, c_tcl, h_c0, h_c1, c_c0, c_c1, 0, 0]
    feat_seq:      f32[T, B, 8]    per-step `state` vectors (B lights, shared weights)
    wait_seq:      f32[T, B]       per-step `current_wait_time`
    Returns (logits f32[T, B, num_phases], final packed state f32[8, 128]).
    """
    T, B, F = feat_seq.shape
    assert F == PARAMS_TLS and B <= LANES
    n_chunks = (T + T_CHUNK - 1) // T_CHUNK
    t_pad = n_chunks * T_CHUNK

    # Pack the whole sequence once (features on sublanes, lights on lanes).
    x = jnp.zeros((t_pad, IN_ROWS, LANES), jnp.float32)
    x = x.at[:T, 0:PARAMS_TLS, 0:B].set(
        jnp.transpose(feat_seq.astype(jnp.float32), (0, 2, 1)))
    x = x.at[:T, PARAMS_TLS, 0:B].set(wait_seq.astype(jnp.float32))
    t_len = jnp.array([T], jnp.int32)

    logits_pad, final_state = pl.pallas_call(
        traffic_kernel,
        grid=(n_chunks,),
        in_specs=[
            pl.BlockSpec(memory_space=pltpu.MemorySpace.SMEM),               # params
            pl.BlockSpec(memory_space=pltpu.MemorySpace.SMEM),               # t_len
            pl.BlockSpec((S_ROWS, LANES), lambda ci: (0, 0)),                # init state
            pl.BlockSpec((T_CHUNK, IN_ROWS, LANES), lambda ci: (ci, 0, 0)),  # inputs
        ],
        out_specs=(
            pl.BlockSpec((T_CHUNK, NUM_PHASES, LANES), lambda ci: (ci, 0, 0)),
            pl.BlockSpec((S_ROWS, LANES), lambda ci: (0, 0)),                # resident
        ),
        out_shape=(
            jax.ShapeDtypeStruct((t_pad, NUM_PHASES, LANES), jnp.float32),
            jax.ShapeDtypeStruct((S_ROWS, LANES), jnp.float32),
        ),
        scratch_shapes=[pltpu.VMEM((S_ROWS, LANES), jnp.float32)],           # gate stack
        compiler_params=pltpu.CompilerParams(
            dimension_semantics=("arbitrary",)),                             # recurrence
    )(packed_params, t_len, init_state, x)

    logits = jnp.transpose(logits_pad[:T, :, 0:B], (0, 2, 1))                # (T,B,NP)
    return logits, final_state


def init_params(key):
    """Deterministic synthetic parameters in PyTorch layout."""
    ks = jax.random.split(key, 14)
    n = lambda k, s: (0.1 * jax.random.normal(k, s)).astype(jnp.float32)
    return dict(
        wg=n(ks[0], (1, 1)),                      bg=n(ks[1], (1,)),
        wih_t=n(ks[2], (4 * H_TCL, PARAMS_TLS)),  whh_t=n(ks[3], (4 * H_TCL, H_TCL)),
        b_t=n(ks[4], (4 * H_TCL,)),               # bias_ih + bias_hh combined
        wih_c=n(ks[5], (4 * H_COMB, H_COMB)),     whh_c=n(ks[6], (4 * H_COMB, H_COMB)),
        b_c=n(ks[7], (4 * H_COMB,)),
        w1=n(ks[8], (FC1, H_COMB)),               b1=n(ks[9], (FC1,)),
        w2=n(ks[10], (FC2, FC1)),                 b2=n(ks[11], (FC2,)),
        wo=n(ks[12], (NUM_PHASES, FC2)),          bo=n(ks[13], (NUM_PHASES,)),
    )


def pack_params(p):
    """Flatten every parameter into one 1-D SMEM-resident f32 buffer."""
    buf = np.zeros((PBUF,), np.float32)

    def put(off, arr):
        a = np.asarray(arr, np.float32).reshape(-1)
        buf[off:off + a.size] = a

    put(C_WG, p['wg']);       put(C_BG, p['bg'])
    put(C_WIH_T, p['wih_t']); put(C_WHH_T, p['whh_t']); put(C_B_T, p['b_t'])
    put(C_WIH_C, p['wih_c']); put(C_WHH_C, p['whh_c']); put(C_B_C, p['b_c'])
    put(C_W1, p['w1']);       put(C_B1, p['b1'])
    put(C_W2, p['w2']);       put(C_B2, p['b2'])
    put(C_WO, p['wo']);       put(C_BO, p['bo'])
    return jnp.asarray(buf)


def reference_rollout(params, feat_seq, wait_seq):
    """Pure-NumPy per-light, per-step replay of the PyTorch forward()."""
    p = {k: np.asarray(v, np.float64) for k, v in params.items()}
    sig = lambda x: 1.0 / (1.0 + np.exp(-x))
    feats = np.asarray(feat_seq, np.float64)
    waits = np.asarray(wait_seq, np.float64)
    T, B, _ = feats.shape
    logits = np.zeros((T, B, NUM_PHASES))
    final = np.zeros((6, B))
    for b in range(B):
        h_t = np.zeros((1, 1)); c_t = np.zeros((1, 1))
        h_c = np.zeros((1, 2)); c_c = np.zeros((1, 2))
        for t in range(T):
            x = feats[t, b].reshape(1, PARAMS_TLS)
            out_g = waits[t, b] * p['wg'] + p['bg']
            gt = x @ p['wih_t'].T + h_t @ p['whh_t'].T + p['b_t']
            i, f = sig(gt[:, 0:1]), sig(gt[:, 1:2])
            g, o = np.tanh(gt[:, 2:3]), sig(gt[:, 3:4])
            c_t = f * c_t + i * g
            h_t = o * np.tanh(c_t)
            xc = np.concatenate([out_g, h_t], axis=1)
            gc = xc @ p['wih_c'].T + h_c @ p['whh_c'].T + p['b_c']
            i, f = sig(gc[:, 0:H_COMB]), sig(gc[:, H_COMB:2 * H_COMB])
            g = np.tanh(gc[:, 2 * H_COMB:3 * H_COMB])
            o = sig(gc[:, 3 * H_COMB:4 * H_COMB])
            c_c = f * c_c + i * g
            h_c = o * np.tanh(c_c)
            y = np.maximum(h_c @ p['w1'].T + p['b1'], 0.0)
            y = np.maximum(y @ p['w2'].T + p['b2'], 0.0)
            logits[t, b] = (y @ p['wo'].T + p['bo'])[0]
        final[:, b] = np.concatenate([h_t[0], c_t[0], h_c[0], c_c[0]])
    return logits, final


if __name__ == "__main__":
    key = jax.random.PRNGKey(0)
    k_par, k_feat, k_wait = jax.random.split(key, 3)

    params = init_params(k_par)
    packed = pack_params(params)

    # Small demo: 4 traffic lights, 10 decision steps (T not a multiple of
    # T_CHUNK exercises the padded-tail masking of the state update).
    B, T = 4, 10
    feat_seq = jax.random.normal(k_feat, (T, B, PARAMS_TLS), jnp.float32)
    wait_seq = jax.random.uniform(k_wait, (T, B), jnp.float32) * 10.0
    init_state = jnp.zeros((S_ROWS, LANES), jnp.float32)    # init_hidden_tcl/_c

    rollout = jax.jit(traffic_rollout)
    logits, final_state = rollout(packed, init_state, feat_seq, wait_seq)
    jax.block_until_ready((logits, final_state))

    ref_logits, ref_final = reference_rollout(params, feat_seq, wait_seq)
    np.testing.assert_allclose(np.asarray(logits), ref_logits,
                               rtol=1e-4, atol=1e-4)
    np.testing.assert_allclose(np.asarray(final_state)[0:6, 0:B], ref_final,
                               rtol=1e-4, atol=1e-4)

    assert logits.shape == (T, B, NUM_PHASES)
    print("KERNEL_OK")
</pallas_src>

<mosaic_0001>
module attributes {stable_mosaic.version = 11 : i64} {
  func.func @traffic_kernel(%arg0: i32, %arg1: memref<128xf32, #tpu.memory_space<smem>>, %arg2: memref<1xi32, #tpu.memory_space<smem>>, %arg3: memref<8x128xf32, #tpu.memory_space<vmem>>, %arg4: memref<4x16x128xf32, #tpu.memory_space<vmem>>, %arg5: memref<4x4x128xf32, #tpu.memory_space<vmem>>, %arg6: memref<8x128xf32, #tpu.memory_space<vmem>>, %arg7: memref<8x128xf32, #tpu.memory_space<vmem>>) attributes {dimension_semantics = [#tpu.dimension_semantics<arbitrary>], iteration_bounds = array<i64: 3>, scalar_prefetch = 0 : i64, scratch_operands = 1 : i64, tpu.core_type = #tpu.core_type<tc>, window_params = [{transform_indices = @transform_0, window_bounds = array<i64: 128>}, {transform_indices = @transform_1, window_bounds = array<i64: 1>}, {pipeline_mode = #tpu.pipeline_mode<synchronous>, transform_indices = @transform_2, window_bounds = array<i64: 8, 128>}, {transform_indices = @transform_3, window_bounds = array<i64: 4, 16, 128>}, {transform_indices = @transform_4, window_bounds = array<i64: 4, 4, 128>}, {pipeline_mode = #tpu.pipeline_mode<synchronous>, transform_indices = @transform_5, window_bounds = array<i64: 8, 128>}]} {
    %c0_i32 = arith.constant 0 : i32
    %0 = arith.cmpi eq, %arg0, %c0_i32 : i32
    %1 = arith.extui %0 : i1 to i32
    %c0_i32_0 = arith.constant 0 : i32
    %2 = arith.cmpi ne, %1, %c0_i32_0 : i32
    scf.if %2 {
      %c0_425 = arith.constant 0 : index
      %c0_426 = arith.constant 0 : index
      %1848 = vector.load %arg3[%c0_425, %c0_426] : memref<8x128xf32, #tpu.memory_space<vmem>>, vector<8x128xf32>
      %c0_427 = arith.constant 0 : index
      %c0_428 = arith.constant 0 : index
      %1849 = vector.load %arg6[%c0_427, %c0_428] : memref<8x128xf32, #tpu.memory_space<vmem>>, vector<8x128xf32>
      tpu.vector_store %arg6[%c0_427, %c0_428], %1848 {strides = array<i32>} : memref<8x128xf32, #tpu.memory_space<vmem>>, vector<8x128xf32>,
    } else {
    }
    %c0 = arith.constant 0 : index
    %3 = memref.load %arg1[%c0] : memref<128xf32, #tpu.memory_space<smem>>
    %c1 = arith.constant 1 : index
    %4 = memref.load %arg1[%c1] : memref<128xf32, #tpu.memory_space<smem>>
    %c2 = arith.constant 2 : index
    %5 = memref.load %arg1[%c2] : memref<128xf32, #tpu.memory_space<smem>>
    %c3 = arith.constant 3 : index
    %6 = memref.load %arg1[%c3] : memref<128xf32, #tpu.memory_space<smem>>
    %c4 = arith.constant 4 : index
    %7 = memref.load %arg1[%c4] : memref<128xf32, #tpu.memory_space<smem>>
    %c5 = arith.constant 5 : index
    %8 = memref.load %arg1[%c5] : memref<128xf32, #tpu.memory_space<smem>>
    %c6 = arith.constant 6 : index
    %9 = memref.load %arg1[%c6] : memref<128xf32, #tpu.memory_space<smem>>
    %c7 = arith.constant 7 : index
    %10 = memref.load %arg1[%c7] : memref<128xf32, #tpu.memory_space<smem>>
    %c8 = arith.constant 8 : index
    %11 = memref.load %arg1[%c8] : memref<128xf32, #tpu.memory_space<smem>>
    %c9 = arith.constant 9 : index
    %12 = memref.load %arg1[%c9] : memref<128xf32, #tpu.memory_space<smem>>
    %c10 = arith.constant 10 : index
    %13 = memref.load %arg1[%c10] : memref<128xf32, #tpu.memory_space<smem>>
    %c11 = arith.constant 11 : index
    %14 = memref.load %arg1[%c11] : memref<128xf32, #tpu.memory_space<smem>>
    %c12 = arith.constant 12 : index
    %15 = memref.load %arg1[%c12] : memref<128xf32, #tpu.memory_space<smem>>
    %c13 = arith.constant 13 : index
    %16 = memref.load %arg1[%c13] : memref<128xf32, #tpu.memory_space<smem>>
    %c14 = arith.constant 14 : index
    %17 = memref.load %arg1[%c14] : memref<128xf32, #tpu.memory_space<smem>>
    %c15 = arith.constant 15 : index
    %18 = memref.load %arg1[%c15] : memref<128xf32, #tpu.memory_space<smem>>
    %c16 = arith.constant 16 : index
    %19 = memref.load %arg1[%c16] : memref<128xf32, #tpu.memory_space<smem>>
    %c17 = arith.constant 17 : index
    %20 = memref.load %arg1[%c17] : memref<128xf32, #tpu.memory_space<smem>>
    %c18 = arith.constant 18 : index
    %21 = memref.load %arg1[%c18] : memref<128xf32, #tpu.memory_space<smem>>
    %c19 = arith.constant 19 : index
    %22 = memref.load %arg1[%c19] : memref<128xf32, #tpu.memory_space<smem>>
    %c20 = arith.constant 20 : index
    %23 = memref.load %arg1[%c20] : memref<128xf32, #tpu.memory_space<smem>>
    %c21 = arith.constant 21 : index
    %24 = memref.load %arg1[%c21] : memref<128xf32, #tpu.memory_space<smem>>
    %c22 = arith.constant 22 : index
    %25 = memref.load %arg1[%c22] : memref<128xf32, #tpu.memory_space<smem>>
    %c23 = arith.constant 23 : index
    %26 = memref.load %arg1[%c23] : memref<128xf32, #tpu.memory_space<smem>>
    %c24 = arith.constant 24 : index
    %27 = memref.load %arg1[%c24] : memref<128xf32, #tpu.memory_space<smem>>
    %c25 = arith.constant 25 : index
    %28 = memref.load %arg1[%c25] : memref<128xf32, #tpu.memory_space<smem>>
    %c26 = arith.constant 26 : index
    %29 = memref.load %arg1[%c26] : memref<128xf32, #tpu.memory_space<smem>>
    %c27 = arith.constant 27 : index
    %30 = memref.load %arg1[%c27] : memref<128xf32, #tpu.memory_space<smem>>
    %c28 = arith.constant 28 : index
    %31 = memref.load %arg1[%c28] : memref<128xf32, #tpu.memory_space<smem>>
    %c29 = arith.constant 29 : index
    %32 = memref.load %arg1[%c29] : memref<128xf32, #tpu.memory_space<smem>>
    %c30 = arith.constant 30 : index
    %33 = memref.load %arg1[%c30] : memref<128xf32, #tpu.memory_space<smem>>
    %c31 = arith.constant 31 : index
    %34 = memref.load %arg1[%c31] : memref<128xf32, #tpu.memory_space<smem>>
    %c32 = arith.constant 32 : index
    %35 = memref.load %arg1[%c32] : memref<128xf32, #tpu.memory_space<smem>>
    %c33 = arith.constant 33 : index
    %36 = memref.load %arg1[%c33] : memref<128xf32, #tpu.memory_space<smem>>
    %c34 = arith.constant 34 : index
    %37 = memref.load %arg1[%c34] : memref<128xf32, #tpu.memory_space<smem>>
    %c35 = arith.constant 35 : index
    %38 = memref.load %arg1[%c35] : memref<128xf32, #tpu.memory_space<smem>>
    %c36 = arith.constant 36 : index
    %39 = memref.load %arg1[%c36] : memref<128xf32, #tpu.memory_space<smem>>
    %c37 = arith.constant 37 : index
    %40 = memref.load %arg1[%c37] : memref<128xf32, #tpu.memory_space<smem>>
    %c38 = arith.constant 38 : index
    %41 = memref.load %arg1[%c38] : memref<128xf32, #tpu.memory_space<smem>>
    %c39 = arith.constant 39 : index
    %42 = memref.load %arg1[%c39] : memref<128xf32, #tpu.memory_space<smem>>
    %c40 = arith.constant 40 : index
    %43 = memref.load %arg1[%c40] : memref<128xf32, #tpu.memory_space<smem>>
    %c41 = arith.constant 41 : index
    %44 = memref.load %arg1[%c41] : memref<128xf32, #tpu.memory_space<smem>>
    %c42 = arith.constant 42 : index
    %45 = memref.load %arg1[%c42] : memref<128xf32, #tpu.memory_space<smem>>
    %c43 = arith.constant 43 : index
    %46 = memref.load %arg1[%c43] : memref<128xf32, #tpu.memory_space<smem>>
    %c44 = arith.constant 44 : index
    %47 = memref.load %arg1[%c44] : memref<128xf32, #tpu.memory_space<smem>>
    %c45 = arith.constant 45 : index
    %48 = memref.load %arg1[%c45] : memref<128xf32, #tpu.memory_space<smem>>
    %c46 = arith.constant 46 : index
    %49 = memref.load %arg1[%c46] : memref<128xf32, #tpu.memory_space<smem>>
    %c47 = arith.constant 47 : index
    %50 = memref.load %arg1[%c47] : memref<128xf32, #tpu.memory_space<smem>>
    %c48 = arith.constant 48 : index
    %51 = memref.load %arg1[%c48] : memref<128xf32, #tpu.memory_space<smem>>
    %c49 = arith.constant 49 : index
    %52 = memref.load %arg1[%c49] : memref<128xf32, #tpu.memory_space<smem>>
    %c50 = arith.constant 50 : index
    %53 = memref.load %arg1[%c50] : memref<128xf32, #tpu.memory_space<smem>>
    %c51 = arith.constant 51 : index
    %54 = memref.load %arg1[%c51] : memref<128xf32, #tpu.memory_space<smem>>
    %c52 = arith.constant 52 : index
    %55 = memref.load %arg1[%c52] : memref<128xf32, #tpu.memory_space<smem>>
    %c53 = arith.constant 53 : index
    %56 = memref.load %arg1[%c53] : memref<128xf32, #tpu.memory_space<smem>>
    %c54 = arith.constant 54 : index
    %57 = memref.load %arg1[%c54] : memref<128xf32, #tpu.memory_space<smem>>
    %c55 = arith.constant 55 : index
    %58 = memref.load %arg1[%c55] : memref<128xf32, #tpu.memory_space<smem>>
    %c56 = arith.constant 56 : index
    %59 = memref.load %arg1[%c56] : memref<128xf32, #tpu.memory_space<smem>>
    %c57 = arith.constant 57 : index
    %60 = memref.load %arg1[%c57] : memref<128xf32, #tpu.memory_space<smem>>
    %c58 = arith.constant 58 : index
    %61 = memref.load %arg1[%c58] : memref<128xf32, #tpu.memory_space<smem>>
    %c59 = arith.constant 59 : index
    %62 = memref.load %arg1[%c59] : memref<128xf32, #tpu.memory_space<smem>>
    %c60 = arith.constant 60 : index
    %63 = memref.load %arg1[%c60] : memref<128xf32, #tpu.memory_space<smem>>
    %c61 = arith.constant 61 : index
    %64 = memref.load %arg1[%c61] : memref<128xf32, #tpu.memory_space<smem>>
    %c62 = arith.constant 62 : index
    %65 = memref.load %arg1[%c62] : memref<128xf32, #tpu.memory_space<smem>>
    %c63 = arith.constant 63 : index
    %66 = memref.load %arg1[%c63] : memref<128xf32, #tpu.memory_space<smem>>
    %c64 = arith.constant 64 : index
    %67 = memref.load %arg1[%c64] : memref<128xf32, #tpu.memory_space<smem>>
    %c65 = arith.constant 65 : index
    %68 = memref.load %arg1[%c65] : memref<128xf32, #tpu.memory_space<smem>>
    %c66 = arith.constant 66 : index
    %69 = memref.load %arg1[%c66] : memref<128xf32, #tpu.memory_space<smem>>
    %c67 = arith.constant 67 : index
    %70 = memref.load %arg1[%c67] : memref<128xf32, #tpu.memory_space<smem>>
    %c68 = arith.constant 68 : index
    %71 = memref.load %arg1[%c68] : memref<128xf32, #tpu.memory_space<smem>>
    %c69 = arith.constant 69 : index
    %72 = memref.load %arg1[%c69] : memref<128xf32, #tpu.memory_space<smem>>
    %c70 = arith.constant 70 : index
    %73 = memref.load %arg1[%c70] : memref<128xf32, #tpu.memory_space<smem>>
    %c71 = arith.constant 71 : index
    %74 = memref.load %arg1[%c71] : memref<128xf32, #tpu.memory_space<smem>>
    %c72 = arith.constant 72 : index
    %75 = memref.load %arg1[%c72] : memref<128xf32, #tpu.memory_space<smem>>
    %c73 = arith.constant 73 : index
    %76 = memref.load %arg1[%c73] : memref<128xf32, #tpu.memory_space<smem>>
    %c74 = arith.constant 74 : index
    %77 = memref.load %arg1[%c74] : memref<128xf32, #tpu.memory_space<smem>>
    %c75 = arith.constant 75 : index
    %78 = memref.load %arg1[%c75] : memref<128xf32, #tpu.memory_space<smem>>
    %c76 = arith.constant 76 : index
    %79 = memref.load %arg1[%c76] : memref<128xf32, #tpu.memory_space<smem>>
    %c77 = arith.constant 77 : index
    %80 = memref.load %arg1[%c77] : memref<128xf32, #tpu.memory_space<smem>>
    %c78 = arith.constant 78 : index
    %81 = memref.load %arg1[%c78] : memref<128xf32, #tpu.memory_space<smem>>
    %c79 = arith.constant 79 : index
    %82 = memref.load %arg1[%c79] : memref<128xf32, #tpu.memory_space<smem>>
    %c80 = arith.constant 80 : index
    %83 = memref.load %arg1[%c80] : memref<128xf32, #tpu.memory_space<smem>>
    %c81 = arith.constant 81 : index
    %84 = memref.load %arg1[%c81] : memref<128xf32, #tpu.memory_space<smem>>
    %c82 = arith.constant 82 : index
    %85 = memref.load %arg1[%c82] : memref<128xf32, #tpu.memory_space<smem>>
    %c83 = arith.constant 83 : index
    %86 = memref.load %arg1[%c83] : memref<128xf32, #tpu.memory_space<smem>>
    %c84 = arith.constant 84 : index
    %87 = memref.load %arg1[%c84] : memref<128xf32, #tpu.memory_space<smem>>
    %c85 = arith.constant 85 : index
    %88 = memref.load %arg1[%c85] : memref<128xf32, #tpu.memory_space<smem>>
    %c86 = arith.constant 86 : index
    %89 = memref.load %arg1[%c86] : memref<128xf32, #tpu.memory_space<smem>>
    %c87 = arith.constant 87 : index
    %90 = memref.load %arg1[%c87] : memref<128xf32, #tpu.memory_space<smem>>
    %c88 = arith.constant 88 : index
    %91 = memref.load %arg1[%c88] : memref<128xf32, #tpu.memory_space<smem>>
    %c89 = arith.constant 89 : index
    %92 = memref.load %arg1[%c89] : memref<128xf32, #tpu.memory_space<smem>>
    %c90 = arith.constant 90 : index
    %93 = memref.load %arg1[%c90] : memref<128xf32, #tpu.memory_space<smem>>
    %c91 = arith.constant 91 : index
    %94 = memref.load %arg1[%c91] : memref<128xf32, #tpu.memory_space<smem>>
    %c92 = arith.constant 92 : index
    %95 = memref.load %arg1[%c92] : memref<128xf32, #tpu.memory_space<smem>>
    %c93 = arith.constant 93 : index
    %96 = memref.load %arg1[%c93] : memref<128xf32, #tpu.memory_space<smem>>
    %c94 = arith.constant 94 : index
    %97 = memref.load %arg1[%c94] : memref<128xf32, #tpu.memory_space<smem>>
    %c95 = arith.constant 95 : index
    %98 = memref.load %arg1[%c95] : memref<128xf32, #tpu.memory_space<smem>>
    %c96 = arith.constant 96 : index
    %99 = memref.load %arg1[%c96] : memref<128xf32, #tpu.memory_space<smem>>
    %c97 = arith.constant 97 : index
    %100 = memref.load %arg1[%c97] : memref<128xf32, #tpu.memory_space<smem>>
    %c98 = arith.constant 98 : index
    %101 = memref.load %arg1[%c98] : memref<128xf32, #tpu.memory_space<smem>>
    %c99 = arith.constant 99 : index
    %102 = memref.load %arg1[%c99] : memref<128xf32, #tpu.memory_space<smem>>
    %c100 = arith.constant 100 : index
    %103 = memref.load %arg1[%c100] : memref<128xf32, #tpu.memory_space<smem>>
    %c101 = arith.constant 101 : index
    %104 = memref.load %arg1[%c101] : memref<128xf32, #tpu.memory_space<smem>>
    %c102 = arith.constant 102 : index
    %105 = memref.load %arg1[%c102] : memref<128xf32, #tpu.memory_space<smem>>
    %c103 = arith.constant 103 : index
    %106 = memref.load %arg1[%c103] : memref<128xf32, #tpu.memory_space<smem>>
    %c104 = arith.constant 104 : index
    %107 = memref.load %arg1[%c104] : memref<128xf32, #tpu.memory_space<smem>>
    %c105 = arith.constant 105 : index
    %108 = memref.load %arg1[%c105] : memref<128xf32, #tpu.memory_space<smem>>
    %c106 = arith.constant 106 : index
    %109 = memref.load %arg1[%c106] : memref<128xf32, #tpu.memory_space<smem>>
    %c107 = arith.constant 107 : index
    %110 = memref.load %arg1[%c107] : memref<128xf32, #tpu.memory_space<smem>>
    %c108 = arith.constant 108 : index
    %111 = memref.load %arg1[%c108] : memref<128xf32, #tpu.memory_space<smem>>
    %c109 = arith.constant 109 : index
    %112 = memref.load %arg1[%c109] : memref<128xf32, #tpu.memory_space<smem>>
    %c110 = arith.constant 110 : index
    %113 = memref.load %arg1[%c110] : memref<128xf32, #tpu.memory_space<smem>>
    %c111 = arith.constant 111 : index
    %114 = memref.load %arg1[%c111] : memref<128xf32, #tpu.memory_space<smem>>
    %c112 = arith.constant 112 : index
    %115 = memref.load %arg1[%c112] : memref<128xf32, #tpu.memory_space<smem>>
    %c113 = arith.constant 113 : index
    %116 = memref.load %arg1[%c113] : memref<128xf32, #tpu.memory_space<smem>>
    %c114 = arith.constant 114 : index
    %117 = memref.load %arg1[%c114] : memref<128xf32, #tpu.memory_space<smem>>
    %c115 = arith.constant 115 : index
    %118 = memref.load %arg1[%c115] : memref<128xf32, #tpu.memory_space<smem>>
    %c0_1 = arith.constant 0 : index
    %119 = memref.load %arg2[%c0_1] : memref<1xi32, #tpu.memory_space<smem>>
    %c4_i32 = arith.constant 4 : i32
    %120 = arith.muli %arg0, %c4_i32 : i32
    %c0_i32_2 = arith.constant 0 : i32
    %121 = arith.addi %120, %c0_i32_2 : i32
    %122 = arith.cmpi slt, %121, %119 : i32
    %c0_3 = arith.constant 0 : index
    %c0_4 = arith.constant 0 : index
    %c0_5 = arith.constant 0 : index
    %123 = vector.load %arg4[%c0_3, %c0_4, %c0_5] : memref<4x16x128xf32, #tpu.memory_space<vmem>>, vector<1x1x128xf32>
    %124 = vector.shape_cast %123 : vector<1x1x128xf32> to vector<1x128xf32>
    %c0_6 = arith.constant 0 : index
    %c1_7 = arith.constant 1 : index
    %c0_8 = arith.constant 0 : index
    %125 = vector.load %arg4[%c0_6, %c1_7, %c0_8] : memref<4x16x128xf32, #tpu.memory_space<vmem>>, vector<1x1x128xf32>
    %126 = vector.shape_cast %125 : vector<1x1x128xf32> to vector<1x128xf32>
    %c0_9 = arith.constant 0 : index
    %c2_10 = arith.constant 2 : index
    %c0_11 = arith.constant 0 : index
    %127 = vector.load %arg4[%c0_9, %c2_10, %c0_11] : memref<4x16x128xf32, #tpu.memory_space<vmem>>, vector<1x1x128xf32>
    %128 = vector.shape_cast %127 : vector<1x1x128xf32> to vector<1x128xf32>
    %c0_12 = arith.constant 0 : index
    %c3_13 = arith.constant 3 : index
    %c0_14 = arith.constant 0 : index
    %129 = vector.load %arg4[%c0_12, %c3_13, %c0_14] : memref<4x16x128xf32, #tpu.memory_space<vmem>>, vector<1x1x128xf32>
    %130 = vector.shape_cast %129 : vector<1x1x128xf32> to vector<1x128xf32>
    %c0_15 = arith.constant 0 : index
    %c4_16 = arith.constant 4 : index
    %c0_17 = arith.constant 0 : index
    %131 = vector.load %arg4[%c0_15, %c4_16, %c0_17] : memref<4x16x128xf32, #tpu.memory_space<vmem>>, vector<1x1x128xf32>
    %132 = vector.shape_cast %131 : vector<1x1x128xf32> to vector<1x128xf32>
    %c0_18 = arith.constant 0 : index
    %c5_19 = arith.constant 5 : index
    %c0_20 = arith.constant 0 : index
    %133 = vector.load %arg4[%c0_18, %c5_19, %c0_20] : memref<4x16x128xf32, #tpu.memory_space<vmem>>, vector<1x1x128xf32>
    %134 = vector.shape_cast %133 : vector<1x1x128xf32> to vector<1x128xf32>
    %c0_21 = arith.constant 0 : index
    %c6_22 = arith.constant 6 : index
    %c0_23 = arith.constant 0 : index
    %135 = vector.load %arg4[%c0_21, %c6_22, %c0_23] : memref<4x16x128xf32, #tpu.memory_space<vmem>>, vector<1x1x128xf32>
    %136 = vector.shape_cast %135 : vector<1x1x128xf32> to vector<1x128xf32>
    %c0_24 = arith.constant 0 : index
    %c7_25 = arith.constant 7 : index
    %c0_26 = arith.constant 0 : index
    %137 = vector.load %arg4[%c0_24, %c7_25, %c0_26] : memref<4x16x128xf32, #tpu.memory_space<vmem>>, vector<1x1x128xf32>
    %138 = vector.shape_cast %137 : vector<1x1x128xf32> to vector<1x128xf32>
    %c0_27 = arith.constant 0 : index
    %c8_28 = arith.constant 8 : index
    %c0_29 = arith.constant 0 : index
    %139 = vector.load %arg4[%c0_27, %c8_28, %c0_29] : memref<4x16x128xf32, #tpu.memory_space<vmem>>, vector<1x1x128xf32>
    %140 = vector.shape_cast %139 : vector<1x1x128xf32> to vector<1x128xf32>
    %c0_30 = arith.constant 0 : index
    %c0_31 = arith.constant 0 : index
    %141 = vector.load %arg6[%c0_30, %c0_31] : memref<8x128xf32, #tpu.memory_space<vmem>>, vector<1x128xf32>
    %c1_32 = arith.constant 1 : index
    %c0_33 = arith.constant 0 : index
    %142 = vector.load %arg6[%c1_32, %c0_33] : memref<8x128xf32, #tpu.memory_space<vmem>>, vector<1x128xf32>
    %c2_34 = arith.constant 2 : index
    %c0_35 = arith.constant 0 : index
    %143 = vector.load %arg6[%c2_34, %c0_35] : memref<8x128xf32, #tpu.memory_space<vmem>>, vector<1x128xf32>
    %c3_36 = arith.constant 3 : index
    %c0_37 = arith.constant 0 : index
    %144 = vector.load %arg6[%c3_36, %c0_37] : memref<8x128xf32, #tpu.memory_space<vmem>>, vector<1x128xf32>
    %c4_38 = arith.constant 4 : index
    %c0_39 = arith.constant 0 : index
    %145 = vector.load %arg6[%c4_38, %c0_39] : memref<8x128xf32, #tpu.memory_space<vmem>>, vector<2x128xf32>
    %146 = vector.broadcast %3 : f32 to vector<1x128xf32>
    %147 = arith.mulf %140, %146 : vector<1x128xf32>
    %148 = vector.broadcast %4 : f32 to vector<1x128xf32>
    %149 = arith.addf %147, %148 : vector<1x128xf32>
    %150 = vector.broadcast %5 : f32 to vector<1x128xf32>
    %151 = arith.mulf %124, %150 : vector<1x128xf32>
    %152 = vector.broadcast %6 : f32 to vector<1x128xf32>
    %153 = arith.mulf %126, %152 : vector<1x128xf32>
    %154 = arith.addf %151, %153 : vector<1x128xf32>
    %155 = vector.broadcast %7 : f32 to vector<1x128xf32>
    %156 = arith.mulf %128, %155 : vector<1x128xf32>
    %157 = arith.addf %154, %156 : vector<1x128xf32>
    %158 = vector.broadcast %8 : f32 to vector<1x128xf32>
    %159 = arith.mulf %130, %158 : vector<1x128xf32>
    %160 = arith.addf %157, %159 : vector<1x128xf32>
    %161 = vector.broadcast %9 : f32 to vector<1x128xf32>
    %162 = arith.mulf %132, %161 : vector<1x128xf32>
    %163 = arith.addf %160, %162 : vector<1x128xf32>
    %164 = vector.broadcast %10 : f32 to vector<1x128xf32>
    %165 = arith.mulf %134, %164 : vector<1x128xf32>
    %166 = arith.addf %163, %165 : vector<1x128xf32>
    %167 = vector.broadcast %11 : f32 to vector<1x128xf32>
    %168 = arith.mulf %136, %167 : vector<1x128xf32>
    %169 = arith.addf %166, %168 : vector<1x128xf32>
    %170 = vector.broadcast %12 : f32 to vector<1x128xf32>
    %171 = arith.mulf %138, %170 : vector<1x128xf32>
    %172 = arith.addf %169, %171 : vector<1x128xf32>
    %173 = vector.broadcast %37 : f32 to vector<1x128xf32>
    %174 = arith.mulf %141, %173 : vector<1x128xf32>
    %175 = arith.addf %172, %174 : vector<1x128xf32>
    %176 = vector.broadcast %41 : f32 to vector<1x128xf32>
    %177 = arith.addf %175, %176 : vector<1x128xf32>
    %cst = arith.constant 5.000000e-01 : f32
    %178 = vector.broadcast %cst : f32 to vector<1x128xf32>
    %179 = arith.mulf %177, %178 : vector<1x128xf32>
    %c0_40 = arith.constant 0 : index
    %c0_41 = arith.constant 0 : index
    %180 = vector.load %arg7[%c0_40, %c0_41] : memref<8x128xf32, #tpu.memory_space<vmem>>, vector<1x128xf32>
    tpu.vector_store %arg7[%c0_40, %c0_41], %179 {strides = array<i32>} : memref<8x128xf32, #tpu.memory_space<vmem>>, vector<1x128xf32>,
    %181 = vector.broadcast %13 : f32 to vector<1x128xf32>
    %182 = arith.mulf %124, %181 : vector<1x128xf32>
    %183 = vector.broadcast %14 : f32 to vector<1x128xf32>
    %184 = arith.mulf %126, %183 : vector<1x128xf32>
    %185 = arith.addf %182, %184 : vector<1x128xf32>
    %186 = vector.broadcast %15 : f32 to vector<1x128xf32>
    %187 = arith.mulf %128, %186 : vector<1x128xf32>
    %188 = arith.addf %185, %187 : vector<1x128xf32>
    %189 = vector.broadcast %16 : f32 to vector<1x128xf32>
    %190 = arith.mulf %130, %189 : vector<1x128xf32>
    %191 = arith.addf %188, %190 : vector<1x128xf32>
    %192 = vector.broadcast %17 : f32 to vector<1x128xf32>
    %193 = arith.mulf %132, %192 : vector<1x128xf32>
    %194 = arith.addf %191, %193 : vector<1x128xf32>
    %195 = vector.broadcast %18 : f32 to vector<1x128xf32>
    %196 = arith.mulf %134, %195 : vector<1x128xf32>
    %197 = arith.addf %194, %196 : vector<1x128xf32>
    %198 = vector.broadcast %19 : f32 to vector<1x128xf32>
    %199 = arith.mulf %136, %198 : vector<1x128xf32>
    %200 = arith.addf %197, %199 : vector<1x128xf32>
    %201 = vector.broadcast %20 : f32 to vector<1x128xf32>
    %202 = arith.mulf %138, %201 : vector<1x128xf32>
    %203 = arith.addf %200, %202 : vector<1x128xf32>
    %204 = vector.broadcast %38 : f32 to vector<1x128xf32>
    %205 = arith.mulf %141, %204 : vector<1x128xf32>
    %206 = arith.addf %203, %205 : vector<1x128xf32>
    %207 = vector.broadcast %42 : f32 to vector<1x128xf32>
    %208 = arith.addf %206, %207 : vector<1x128xf32>
    %cst_42 = arith.constant 5.000000e-01 : f32
    %209 = vector.broadcast %cst_42 : f32 to vector<1x128xf32>
    %210 = arith.mulf %208, %209 : vector<1x128xf32>
    %c1_43 = arith.constant 1 : index
    %c0_44 = arith.constant 0 : index
    %211 = vector.load %arg7[%c1_43, %c0_44] : memref<8x128xf32, #tpu.memory_space<vmem>>, vector<1x128xf32>
    tpu.vector_store %arg7[%c1_43, %c0_44], %210 {strides = array<i32>} : memref<8x128xf32, #tpu.memory_space<vmem>>, vector<1x128xf32>,
    %212 = vector.broadcast %21 : f32 to vector<1x128xf32>
    %213 = arith.mulf %124, %212 : vector<1x128xf32>
    %214 = vector.broadcast %22 : f32 to vector<1x128xf32>
    %215 = arith.mulf %126, %214 : vector<1x128xf32>
    %216 = arith.addf %213, %215 : vector<1x128xf32>
    %217 = vector.broadcast %23 : f32 to vector<1x128xf32>
    %218 = arith.mulf %128, %217 : vector<1x128xf32>
    %219 = arith.addf %216, %218 : vector<1x128xf32>
    %220 = vector.broadcast %24 : f32 to vector<1x128xf32>
    %221 = arith.mulf %130, %220 : vector<1x128xf32>
    %222 = arith.addf %219, %221 : vector<1x128xf32>
    %223 = vector.broadcast %25 : f32 to vector<1x128xf32>
    %224 = arith.mulf %132, %223 : vector<1x128xf32>
    %225 = arith.addf %222, %224 : vector<1x128xf32>
    %226 = vector.broadcast %26 : f32 to vector<1x128xf32>
    %227 = arith.mulf %134, %226 : vector<1x128xf32>
    %228 = arith.addf %225, %227 : vector<1x128xf32>
    %229 = vector.broadcast %27 : f32 to vector<1x128xf32>
    %230 = arith.mulf %136, %229 : vector<1x128xf32>
    %231 = arith.addf %228, %230 : vector<1x128xf32>
    %232 = vector.broadcast %28 : f32 to vector<1x128xf32>
    %233 = arith.mulf %138, %232 : vector<1x128xf32>
    %234 = arith.addf %231, %233 : vector<1x128xf32>
    %235 = vector.broadcast %39 : f32 to vector<1x128xf32>
    %236 = arith.mulf %141, %235 : vector<1x128xf32>
    %237 = arith.addf %234, %236 : vector<1x128xf32>
    %238 = vector.broadcast %43 : f32 to vector<1x128xf32>
    %239 = arith.addf %237, %238 : vector<1x128xf32>
    %c2_45 = arith.constant 2 : index
    %c0_46 = arith.constant 0 : index
    %240 = vector.load %arg7[%c2_45, %c0_46] : memref<8x128xf32, #tpu.memory_space<vmem>>, vector<1x128xf32>
    tpu.vector_store %arg7[%c2_45, %c0_46], %239 {strides = array<i32>} : memref<8x128xf32, #tpu.memory_space<vmem>>, vector<1x128xf32>,
    %241 = vector.broadcast %29 : f32 to vector<1x128xf32>
    %242 = arith.mulf %124, %241 : vector<1x128xf32>
    %243 = vector.broadcast %30 : f32 to vector<1x128xf32>
    %244 = arith.mulf %126, %243 : vector<1x128xf32>
    %245 = arith.addf %242, %244 : vector<1x128xf32>
    %246 = vector.broadcast %31 : f32 to vector<1x128xf32>
    %247 = arith.mulf %128, %246 : vector<1x128xf32>
    %248 = arith.addf %245, %247 : vector<1x128xf32>
    %249 = vector.broadcast %32 : f32 to vector<1x128xf32>
    %250 = arith.mulf %130, %249 : vector<1x128xf32>
    %251 = arith.addf %248, %250 : vector<1x128xf32>
    %252 = vector.broadcast %33 : f32 to vector<1x128xf32>
    %253 = arith.mulf %132, %252 : vector<1x128xf32>
    %254 = arith.addf %251, %253 : vector<1x128xf32>
    %255 = vector.broadcast %34 : f32 to vector<1x128xf32>
    %256 = arith.mulf %134, %255 : vector<1x128xf32>
    %257 = arith.addf %254, %256 : vector<1x128xf32>
    %258 = vector.broadcast %35 : f32 to vector<1x128xf32>
    %259 = arith.mulf %136, %258 : vector<1x128xf32>
    %260 = arith.addf %257, %259 : vector<1x128xf32>
    %261 = vector.broadcast %36 : f32 to vector<1x128xf32>
    %262 = arith.mulf %138, %261 : vector<1x128xf32>
    %263 = arith.addf %260, %262 : vector<1x128xf32>
    %264 = vector.broadcast %40 : f32 to vector<1x128xf32>
    %265 = arith.mulf %141, %264 : vector<1x128xf32>
    %266 = arith.addf %263, %265 : vector<1x128xf32>
    %267 = vector.broadcast %44 : f32 to vector<1x128xf32>
    %268 = arith.addf %266, %267 : vector<1x128xf32>
    %cst_47 = arith.constant 5.000000e-01 : f32
    %269 = vector.broadcast %cst_47 : f32 to vector<1x128xf32>
    %270 = arith.mulf %268, %269 : vector<1x128xf32>
    %c3_48 = arith.constant 3 : index
    %c0_49 = arith.constant 0 : index
    %271 = vector.load %arg7[%c3_48, %c0_49] : memref<8x128xf32, #tpu.memory_space<vmem>>, vector<1x128xf32>
    tpu.vector_store %arg7[%c3_48, %c0_49], %270 {strides = array<i32>} : memref<8x128xf32, #tpu.memory_space<vmem>>, vector<1x128xf32>,
    %c0_50 = arith.constant 0 : index
    %c0_51 = arith.constant 0 : index
    %272 = vector.load %arg7[%c0_50, %c0_51] : memref<8x128xf32, #tpu.memory_space<vmem>>, vector<4x128xf32>
    %273 = math.tanh %272 : vector<4x128xf32>
    %274 = vector.extract_strided_slice %273 {offsets = [0, 0], sizes = [1, 128], strides = [1, 1]} : vector<4x128xf32> to vector<1x128xf32>
    %cst_52 = arith.constant 5.000000e-01 : f32
    %275 = vector.broadcast %cst_52 : f32 to vector<1x128xf32>
    %276 = arith.mulf %275, %274 : vector<1x128xf32>
    %cst_53 = arith.constant 5.000000e-01 : f32
    %277 = vector.broadcast %cst_53 : f32 to vector<1x128xf32>
    %278 = arith.addf %276, %277 : vector<1x128xf32>
    %279 = vector.extract_strided_slice %273 {offsets = [1, 0], sizes = [1, 128], strides = [1, 1]} : vector<4x128xf32> to vector<1x128xf32>
    %cst_54 = arith.constant 5.000000e-01 : f32
    %280 = vector.broadcast %cst_54 : f32 to vector<1x128xf32>
    %281 = arith.mulf %280, %279 : vector<1x128xf32>
    %cst_55 = arith.constant 5.000000e-01 : f32
    %282 = vector.broadcast %cst_55 : f32 to vector<1x128xf32>
    %283 = arith.addf %281, %282 : vector<1x128xf32>
    %284 = vector.extract_strided_slice %273 {offsets = [2, 0], sizes = [1, 128], strides = [1, 1]} : vector<4x128xf32> to vector<1x128xf32>
    %285 = vector.extract_strided_slice %273 {offsets = [3, 0], sizes = [1, 128], strides = [1, 1]} : vector<4x128xf32> to vector<1x128xf32>
    %cst_56 = arith.constant 5.000000e-01 : f32
    %286 = vector.broadcast %cst_56 : f32 to vector<1x128xf32>
    %287 = arith.mulf %286, %285 : vector<1x128xf32>
    %cst_57 = arith.constant 5.000000e-01 : f32
    %288 = vector.broadcast %cst_57 : f32 to vector<1x128xf32>
    %289 = arith.addf %287, %288 : vector<1x128xf32>
    %290 = arith.mulf %283, %142 : vector<1x128xf32>
    %291 = arith.mulf %278, %284 : vector<1x128xf32>
    %292 = arith.addf %290, %291 : vector<1x128xf32>
    %293 = math.tanh %292 : vector<1x128xf32>
    %294 = arith.mulf %289, %293 : vector<1x128xf32>
    %295 = vector.broadcast %45 : f32 to vector<1x128xf32>
    %296 = arith.mulf %149, %295 : vector<1x128xf32>
    %297 = vector.broadcast %46 : f32 to vector<1x128xf32>
    %298 = arith.mulf %294, %297 : vector<1x128xf32>
    %299 = arith.addf %296, %298 : vector<1x128xf32>
    %300 = vector.broadcast %61 : f32 to vector<1x128xf32>
    %301 = arith.mulf %143, %300 : vector<1x128xf32>
    %302 = arith.addf %299, %301 : vector<1x128xf32>
    %303 = vector.broadcast %62 : f32 to vector<1x128xf32>
    %304 = arith.mulf %144, %303 : vector<1x128xf32>
    %305 = arith.addf %302, %304 : vector<1x128xf32>
    %306 = vector.broadcast %77 : f32 to vector<1x128xf32>
    %307 = arith.addf %305, %306 : vector<1x128xf32>
    %cst_58 = arith.constant 5.000000e-01 : f32
    %308 = vector.broadcast %cst_58 : f32 to vector<1x128xf32>
    %309 = arith.mulf %307, %308 : vector<1x128xf32>
    %c0_59 = arith.constant 0 : index
    %c0_60 = arith.constant 0 : index
    %310 = vector.load %arg7[%c0_59, %c0_60] : memref<8x128xf32, #tpu.memory_space<vmem>>, vector<1x128xf32>
    tpu.vector_store %arg7[%c0_59, %c0_60], %309 {strides = array<i32>} : memref<8x128xf32, #tpu.memory_space<vmem>>, vector<1x128xf32>,
    %311 = vector.broadcast %47 : f32 to vector<1x128xf32>
    %312 = arith.mulf %149, %311 : vector<1x128xf32>
    %313 = vector.broadcast %48 : f32 to vector<1x128xf32>
    %314 = arith.mulf %294, %313 : vector<1x128xf32>
    %315 = arith.addf %312, %314 : vector<1x128xf32>
    %316 = vector.broadcast %63 : f32 to vector<1x128xf32>
    %317 = arith.mulf %143, %316 : vector<1x128xf32>
    %318 = arith.addf %315, %317 : vector<1x128xf32>
    %319 = vector.broadcast %64 : f32 to vector<1x128xf32>
    %320 = arith.mulf %144, %319 : vector<1x128xf32>
    %321 = arith.addf %318, %320 : vector<1x128xf32>
    %322 = vector.broadcast %78 : f32 to vector<1x128xf32>
    %323 = arith.addf %321, %322 : vector<1x128xf32>
    %cst_61 = arith.constant 5.000000e-01 : f32
    %324 = vector.broadcast %cst_61 : f32 to vector<1x128xf32>
    %325 = arith.mulf %323, %324 : vector<1x128xf32>
    %c1_62 = arith.constant 1 : index
    %c0_63 = arith.constant 0 : index
    %326 = vector.load %arg7[%c1_62, %c0_63] : memref<8x128xf32, #tpu.memory_space<vmem>>, vector<1x128xf32>
    tpu.vector_store %arg7[%c1_62, %c0_63], %325 {strides = array<i32>} : memref<8x128xf32, #tpu.memory_space<vmem>>, vector<1x128xf32>,
    %327 = vector.broadcast %49 : f32 to vector<1x128xf32>
    %328 = arith.mulf %149, %327 : vector<1x128xf32>
    %329 = vector.broadcast %50 : f32 to vector<1x128xf32>
    %330 = arith.mulf %294, %329 : vector<1x128xf32>
    %331 = arith.addf %328, %330 : vector<1x128xf32>
    %332 = vector.broadcast %65 : f32 to vector<1x128xf32>
    %333 = arith.mulf %143, %332 : vector<1x128xf32>
    %334 = arith.addf %331, %333 : vector<1x128xf32>
    %335 = vector.broadcast %66 : f32 to vector<1x128xf32>
    %336 = arith.mulf %144, %335 : vector<1x128xf32>
    %337 = arith.addf %334, %336 : vector<1x128xf32>
    %338 = vector.broadcast %79 : f32 to vector<1x128xf32>
    %339 = arith.addf %337, %338 : vector<1x128xf32>
    %cst_64 = arith.constant 5.000000e-01 : f32
    %340 = vector.broadcast %cst_64 : f32 to vector<1x128xf32>
    %341 = arith.mulf %339, %340 : vector<1x128xf32>
    %c2_65 = arith.constant 2 : index
    %c0_66 = arith.constant 0 : index
    %342 = vector.load %arg7[%c2_65, %c0_66] : memref<8x128xf32, #tpu.memory_space<vmem>>, vector<1x128xf32>
    tpu.vector_store %arg7[%c2_65, %c0_66], %341 {strides = array<i32>} : memref<8x128xf32, #tpu.memory_space<vmem>>, vector<1x128xf32>,
    %343 = vector.broadcast %51 : f32 to vector<1x128xf32>
    %344 = arith.mulf %149, %343 : vector<1x128xf32>
    %345 = vector.broadcast %52 : f32 to vector<1x128xf32>
    %346 = arith.mulf %294, %345 : vector<1x128xf32>
    %347 = arith.addf %344, %346 : vector<1x128xf32>
    %348 = vector.broadcast %67 : f32 to vector<1x128xf32>
    %349 = arith.mulf %143, %348 : vector<1x128xf32>
    %350 = arith.addf %347, %349 : vector<1x128xf32>
    %351 = vector.broadcast %68 : f32 to vector<1x128xf32>
    %352 = arith.mulf %144, %351 : vector<1x128xf32>
    %353 = arith.addf %350, %352 : vector<1x128xf32>
    %354 = vector.broadcast %80 : f32 to vector<1x128xf32>
    %355 = arith.addf %353, %354 : vector<1x128xf32>
    %cst_67 = arith.constant 5.000000e-01 : f32
    %356 = vector.broadcast %cst_67 : f32 to vector<1x128xf32>
    %357 = arith.mulf %355, %356 : vector<1x128xf32>
    %c3_68 = arith.constant 3 : index
    %c0_69 = arith.constant 0 : index
    %358 = vector.load %arg7[%c3_68, %c0_69] : memref<8x128xf32, #tpu.memory_space<vmem>>, vector<1x128xf32>
    tpu.vector_store %arg7[%c3_68, %c0_69], %357 {strides = array<i32>} : memref<8x128xf32, #tpu.memory_space<vmem>>, vector<1x128xf32>,
    %359 = vector.broadcast %53 : f32 to vector<1x128xf32>
    %360 = arith.mulf %149, %359 : vector<1x128xf32>
    %361 = vector.broadcast %54 : f32 to vector<1x128xf32>
    %362 = arith.mulf %294, %361 : vector<1x128xf32>
    %363 = arith.addf %360, %362 : vector<1x128xf32>
    %364 = vector.broadcast %69 : f32 to vector<1x128xf32>
    %365 = arith.mulf %143, %364 : vector<1x128xf32>
    %366 = arith.addf %363, %365 : vector<1x128xf32>
    %367 = vector.broadcast %70 : f32 to vector<1x128xf32>
    %368 = arith.mulf %144, %367 : vector<1x128xf32>
    %369 = arith.addf %366, %368 : vector<1x128xf32>
    %370 = vector.broadcast %81 : f32 to vector<1x128xf32>
    %371 = arith.addf %369, %370 : vector<1x128xf32>
    %c4_70 = arith.constant 4 : index
    %c0_71 = arith.constant 0 : index
    %372 = vector.load %arg7[%c4_70, %c0_71] : memref<8x128xf32, #tpu.memory_space<vmem>>, vector<1x128xf32>
    tpu.vector_store %arg7[%c4_70, %c0_71], %371 {strides = array<i32>} : memref<8x128xf32, #tpu.memory_space<vmem>>, vector<1x128xf32>,
    %373 = vector.broadcast %55 : f32 to vector<1x128xf32>
    %374 = arith.mulf %149, %373 : vector<1x128xf32>
    %375 = vector.broadcast %56 : f32 to vector<1x128xf32>
    %376 = arith.mulf %294, %375 : vector<1x128xf32>
    %377 = arith.addf %374, %376 : vector<1x128xf32>
    %378 = vector.broadcast %71 : f32 to vector<1x128xf32>
    %379 = arith.mulf %143, %378 : vector<1x128xf32>
    %380 = arith.addf %377, %379 : vector<1x128xf32>
    %381 = vector.broadcast %72 : f32 to vector<1x128xf32>
    %382 = arith.mulf %144, %381 : vector<1x128xf32>
    %383 = arith.addf %380, %382 : vector<1x128xf32>
    %384 = vector.broadcast %82 : f32 to vector<1x128xf32>
    %385 = arith.addf %383, %384 : vector<1x128xf32>
    %c5_72 = arith.constant 5 : index
    %c0_73 = arith.constant 0 : index
    %386 = vector.load %arg7[%c5_72, %c0_73] : memref<8x128xf32, #tpu.memory_space<vmem>>, vector<1x128xf32>
    tpu.vector_store %arg7[%c5_72, %c0_73], %385 {strides = array<i32>} : memref<8x128xf32, #tpu.memory_space<vmem>>, vector<1x128xf32>,
    %387 = vector.broadcast %57 : f32 to vector<1x128xf32>
    %388 = arith.mulf %149, %387 : vector<1x128xf32>
    %389 = vector.broadcast %58 : f32 to vector<1x128xf32>
    %390 = arith.mulf %294, %389 : vector<1x128xf32>
    %391 = arith.addf %388, %390 : vector<1x128xf32>
    %392 = vector.broadcast %73 : f32 to vector<1x128xf32>
    %393 = arith.mulf %143, %392 : vector<1x128xf32>
    %394 = arith.addf %391, %393 : vector<1x128xf32>
    %395 = vector.broadcast %74 : f32 to vector<1x128xf32>
    %396 = arith.mulf %144, %395 : vector<1x128xf32>
    %397 = arith.addf %394, %396 : vector<1x128xf32>
    %398 = vector.broadcast %83 : f32 to vector<1x128xf32>
    %399 = arith.addf %397, %398 : vector<1x128xf32>
    %cst_74 = arith.constant 5.000000e-01 : f32
    %400 = vector.broadcast %cst_74 : f32 to vector<1x128xf32>
    %401 = arith.mulf %399, %400 : vector<1x128xf32>
    %c6_75 = arith.constant 6 : index
    %c0_76 = arith.constant 0 : index
    %402 = vector.load %arg7[%c6_75, %c0_76] : memref<8x128xf32, #tpu.memory_space<vmem>>, vector<1x128xf32>
    tpu.vector_store %arg7[%c6_75, %c0_76], %401 {strides = array<i32>} : memref<8x128xf32, #tpu.memory_space<vmem>>, vector<1x128xf32>,
    %403 = vector.broadcast %59 : f32 to vector<1x128xf32>
    %404 = arith.mulf %149, %403 : vector<1x128xf32>
    %405 = vector.broadcast %60 : f32 to vector<1x128xf32>
    %406 = arith.mulf %294, %405 : vector<1x128xf32>
    %407 = arith.addf %404, %406 : vector<1x128xf32>
    %408 = vector.broadcast %75 : f32 to vector<1x128xf32>
    %409 = arith.mulf %143, %408 : vector<1x128xf32>
    %410 = arith.addf %407, %409 : vector<1x128xf32>
    %411 = vector.broadcast %76 : f32 to vector<1x128xf32>
    %412 = arith.mulf %144, %411 : vector<1x128xf32>
    %413 = arith.addf %410, %412 : vector<1x128xf32>
    %414 = vector.broadcast %84 : f32 to vector<1x128xf32>
    %415 = arith.addf %413, %414 : vector<1x128xf32>
    %cst_77 = arith.constant 5.000000e-01 : f32
    %416 = vector.broadcast %cst_77 : f32 to vector<1x128xf32>
    %417 = arith.mulf %415, %416 : vector<1x128xf32>
    %c7_78 = arith.constant 7 : index
    %c0_79 = arith.constant 0 : index
    %418 = vector.load %arg7[%c7_78, %c0_79] : memref<8x128xf32, #tpu.memory_space<vmem>>, vector<1x128xf32>
    tpu.vector_store %arg7[%c7_78, %c0_79], %417 {strides = array<i32>} : memref<8x128xf32, #tpu.memory_space<vmem>>, vector<1x128xf32>,
    %c0_80 = arith.constant 0 : index
    %c0_81 = arith.constant 0 : index
    %419 = vector.load %arg7[%c0_80, %c0_81] : memref<8x128xf32, #tpu.memory_space<vmem>>, vector<8x128xf32>
    %420 = math.tanh %419 : vector<8x128xf32>
    %421 = vector.extract_strided_slice %420 {offsets = [0, 0], sizes = [2, 128], strides = [1, 1]} : vector<8x128xf32> to vector<2x128xf32>
    %cst_82 = arith.constant 5.000000e-01 : f32
    %422 = vector.broadcast %cst_82 : f32 to vector<2x128xf32>
    %423 = arith.mulf %422, %421 : vector<2x128xf32>
    %cst_83 = arith.constant 5.000000e-01 : f32
    %424 = vector.broadcast %cst_83 : f32 to vector<2x128xf32>
    %425 = arith.addf %423, %424 : vector<2x128xf32>
    %426 = vector.extract_strided_slice %420 {offsets = [2, 0], sizes = [2, 128], strides = [1, 1]} : vector<8x128xf32> to vector<2x128xf32>
    %cst_84 = arith.constant 5.000000e-01 : f32
    %427 = vector.broadcast %cst_84 : f32 to vector<2x128xf32>
    %428 = arith.mulf %427, %426 : vector<2x128xf32>
    %cst_85 = arith.constant 5.000000e-01 : f32
    %429 = vector.broadcast %cst_85 : f32 to vector<2x128xf32>
    %430 = arith.addf %428, %429 : vector<2x128xf32>
    %431 = vector.extract_strided_slice %420 {offsets = [4, 0], sizes = [2, 128], strides = [1, 1]} : vector<8x128xf32> to vector<2x128xf32>
    %432 = vector.extract_strided_slice %420 {offsets = [6, 0], sizes = [2, 128], strides = [1, 1]} : vector<8x128xf32> to vector<2x128xf32>
    %cst_86 = arith.constant 5.000000e-01 : f32
    %433 = vector.broadcast %cst_86 : f32 to vector<2x128xf32>
    %434 = arith.mulf %433, %432 : vector<2x128xf32>
    %cst_87 = arith.constant 5.000000e-01 : f32
    %435 = vector.broadcast %cst_87 : f32 to vector<2x128xf32>
    %436 = arith.addf %434, %435 : vector<2x128xf32>
    %437 = arith.mulf %430, %145 : vector<2x128xf32>
    %438 = arith.mulf %425, %431 : vector<2x128xf32>
    %439 = arith.addf %437, %438 : vector<2x128xf32>
    %440 = math.tanh %439 : vector<2x128xf32>
    %441 = arith.mulf %436, %440 : vector<2x128xf32>
    %442 = vector.extract_strided_slice %441 {offsets = [0, 0], sizes = [1, 128], strides = [1, 1]} : vector<2x128xf32> to vector<1x128xf32>
    %443 = vector.extract_strided_slice %441 {offsets = [1, 0], sizes = [1, 128], strides = [1, 1]} : vector<2x128xf32> to vector<1x128xf32>
    %444 = vector.broadcast %85 : f32 to vector<1x128xf32>
    %445 = arith.mulf %442, %444 : vector<1x128xf32>
    %446 = vector.broadcast %86 : f32 to vector<1x128xf32>
    %447 = arith.mulf %443, %446 : vector<1x128xf32>
    %448 = arith.addf %445, %447 : vector<1x128xf32>
    %449 = vector.broadcast %93 : f32 to vector<1x128xf32>
    %450 = arith.addf %448, %449 : vector<1x128xf32>
    %cst_88 = arith.constant 0.000000e+00 : f32
    %451 = vector.broadcast %cst_88 : f32 to vector<1x128xf32>
    %452 = arith.maximumf %450, %451 : vector<1x128xf32>
    %453 = vector.broadcast %87 : f32 to vector<1x128xf32>
    %454 = arith.mulf %442, %453 : vector<1x128xf32>
    %455 = vector.broadcast %88 : f32 to vector<1x128xf32>
    %456 = arith.mulf %443, %455 : vector<1x128xf32>
    %457 = arith.addf %454, %456 : vector<1x128xf32>
    %458 = vector.broadcast %94 : f32 to vector<1x128xf32>
    %459 = arith.addf %457, %458 : vector<1x128xf32>
    %cst_89 = arith.constant 0.000000e+00 : f32
    %460 = vector.broadcast %cst_89 : f32 to vector<1x128xf32>
    %461 = arith.maximumf %459, %460 : vector<1x128xf32>
    %462 = vector.broadcast %89 : f32 to vector<1x128xf32>
    %463 = arith.mulf %442, %462 : vector<1x128xf32>
    %464 = vector.broadcast %90 : f32 to vector<1x128xf32>
    %465 = arith.mulf %443, %464 : vector<1x128xf32>
    %466 = arith.addf %463, %465 : vector<1x128xf32>
    %467 = vector.broadcast %95 : f32 to vector<1x128xf32>
    %468 = arith.addf %466, %467 : vector<1x128xf32>
    %cst_90 = arith.constant 0.000000e+00 : f32
    %469 = vector.broadcast %cst_90 : f32 to vector<1x128xf32>
    %470 = arith.maximumf %468, %469 : vector<1x128xf32>
    %471 = vector.broadcast %91 : f32 to vector<1x128xf32>
    %472 = arith.mulf %442, %471 : vector<1x128xf32>
    %473 = vector.broadcast %92 : f32 to vector<1x128xf32>
    %474 = arith.mulf %443, %473 : vector<1x128xf32>
    %475 = arith.addf %472, %474 : vector<1x128xf32>
    %476 = vector.broadcast %96 : f32 to vector<1x128xf32>
    %477 = arith.addf %475, %476 : vector<1x128xf32>
    %cst_91 = arith.constant 0.000000e+00 : f32
    %478 = vector.broadcast %cst_91 : f32 to vector<1x128xf32>
    %479 = arith.maximumf %477, %478 : vector<1x128xf32>
    %480 = vector.broadcast %97 : f32 to vector<1x128xf32>
    %481 = arith.mulf %452, %480 : vector<1x128xf32>
    %482 = vector.broadcast %105 : f32 to vector<1x128xf32>
    %483 = arith.addf %481, %482 : vector<1x128xf32>
    %484 = vector.broadcast %98 : f32 to vector<1x128xf32>
    %485 = arith.mulf %461, %484 : vector<1x128xf32>
    %486 = arith.addf %483, %485 : vector<1x128xf32>
    %487 = vector.broadcast %99 : f32 to vector<1x128xf32>
    %488 = arith.mulf %470, %487 : vector<1x128xf32>
    %489 = arith.addf %486, %488 : vector<1x128xf32>
    %490 = vector.broadcast %100 : f32 to vector<1x128xf32>
    %491 = arith.mulf %479, %490 : vector<1x128xf32>
    %492 = arith.addf %489, %491 : vector<1x128xf32>
    %cst_92 = arith.constant 0.000000e+00 : f32
    %493 = vector.broadcast %cst_92 : f32 to vector<1x128xf32>
    %494 = arith.maximumf %492, %493 : vector<1x128xf32>
    %495 = vector.broadcast %101 : f32 to vector<1x128xf32>
    %496 = arith.mulf %452, %495 : vector<1x128xf32>
    %497 = vector.broadcast %106 : f32 to vector<1x128xf32>
    %498 = arith.addf %496, %497 : vector<1x128xf32>
    %499 = vector.broadcast %102 : f32 to vector<1x128xf32>
    %500 = arith.mulf %461, %499 : vector<1x128xf32>
    %501 = arith.addf %498, %500 : vector<1x128xf32>
    %502 = vector.broadcast %103 : f32 to vector<1x128xf32>
    %503 = arith.mulf %470, %502 : vector<1x128xf32>
    %504 = arith.addf %501, %503 : vector<1x128xf32>
    %505 = vector.broadcast %104 : f32 to vector<1x128xf32>
    %506 = arith.mulf %479, %505 : vector<1x128xf32>
    %507 = arith.addf %504, %506 : vector<1x128xf32>
    %cst_93 = arith.constant 0.000000e+00 : f32
    %508 = vector.broadcast %cst_93 : f32 to vector<1x128xf32>
    %509 = arith.maximumf %507, %508 : vector<1x128xf32>
    %510 = vector.broadcast %107 : f32 to vector<1x128xf32>
    %511 = arith.mulf %494, %510 : vector<1x128xf32>
    %512 = vector.broadcast %108 : f32 to vector<1x128xf32>
    %513 = arith.mulf %509, %512 : vector<1x128xf32>
    %514 = arith.addf %511, %513 : vector<1x128xf32>
    %515 = vector.broadcast %115 : f32 to vector<1x128xf32>
    %516 = arith.addf %514, %515 : vector<1x128xf32>
    %c0_94 = arith.constant 0 : index
    %c0_95 = arith.constant 0 : index
    %c0_96 = arith.constant 0 : index
    %517 = vector.load %arg5[%c0_94, %c0_95, %c0_96] : memref<4x4x128xf32, #tpu.memory_space<vmem>>, vector<1x1x128xf32>
    %518 = vector.shape_cast %517 : vector<1x1x128xf32> to vector<1x128xf32>
    %519 = vector.shape_cast %516 : vector<1x128xf32> to vector<1x1x128xf32>
    tpu.vector_store %arg5[%c0_94, %c0_95, %c0_96], %519 {strides = array<i32>} : memref<4x4x128xf32, #tpu.memory_space<vmem>>, vector<1x1x128xf32>,
    %520 = vector.broadcast %109 : f32 to vector<1x128xf32>
    %521 = arith.mulf %494, %520 : vector<1x128xf32>
    %522 = vector.broadcast %110 : f32 to vector<1x128xf32>
    %523 = arith.mulf %509, %522 : vector<1x128xf32>
    %524 = arith.addf %521, %523 : vector<1x128xf32>
    %525 = vector.broadcast %116 : f32 to vector<1x128xf32>
    %526 = arith.addf %524, %525 : vector<1x128xf32>
    %c0_97 = arith.constant 0 : index
    %c1_98 = arith.constant 1 : index
    %c0_99 = arith.constant 0 : index
    %527 = vector.load %arg5[%c0_97, %c1_98, %c0_99] : memref<4x4x128xf32, #tpu.memory_space<vmem>>, vector<1x1x128xf32>
    %528 = vector.shape_cast %527 : vector<1x1x128xf32> to vector<1x128xf32>
    %529 = vector.shape_cast %526 : vector<1x128xf32> to vector<1x1x128xf32>
    tpu.vector_store %arg5[%c0_97, %c1_98, %c0_99], %529 {strides = array<i32>} : memref<4x4x128xf32, #tpu.memory_space<vmem>>, vector<1x1x128xf32>,
    %530 = vector.broadcast %111 : f32 to vector<1x128xf32>
    %531 = arith.mulf %494, %530 : vector<1x128xf32>
    %532 = vector.broadcast %112 : f32 to vector<1x128xf32>
    %533 = arith.mulf %509, %532 : vector<1x128xf32>
    %534 = arith.addf %531, %533 : vector<1x128xf32>
    %535 = vector.broadcast %117 : f32 to vector<1x128xf32>
    %536 = arith.addf %534, %535 : vector<1x128xf32>
    %c0_100 = arith.constant 0 : index
    %c2_101 = arith.constant 2 : index
    %c0_102 = arith.constant 0 : index
    %537 = vector.load %arg5[%c0_100, %c2_101, %c0_102] : memref<4x4x128xf32, #tpu.memory_space<vmem>>, vector<1x1x128xf32>
    %538 = vector.shape_cast %537 : vector<1x1x128xf32> to vector<1x128xf32>
    %539 = vector.shape_cast %536 : vector<1x128xf32> to vector<1x1x128xf32>
    tpu.vector_store %arg5[%c0_100, %c2_101, %c0_102], %539 {strides = array<i32>} : memref<4x4x128xf32, #tpu.memory_space<vmem>>, vector<1x1x128xf32>,
    %540 = vector.broadcast %113 : f32 to vector<1x128xf32>
    %541 = arith.mulf %494, %540 : vector<1x128xf32>
    %542 = vector.broadcast %114 : f32 to vector<1x128xf32>
    %543 = arith.mulf %509, %542 : vector<1x128xf32>
    %544 = arith.addf %541, %543 : vector<1x128xf32>
    %545 = vector.broadcast %118 : f32 to vector<1x128xf32>
    %546 = arith.addf %544, %545 : vector<1x128xf32>
    %c0_103 = arith.constant 0 : index
    %c3_104 = arith.constant 3 : index
    %c0_105 = arith.constant 0 : index
    %547 = vector.load %arg5[%c0_103, %c3_104, %c0_105] : memref<4x4x128xf32, #tpu.memory_space<vmem>>, vector<1x1x128xf32>
    %548 = vector.shape_cast %547 : vector<1x1x128xf32> to vector<1x128xf32>
    %549 = vector.shape_cast %546 : vector<1x128xf32> to vector<1x1x128xf32>
    tpu.vector_store %arg5[%c0_103, %c3_104, %c0_105], %549 {strides = array<i32>} : memref<4x4x128xf32, #tpu.memory_space<vmem>>, vector<1x1x128xf32>,
    %550 = arith.extui %122 : i1 to i32
    %c0_i32_106 = arith.constant 0 : i32
    %551 = arith.cmpi ne, %550, %c0_i32_106 : i32
    scf.if %551 {
      %c0_425 = arith.constant 0 : index
      %c0_426 = arith.constant 0 : index
      %1848 = vector.load %arg6[%c0_425, %c0_426] : memref<8x128xf32, #tpu.memory_space<vmem>>, vector<1x128xf32>
      tpu.vector_store %arg6[%c0_425, %c0_426], %294 {strides = array<i32>} : memref<8x128xf32, #tpu.memory_space<vmem>>, vector<1x128xf32>,
      %c1_427 = arith.constant 1 : index
      %c0_428 = arith.constant 0 : index
      %1849 = vector.load %arg6[%c1_427, %c0_428] : memref<8x128xf32, #tpu.memory_space<vmem>>, vector<1x128xf32>
      tpu.vector_store %arg6[%c1_427, %c0_428], %292 {strides = array<i32>} : memref<8x128xf32, #tpu.memory_space<vmem>>, vector<1x128xf32>,
      %c2_429 = arith.constant 2 : index
      %c0_430 = arith.constant 0 : index
      %1850 = vector.load %arg6[%c2_429, %c0_430] : memref<8x128xf32, #tpu.memory_space<vmem>>, vector<2x128xf32>
      tpu.vector_store %arg6[%c2_429, %c0_430], %441 {strides = array<i32>} : memref<8x128xf32, #tpu.memory_space<vmem>>, vector<2x128xf32>,
      %c4_431 = arith.constant 4 : index
      %c0_432 = arith.constant 0 : index
      %1851 = vector.load %arg6[%c4_431, %c0_432] : memref<8x128xf32, #tpu.memory_space<vmem>>, vector<2x128xf32>
      tpu.vector_store %arg6[%c4_431, %c0_432], %439 {strides = array<i32>} : memref<8x128xf32, #tpu.memory_space<vmem>>, vector<2x128xf32>,
    } else {
    }
    %c4_i32_107 = arith.constant 4 : i32
    %552 = arith.muli %arg0, %c4_i32_107 : i32
    %c1_i32 = arith.constant 1 : i32
    %553 = arith.addi %552, %c1_i32 : i32
    %554 = arith.cmpi slt, %553, %119 : i32
    %c1_108 = arith.constant 1 : index
    %c0_109 = arith.constant 0 : index
    %c0_110 = arith.constant 0 : index
    %555 = vector.load %arg4[%c1_108, %c0_109, %c0_110] : memref<4x16x128xf32, #tpu.memory_space<vmem>>, vector<1x1x128xf32>
    %556 = vector.shape_cast %555 : vector<1x1x128xf32> to vector<1x128xf32>
    %c1_111 = arith.constant 1 : index
    %c1_112 = arith.constant 1 : index
    %c0_113 = arith.constant 0 : index
    %557 = vector.load %arg4[%c1_111, %c1_112, %c0_113] : memref<4x16x128xf32, #tpu.memory_space<vmem>>, vector<1x1x128xf32>
    %558 = vector.shape_cast %557 : vector<1x1x128xf32> to vector<1x128xf32>
    %c1_114 = arith.constant 1 : index
    %c2_115 = arith.constant 2 : index
    %c0_116 = arith.constant 0 : index
    %559 = vector.load %arg4[%c1_114, %c2_115, %c0_116] : memref<4x16x128xf32, #tpu.memory_space<vmem>>, vector<1x1x128xf32>
    %560 = vector.shape_cast %559 : vector<1x1x128xf32> to vector<1x128xf32>
    %c1_117 = arith.constant 1 : index
    %c3_118 = arith.constant 3 : index
    %c0_119 = arith.constant 0 : index
    %561 = vector.load %arg4[%c1_117, %c3_118, %c0_119] : memref<4x16x128xf32, #tpu.memory_space<vmem>>, vector<1x1x128xf32>
    %562 = vector.shape_cast %561 : vector<1x1x128xf32> to vector<1x128xf32>
    %c1_120 = arith.constant 1 : index
    %c4_121 = arith.constant 4 : index
    %c0_122 = arith.constant 0 : index
    %563 = vector.load %arg4[%c1_120, %c4_121, %c0_122] : memref<4x16x128xf32, #tpu.memory_space<vmem>>, vector<1x1x128xf32>
    %564 = vector.shape_cast %563 : vector<1x1x128xf32> to vector<1x128xf32>
    %c1_123 = arith.constant 1 : index
    %c5_124 = arith.constant 5 : index
    %c0_125 = arith.constant 0 : index
    %565 = vector.load %arg4[%c1_123, %c5_124, %c0_125] : memref<4x16x128xf32, #tpu.memory_space<vmem>>, vector<1x1x128xf32>
    %566 = vector.shape_cast %565 : vector<1x1x128xf32> to vector<1x128xf32>
    %c1_126 = arith.constant 1 : index
    %c6_127 = arith.constant 6 : index
    %c0_128 = arith.constant 0 : index
    %567 = vector.load %arg4[%c1_126, %c6_127, %c0_128] : memref<4x16x128xf32, #tpu.memory_space<vmem>>, vector<1x1x128xf32>
    %568 = vector.shape_cast %567 : vector<1x1x128xf32> to vector<1x128xf32>
    %c1_129 = arith.constant 1 : index
    %c7_130 = arith.constant 7 : index
    %c0_131 = arith.constant 0 : index
    %569 = vector.load %arg4[%c1_129, %c7_130, %c0_131] : memref<4x16x128xf32, #tpu.memory_space<vmem>>, vector<1x1x128xf32>
    %570 = vector.shape_cast %569 : vector<1x1x128xf32> to vector<1x128xf32>
    %c1_132 = arith.constant 1 : index
    %c8_133 = arith.constant 8 : index
    %c0_134 = arith.constant 0 : index
    %571 = vector.load %arg4[%c1_132, %c8_133, %c0_134] : memref<4x16x128xf32, #tpu.memory_space<vmem>>, vector<1x1x128xf32>
    %572 = vector.shape_cast %571 : vector<1x1x128xf32> to vector<1x128xf32>
    %c0_135 = arith.constant 0 : index
    %c0_136 = arith.constant 0 : index
    %573 = vector.load %arg6[%c0_135, %c0_136] : memref<8x128xf32, #tpu.memory_space<vmem>>, vector<1x128xf32>
    %c1_137 = arith.constant 1 : index
    %c0_138 = arith.constant 0 : index
    %574 = vector.load %arg6[%c1_137, %c0_138] : memref<8x128xf32, #tpu.memory_space<vmem>>, vector<1x128xf32>
    %c2_139 = arith.constant 2 : index
    %c0_140 = arith.constant 0 : index
    %575 = vector.load %arg6[%c2_139, %c0_140] : memref<8x128xf32, #tpu.memory_space<vmem>>, vector<1x128xf32>
    %c3_141 = arith.constant 3 : index
    %c0_142 = arith.constant 0 : index
    %576 = vector.load %arg6[%c3_141, %c0_142] : memref<8x128xf32, #tpu.memory_space<vmem>>, vector<1x128xf32>
    %c4_143 = arith.constant 4 : index
    %c0_144 = arith.constant 0 : index
    %577 = vector.load %arg6[%c4_143, %c0_144] : memref<8x128xf32, #tpu.memory_space<vmem>>, vector<2x128xf32>
    %578 = vector.broadcast %3 : f32 to vector<1x128xf32>
    %579 = arith.mulf %572, %578 : vector<1x128xf32>
    %580 = vector.broadcast %4 : f32 to vector<1x128xf32>
    %581 = arith.addf %579, %580 : vector<1x128xf32>
    %582 = vector.broadcast %5 : f32 to vector<1x128xf32>
    %583 = arith.mulf %556, %582 : vector<1x128xf32>
    %584 = vector.broadcast %6 : f32 to vector<1x128xf32>
    %585 = arith.mulf %558, %584 : vector<1x128xf32>
    %586 = arith.addf %583, %585 : vector<1x128xf32>
    %587 = vector.broadcast %7 : f32 to vector<1x128xf32>
    %588 = arith.mulf %560, %587 : vector<1x128xf32>
    %589 = arith.addf %586, %588 : vector<1x128xf32>
    %590 = vector.broadcast %8 : f32 to vector<1x128xf32>
    %591 = arith.mulf %562, %590 : vector<1x128xf32>
    %592 = arith.addf %589, %591 : vector<1x128xf32>
    %593 = vector.broadcast %9 : f32 to vector<1x128xf32>
    %594 = arith.mulf %564, %593 : vector<1x128xf32>
    %595 = arith.addf %592, %594 : vector<1x128xf32>
    %596 = vector.broadcast %10 : f32 to vector<1x128xf32>
    %597 = arith.mulf %566, %596 : vector<1x128xf32>
    %598 = arith.addf %595, %597 : vector<1x128xf32>
    %599 = vector.broadcast %11 : f32 to vector<1x128xf32>
    %600 = arith.mulf %568, %599 : vector<1x128xf32>
    %601 = arith.addf %598, %600 : vector<1x128xf32>
    %602 = vector.broadcast %12 : f32 to vector<1x128xf32>
    %603 = arith.mulf %570, %602 : vector<1x128xf32>
    %604 = arith.addf %601, %603 : vector<1x128xf32>
    %605 = vector.broadcast %37 : f32 to vector<1x128xf32>
    %606 = arith.mulf %573, %605 : vector<1x128xf32>
    %607 = arith.addf %604, %606 : vector<1x128xf32>
    %608 = vector.broadcast %41 : f32 to vector<1x128xf32>
    %609 = arith.addf %607, %608 : vector<1x128xf32>
    %cst_145 = arith.constant 5.000000e-01 : f32
    %610 = vector.broadcast %cst_145 : f32 to vector<1x128xf32>
    %611 = arith.mulf %609, %610 : vector<1x128xf32>
    %c0_146 = arith.constant 0 : index
    %c0_147 = arith.constant 0 : index
    %612 = vector.load %arg7[%c0_146, %c0_147] : memref<8x128xf32, #tpu.memory_space<vmem>>, vector<1x128xf32>
    tpu.vector_store %arg7[%c0_146, %c0_147], %611 {strides = array<i32>} : memref<8x128xf32, #tpu.memory_space<vmem>>, vector<1x128xf32>,
    %613 = vector.broadcast %13 : f32 to vector<1x128xf32>
    %614 = arith.mulf %556, %613 : vector<1x128xf32>
    %615 = vector.broadcast %14 : f32 to vector<1x128xf32>
    %616 = arith.mulf %558, %615 : vector<1x128xf32>
    %617 = arith.addf %614, %616 : vector<1x128xf32>
    %618 = vector.broadcast %15 : f32 to vector<1x128xf32>
    %619 = arith.mulf %560, %618 : vector<1x128xf32>
    %620 = arith.addf %617, %619 : vector<1x128xf32>
    %621 = vector.broadcast %16 : f32 to vector<1x128xf32>
    %622 = arith.mulf %562, %621 : vector<1x128xf32>
    %623 = arith.addf %620, %622 : vector<1x128xf32>
    %624 = vector.broadcast %17 : f32 to vector<1x128xf32>
    %625 = arith.mulf %564, %624 : vector<1x128xf32>
    %626 = arith.addf %623, %625 : vector<1x128xf32>
    %627 = vector.broadcast %18 : f32 to vector<1x128xf32>
    %628 = arith.mulf %566, %627 : vector<1x128xf32>
    %629 = arith.addf %626, %628 : vector<1x128xf32>
    %630 = vector.broadcast %19 : f32 to vector<1x128xf32>
    %631 = arith.mulf %568, %630 : vector<1x128xf32>
    %632 = arith.addf %629, %631 : vector<1x128xf32>
    %633 = vector.broadcast %20 : f32 to vector<1x128xf32>
    %634 = arith.mulf %570, %633 : vector<1x128xf32>
    %635 = arith.addf %632, %634 : vector<1x128xf32>
    %636 = vector.broadcast %38 : f32 to vector<1x128xf32>
    %637 = arith.mulf %573, %636 : vector<1x128xf32>
    %638 = arith.addf %635, %637 : vector<1x128xf32>
    %639 = vector.broadcast %42 : f32 to vector<1x128xf32>
    %640 = arith.addf %638, %639 : vector<1x128xf32>
    %cst_148 = arith.constant 5.000000e-01 : f32
    %641 = vector.broadcast %cst_148 : f32 to vector<1x128xf32>
    %642 = arith.mulf %640, %641 : vector<1x128xf32>
    %c1_149 = arith.constant 1 : index
    %c0_150 = arith.constant 0 : index
    %643 = vector.load %arg7[%c1_149, %c0_150] : memref<8x128xf32, #tpu.memory_space<vmem>>, vector<1x128xf32>
    tpu.vector_store %arg7[%c1_149, %c0_150], %642 {strides = array<i32>} : memref<8x128xf32, #tpu.memory_space<vmem>>, vector<1x128xf32>,
    %644 = vector.broadcast %21 : f32 to vector<1x128xf32>
    %645 = arith.mulf %556, %644 : vector<1x128xf32>
    %646 = vector.broadcast %22 : f32 to vector<1x128xf32>
    %647 = arith.mulf %558, %646 : vector<1x128xf32>
    %648 = arith.addf %645, %647 : vector<1x128xf32>
    %649 = vector.broadcast %23 : f32 to vector<1x128xf32>
    %650 = arith.mulf %560, %649 : vector<1x128xf32>
    %651 = arith.addf %648, %650 : vector<1x128xf32>
    %652 = vector.broadcast %24 : f32 to vector<1x128xf32>
    %653 = arith.mulf %562, %652 : vector<1x128xf32>
    %654 = arith.addf %651, %653 : vector<1x128xf32>
    %655 = vector.broadcast %25 : f32 to vector<1x128xf32>
    %656 = arith.mulf %564, %655 : vector<1x128xf32>
    %657 = arith.addf %654, %656 : vector<1x128xf32>
    %658 = vector.broadcast %26 : f32 to vector<1x128xf32>
    %659 = arith.mulf %566, %658 : vector<1x128xf32>
    %660 = arith.addf %657, %659 : vector<1x128xf32>
    %661 = vector.broadcast %27 : f32 to vector<1x128xf32>
    %662 = arith.mulf %568, %661 : vector<1x128xf32>
    %663 = arith.addf %660, %662 : vector<1x128xf32>
    %664 = vector.broadcast %28 : f32 to vector<1x128xf32>
    %665 = arith.mulf %570, %664 : vector<1x128xf32>
    %666 = arith.addf %663, %665 : vector<1x128xf32>
    %667 = vector.broadcast %39 : f32 to vector<1x128xf32>
    %668 = arith.mulf %573, %667 : vector<1x128xf32>
    %669 = arith.addf %666, %668 : vector<1x128xf32>
    %670 = vector.broadcast %43 : f32 to vector<1x128xf32>
    %671 = arith.addf %669, %670 : vector<1x128xf32>
    %c2_151 = arith.constant 2 : index
    %c0_152 = arith.constant 0 : index
    %672 = vector.load %arg7[%c2_151, %c0_152] : memref<8x128xf32, #tpu.memory_space<vmem>>, vector<1x128xf32>
    tpu.vector_store %arg7[%c2_151, %c0_152], %671 {strides = array<i32>} : memref<8x128xf32, #tpu.memory_space<vmem>>, vector<1x128xf32>,
    %673 = vector.broadcast %29 : f32 to vector<1x128xf32>
    %674 = arith.mulf %556, %673 : vector<1x128xf32>
    %675 = vector.broadcast %30 : f32 to vector<1x128xf32>
    %676 = arith.mulf %558, %675 : vector<1x128xf32>
    %677 = arith.addf %674, %676 : vector<1x128xf32>
    %678 = vector.broadcast %31 : f32 to vector<1x128xf32>
    %679 = arith.mulf %560, %678 : vector<1x128xf32>
    %680 = arith.addf %677, %679 : vector<1x128xf32>
    %681 = vector.broadcast %32 : f32 to vector<1x128xf32>
    %682 = arith.mulf %562, %681 : vector<1x128xf32>
    %683 = arith.addf %680, %682 : vector<1x128xf32>
    %684 = vector.broadcast %33 : f32 to vector<1x128xf32>
    %685 = arith.mulf %564, %684 : vector<1x128xf32>
    %686 = arith.addf %683, %685 : vector<1x128xf32>
    %687 = vector.broadcast %34 : f32 to vector<1x128xf32>
    %688 = arith.mulf %566, %687 : vector<1x128xf32>
    %689 = arith.addf %686, %688 : vector<1x128xf32>
    %690 = vector.broadcast %35 : f32 to vector<1x128xf32>
    %691 = arith.mulf %568, %690 : vector<1x128xf32>
    %692 = arith.addf %689, %691 : vector<1x128xf32>
    %693 = vector.broadcast %36 : f32 to vector<1x128xf32>
    %694 = arith.mulf %570, %693 : vector<1x128xf32>
    %695 = arith.addf %692, %694 : vector<1x128xf32>
    %696 = vector.broadcast %40 : f32 to vector<1x128xf32>
    %697 = arith.mulf %573, %696 : vector<1x128xf32>
    %698 = arith.addf %695, %697 : vector<1x128xf32>
    %699 = vector.broadcast %44 : f32 to vector<1x128xf32>
    %700 = arith.addf %698, %699 : vector<1x128xf32>
    %cst_153 = arith.constant 5.000000e-01 : f32
    %701 = vector.broadcast %cst_153 : f32 to vector<1x128xf32>
    %702 = arith.mulf %700, %701 : vector<1x128xf32>
    %c3_154 = arith.constant 3 : index
    %c0_155 = arith.constant 0 : index
    %703 = vector.load %arg7[%c3_154, %c0_155] : memref<8x128xf32, #tpu.memory_space<vmem>>, vector<1x128xf32>
    tpu.vector_store %arg7[%c3_154, %c0_155], %702 {strides = array<i32>} : memref<8x128xf32, #tpu.memory_space<vmem>>, vector<1x128xf32>,
    %c0_156 = arith.constant 0 : index
    %c0_157 = arith.constant 0 : index
    %704 = vector.load %arg7[%c0_156, %c0_157] : memref<8x128xf32, #tpu.memory_space<vmem>>, vector<4x128xf32>
    %705 = math.tanh %704 : vector<4x128xf32>
    %706 = vector.extract_strided_slice %705 {offsets = [0, 0], sizes = [1, 128], strides = [1, 1]} : vector<4x128xf32> to vector<1x128xf32>
    %cst_158 = arith.constant 5.000000e-01 : f32
    %707 = vector.broadcast %cst_158 : f32 to vector<1x128xf32>
    %708 = arith.mulf %707, %706 : vector<1x128xf32>
    %cst_159 = arith.constant 5.000000e-01 : f32
    %709 = vector.broadcast %cst_159 : f32 to vector<1x128xf32>
    %710 = arith.addf %708, %709 : vector<1x128xf32>
    %711 = vector.extract_strided_slice %705 {offsets = [1, 0], sizes = [1, 128], strides = [1, 1]} : vector<4x128xf32> to vector<1x128xf32>
    %cst_160 = arith.constant 5.000000e-01 : f32
    %712 = vector.broadcast %cst_160 : f32 to vector<1x128xf32>
    %713 = arith.mulf %712, %711 : vector<1x128xf32>
    %cst_161 = arith.constant 5.000000e-01 : f32
    %714 = vector.broadcast %cst_161 : f32 to vector<1x128xf32>
    %715 = arith.addf %713, %714 : vector<1x128xf32>
    %716 = vector.extract_strided_slice %705 {offsets = [2, 0], sizes = [1, 128], strides = [1, 1]} : vector<4x128xf32> to vector<1x128xf32>
    %717 = vector.extract_strided_slice %705 {offsets = [3, 0], sizes = [1, 128], strides = [1, 1]} : vector<4x128xf32> to vector<1x128xf32>
    %cst_162 = arith.constant 5.000000e-01 : f32
    %718 = vector.broadcast %cst_162 : f32 to vector<1x128xf32>
    %719 = arith.mulf %718, %717 : vector<1x128xf32>
    %cst_163 = arith.constant 5.000000e-01 : f32
    %720 = vector.broadcast %cst_163 : f32 to vector<1x128xf32>
    %721 = arith.addf %719, %720 : vector<1x128xf32>
    %722 = arith.mulf %715, %574 : vector<1x128xf32>
    %723 = arith.mulf %710, %716 : vector<1x128xf32>
    %724 = arith.addf %722, %723 : vector<1x128xf32>
    %725 = math.tanh %724 : vector<1x128xf32>
    %726 = arith.mulf %721, %725 : vector<1x128xf32>
    %727 = vector.broadcast %45 : f32 to vector<1x128xf32>
    %728 = arith.mulf %581, %727 : vector<1x128xf32>
    %729 = vector.broadcast %46 : f32 to vector<1x128xf32>
    %730 = arith.mulf %726, %729 : vector<1x128xf32>
    %731 = arith.addf %728, %730 : vector<1x128xf32>
    %732 = vector.broadcast %61 : f32 to vector<1x128xf32>
    %733 = arith.mulf %575, %732 : vector<1x128xf32>
    %734 = arith.addf %731, %733 : vector<1x128xf32>
    %735 = vector.broadcast %62 : f32 to vector<1x128xf32>
    %736 = arith.mulf %576, %735 : vector<1x128xf32>
    %737 = arith.addf %734, %736 : vector<1x128xf32>
    %738 = vector.broadcast %77 : f32 to vector<1x128xf32>
    %739 = arith.addf %737, %738 : vector<1x128xf32>
    %cst_164 = arith.constant 5.000000e-01 : f32
    %740 = vector.broadcast %cst_164 : f32 to vector<1x128xf32>
    %741 = arith.mulf %739, %740 : vector<1x128xf32>
    %c0_165 = arith.constant 0 : index
    %c0_166 = arith.constant 0 : index
    %742 = vector.load %arg7[%c0_165, %c0_166] : memref<8x128xf32, #tpu.memory_space<vmem>>, vector<1x128xf32>
    tpu.vector_store %arg7[%c0_165, %c0_166], %741 {strides = array<i32>} : memref<8x128xf32, #tpu.memory_space<vmem>>, vector<1x128xf32>,
    %743 = vector.broadcast %47 : f32 to vector<1x128xf32>
    %744 = arith.mulf %581, %743 : vector<1x128xf32>
    %745 = vector.broadcast %48 : f32 to vector<1x128xf32>
    %746 = arith.mulf %726, %745 : vector<1x128xf32>
    %747 = arith.addf %744, %746 : vector<1x128xf32>
    %748 = vector.broadcast %63 : f32 to vector<1x128xf32>
    %749 = arith.mulf %575, %748 : vector<1x128xf32>
    %750 = arith.addf %747, %749 : vector<1x128xf32>
    %751 = vector.broadcast %64 : f32 to vector<1x128xf32>
    %752 = arith.mulf %576, %751 : vector<1x128xf32>
    %753 = arith.addf %750, %752 : vector<1x128xf32>
    %754 = vector.broadcast %78 : f32 to vector<1x128xf32>
    %755 = arith.addf %753, %754 : vector<1x128xf32>
    %cst_167 = arith.constant 5.000000e-01 : f32
    %756 = vector.broadcast %cst_167 : f32 to vector<1x128xf32>
    %757 = arith.mulf %755, %756 : vector<1x128xf32>
    %c1_168 = arith.constant 1 : index
    %c0_169 = arith.constant 0 : index
    %758 = vector.load %arg7[%c1_168, %c0_169] : memref<8x128xf32, #tpu.memory_space<vmem>>, vector<1x128xf32>
    tpu.vector_store %arg7[%c1_168, %c0_169], %757 {strides = array<i32>} : memref<8x128xf32, #tpu.memory_space<vmem>>, vector<1x128xf32>,
    %759 = vector.broadcast %49 : f32 to vector<1x128xf32>
    %760 = arith.mulf %581, %759 : vector<1x128xf32>
    %761 = vector.broadcast %50 : f32 to vector<1x128xf32>
    %762 = arith.mulf %726, %761 : vector<1x128xf32>
    %763 = arith.addf %760, %762 : vector<1x128xf32>
    %764 = vector.broadcast %65 : f32 to vector<1x128xf32>
    %765 = arith.mulf %575, %764 : vector<1x128xf32>
    %766 = arith.addf %763, %765 : vector<1x128xf32>
    %767 = vector.broadcast %66 : f32 to vector<1x128xf32>
    %768 = arith.mulf %576, %767 : vector<1x128xf32>
    %769 = arith.addf %766, %768 : vector<1x128xf32>
    %770 = vector.broadcast %79 : f32 to vector<1x128xf32>
    %771 = arith.addf %769, %770 : vector<1x128xf32>
    %cst_170 = arith.constant 5.000000e-01 : f32
    %772 = vector.broadcast %cst_170 : f32 to vector<1x128xf32>
    %773 = arith.mulf %771, %772 : vector<1x128xf32>
    %c2_171 = arith.constant 2 : index
    %c0_172 = arith.constant 0 : index
    %774 = vector.load %arg7[%c2_171, %c0_172] : memref<8x128xf32, #tpu.memory_space<vmem>>, vector<1x128xf32>
    tpu.vector_store %arg7[%c2_171, %c0_172], %773 {strides = array<i32>} : memref<8x128xf32, #tpu.memory_space<vmem>>, vector<1x128xf32>,
    %775 = vector.broadcast %51 : f32 to vector<1x128xf32>
    %776 = arith.mulf %581, %775 : vector<1x128xf32>
    %777 = vector.broadcast %52 : f32 to vector<1x128xf32>
    %778 = arith.mulf %726, %777 : vector<1x128xf32>
    %779 = arith.addf %776, %778 : vector<1x128xf32>
    %780 = vector.broadcast %67 : f32 to vector<1x128xf32>
    %781 = arith.mulf %575, %780 : vector<1x128xf32>
    %782 = arith.addf %779, %781 : vector<1x128xf32>
    %783 = vector.broadcast %68 : f32 to vector<1x128xf32>
    %784 = arith.mulf %576, %783 : vector<1x128xf32>
    %785 = arith.addf %782, %784 : vector<1x128xf32>
    %786 = vector.broadcast %80 : f32 to vector<1x128xf32>
    %787 = arith.addf %785, %786 : vector<1x128xf32>
    %cst_173 = arith.constant 5.000000e-01 : f32
    %788 = vector.broadcast %cst_173 : f32 to vector<1x128xf32>
    %789 = arith.mulf %787, %788 : vector<1x128xf32>
    %c3_174 = arith.constant 3 : index
    %c0_175 = arith.constant 0 : index
    %790 = vector.load %arg7[%c3_174, %c0_175] : memref<8x128xf32, #tpu.memory_space<vmem>>, vector<1x128xf32>
    tpu.vector_store %arg7[%c3_174, %c0_175], %789 {strides = array<i32>} : memref<8x128xf32, #tpu.memory_space<vmem>>, vector<1x128xf32>,
    %791 = vector.broadcast %53 : f32 to vector<1x128xf32>
    %792 = arith.mulf %581, %791 : vector<1x128xf32>
    %793 = vector.broadcast %54 : f32 to vector<1x128xf32>
    %794 = arith.mulf %726, %793 : vector<1x128xf32>
    %795 = arith.addf %792, %794 : vector<1x128xf32>
    %796 = vector.broadcast %69 : f32 to vector<1x128xf32>
    %797 = arith.mulf %575, %796 : vector<1x128xf32>
    %798 = arith.addf %795, %797 : vector<1x128xf32>
    %799 = vector.broadcast %70 : f32 to vector<1x128xf32>
    %800 = arith.mulf %576, %799 : vector<1x128xf32>
    %801 = arith.addf %798, %800 : vector<1x128xf32>
    %802 = vector.broadcast %81 : f32 to vector<1x128xf32>
    %803 = arith.addf %801, %802 : vector<1x128xf32>
    %c4_176 = arith.constant 4 : index
    %c0_177 = arith.constant 0 : index
    %804 = vector.load %arg7[%c4_176, %c0_177] : memref<8x128xf32, #tpu.memory_space<vmem>>, vector<1x128xf32>
    tpu.vector_store %arg7[%c4_176, %c0_177], %803 {strides = array<i32>} : memref<8x128xf32, #tpu.memory_space<vmem>>, vector<1x128xf32>,
    %805 = vector.broadcast %55 : f32 to vector<1x128xf32>
    %806 = arith.mulf %581, %805 : vector<1x128xf32>
    %807 = vector.broadcast %56 : f32 to vector<1x128xf32>
    %808 = arith.mulf %726, %807 : vector<1x128xf32>
    %809 = arith.addf %806, %808 : vector<1x128xf32>
    %810 = vector.broadcast %71 : f32 to vector<1x128xf32>
    %811 = arith.mulf %575, %810 : vector<1x128xf32>
    %812 = arith.addf %809, %811 : vector<1x128xf32>
    %813 = vector.broadcast %72 : f32 to vector<1x128xf32>
    %814 = arith.mulf %576, %813 : vector<1x128xf32>
    %815 = arith.addf %812, %814 : vector<1x128xf32>
    %816 = vector.broadcast %82 : f32 to vector<1x128xf32>
    %817 = arith.addf %815, %816 : vector<1x128xf32>
    %c5_178 = arith.constant 5 : index
    %c0_179 = arith.constant 0 : index
    %818 = vector.load %arg7[%c5_178, %c0_179] : memref<8x128xf32, #tpu.memory_space<vmem>>, vector<1x128xf32>
    tpu.vector_store %arg7[%c5_178, %c0_179], %817 {strides = array<i32>} : memref<8x128xf32, #tpu.memory_space<vmem>>, vector<1x128xf32>,
    %819 = vector.broadcast %57 : f32 to vector<1x128xf32>
    %820 = arith.mulf %581, %819 : vector<1x128xf32>
    %821 = vector.broadcast %58 : f32 to vector<1x128xf32>
    %822 = arith.mulf %726, %821 : vector<1x128xf32>
    %823 = arith.addf %820, %822 : vector<1x128xf32>
    %824 = vector.broadcast %73 : f32 to vector<1x128xf32>
    %825 = arith.mulf %575, %824 : vector<1x128xf32>
    %826 = arith.addf %823, %825 : vector<1x128xf32>
    %827 = vector.broadcast %74 : f32 to vector<1x128xf32>
    %828 = arith.mulf %576, %827 : vector<1x128xf32>
    %829 = arith.addf %826, %828 : vector<1x128xf32>
    %830 = vector.broadcast %83 : f32 to vector<1x128xf32>
    %831 = arith.addf %829, %830 : vector<1x128xf32>
    %cst_180 = arith.constant 5.000000e-01 : f32
    %832 = vector.broadcast %cst_180 : f32 to vector<1x128xf32>
    %833 = arith.mulf %831, %832 : vector<1x128xf32>
    %c6_181 = arith.constant 6 : index
    %c0_182 = arith.constant 0 : index
    %834 = vector.load %arg7[%c6_181, %c0_182] : memref<8x128xf32, #tpu.memory_space<vmem>>, vector<1x128xf32>
    tpu.vector_store %arg7[%c6_181, %c0_182], %833 {strides = array<i32>} : memref<8x128xf32, #tpu.memory_space<vmem>>, vector<1x128xf32>,
    %835 = vector.broadcast %59 : f32 to vector<1x128xf32>
    %836 = arith.mulf %581, %835 : vector<1x128xf32>
    %837 = vector.broadcast %60 : f32 to vector<1x128xf32>
    %838 = arith.mulf %726, %837 : vector<1x128xf32>
    %839 = arith.addf %836, %838 : vector<1x128xf32>
    %840 = vector.broadcast %75 : f32 to vector<1x128xf32>
    %841 = arith.mulf %575, %840 : vector<1x128xf32>
    %842 = arith.addf %839, %841 : vector<1x128xf32>
    %843 = vector.broadcast %76 : f32 to vector<1x128xf32>
    %844 = arith.mulf %576, %843 : vector<1x128xf32>
    %845 = arith.addf %842, %844 : vector<1x128xf32>
    %846 = vector.broadcast %84 : f32 to vector<1x128xf32>
    %847 = arith.addf %845, %846 : vector<1x128xf32>
    %cst_183 = arith.constant 5.000000e-01 : f32
    %848 = vector.broadcast %cst_183 : f32 to vector<1x128xf32>
    %849 = arith.mulf %847, %848 : vector<1x128xf32>
    %c7_184 = arith.constant 7 : index
    %c0_185 = arith.constant 0 : index
    %850 = vector.load %arg7[%c7_184, %c0_185] : memref<8x128xf32, #tpu.memory_space<vmem>>, vector<1x128xf32>
    tpu.vector_store %arg7[%c7_184, %c0_185], %849 {strides = array<i32>} : memref<8x128xf32, #tpu.memory_space<vmem>>, vector<1x128xf32>,
    %c0_186 = arith.constant 0 : index
    %c0_187 = arith.constant 0 : index
    %851 = vector.load %arg7[%c0_186, %c0_187] : memref<8x128xf32, #tpu.memory_space<vmem>>, vector<8x128xf32>
    %852 = math.tanh %851 : vector<8x128xf32>
    %853 = vector.extract_strided_slice %852 {offsets = [0, 0], sizes = [2, 128], strides = [1, 1]} : vector<8x128xf32> to vector<2x128xf32>
    %cst_188 = arith.constant 5.000000e-01 : f32
    %854 = vector.broadcast %cst_188 : f32 to vector<2x128xf32>
    %855 = arith.mulf %854, %853 : vector<2x128xf32>
    %cst_189 = arith.constant 5.000000e-01 : f32
    %856 = vector.broadcast %cst_189 : f32 to vector<2x128xf32>
    %857 = arith.addf %855, %856 : vector<2x128xf32>
    %858 = vector.extract_strided_slice %852 {offsets = [2, 0], sizes = [2, 128], strides = [1, 1]} : vector<8x128xf32> to vector<2x128xf32>
    %cst_190 = arith.constant 5.000000e-01 : f32
    %859 = vector.broadcast %cst_190 : f32 to vector<2x128xf32>
    %860 = arith.mulf %859, %858 : vector<2x128xf32>
    %cst_191 = arith.constant 5.000000e-01 : f32
    %861 = vector.broadcast %cst_191 : f32 to vector<2x128xf32>
    %862 = arith.addf %860, %861 : vector<2x128xf32>
    %863 = vector.extract_strided_slice %852 {offsets = [4, 0], sizes = [2, 128], strides = [1, 1]} : vector<8x128xf32> to vector<2x128xf32>
    %864 = vector.extract_strided_slice %852 {offsets = [6, 0], sizes = [2, 128], strides = [1, 1]} : vector<8x128xf32> to vector<2x128xf32>
    %cst_192 = arith.constant 5.000000e-01 : f32
    %865 = vector.broadcast %cst_192 : f32 to vector<2x128xf32>
    %866 = arith.mulf %865, %864 : vector<2x128xf32>
    %cst_193 = arith.constant 5.000000e-01 : f32
    %867 = vector.broadcast %cst_193 : f32 to vector<2x128xf32>
    %868 = arith.addf %866, %867 : vector<2x128xf32>
    %869 = arith.mulf %862, %577 : vector<2x128xf32>
    %870 = arith.mulf %857, %863 : vector<2x128xf32>
    %871 = arith.addf %869, %870 : vector<2x128xf32>
    %872 = math.tanh %871 : vector<2x128xf32>
    %873 = arith.mulf %868, %872 : vector<2x128xf32>
    %874 = vector.extract_strided_slice %873 {offsets = [0, 0], sizes = [1, 128], strides = [1, 1]} : vector<2x128xf32> to vector<1x128xf32>
    %875 = vector.extract_strided_slice %873 {offsets = [1, 0], sizes = [1, 128], strides = [1, 1]} : vector<2x128xf32> to vector<1x128xf32>
    %876 = vector.broadcast %85 : f32 to vector<1x128xf32>
    %877 = arith.mulf %874, %876 : vector<1x128xf32>
    %878 = vector.broadcast %86 : f32 to vector<1x128xf32>
    %879 = arith.mulf %875, %878 : vector<1x128xf32>
    %880 = arith.addf %877, %879 : vector<1x128xf32>
    %881 = vector.broadcast %93 : f32 to vector<1x128xf32>
    %882 = arith.addf %880, %881 : vector<1x128xf32>
    %cst_194 = arith.constant 0.000000e+00 : f32
    %883 = vector.broadcast %cst_194 : f32 to vector<1x128xf32>
    %884 = arith.maximumf %882, %883 : vector<1x128xf32>
    %885 = vector.broadcast %87 : f32 to vector<1x128xf32>
    %886 = arith.mulf %874, %885 : vector<1x128xf32>
    %887 = vector.broadcast %88 : f32 to vector<1x128xf32>
    %888 = arith.mulf %875, %887 : vector<1x128xf32>
    %889 = arith.addf %886, %888 : vector<1x128xf32>
    %890 = vector.broadcast %94 : f32 to vector<1x128xf32>
    %891 = arith.addf %889, %890 : vector<1x128xf32>
    %cst_195 = arith.constant 0.000000e+00 : f32
    %892 = vector.broadcast %cst_195 : f32 to vector<1x128xf32>
    %893 = arith.maximumf %891, %892 : vector<1x128xf32>
    %894 = vector.broadcast %89 : f32 to vector<1x128xf32>
    %895 = arith.mulf %874, %894 : vector<1x128xf32>
    %896 = vector.broadcast %90 : f32 to vector<1x128xf32>
    %897 = arith.mulf %875, %896 : vector<1x128xf32>
    %898 = arith.addf %895, %897 : vector<1x128xf32>
    %899 = vector.broadcast %95 : f32 to vector<1x128xf32>
    %900 = arith.addf %898, %899 : vector<1x128xf32>
    %cst_196 = arith.constant 0.000000e+00 : f32
    %901 = vector.broadcast %cst_196 : f32 to vector<1x128xf32>
    %902 = arith.maximumf %900, %901 : vector<1x128xf32>
    %903 = vector.broadcast %91 : f32 to vector<1x128xf32>
    %904 = arith.mulf %874, %903 : vector<1x128xf32>
    %905 = vector.broadcast %92 : f32 to vector<1x128xf32>
    %906 = arith.mulf %875, %905 : vector<1x128xf32>
    %907 = arith.addf %904, %906 : vector<1x128xf32>
    %908 = vector.broadcast %96 : f32 to vector<1x128xf32>
    %909 = arith.addf %907, %908 : vector<1x128xf32>
    %cst_197 = arith.constant 0.000000e+00 : f32
    %910 = vector.broadcast %cst_197 : f32 to vector<1x128xf32>
    %911 = arith.maximumf %909, %910 : vector<1x128xf32>
    %912 = vector.broadcast %97 : f32 to vector<1x128xf32>
    %913 = arith.mulf %884, %912 : vector<1x128xf32>
    %914 = vector.broadcast %105 : f32 to vector<1x128xf32>
    %915 = arith.addf %913, %914 : vector<1x128xf32>
    %916 = vector.broadcast %98 : f32 to vector<1x128xf32>
    %917 = arith.mulf %893, %916 : vector<1x128xf32>
    %918 = arith.addf %915, %917 : vector<1x128xf32>
    %919 = vector.broadcast %99 : f32 to vector<1x128xf32>
    %920 = arith.mulf %902, %919 : vector<1x128xf32>
    %921 = arith.addf %918, %920 : vector<1x128xf32>
    %922 = vector.broadcast %100 : f32 to vector<1x128xf32>
    %923 = arith.mulf %911, %922 : vector<1x128xf32>
    %924 = arith.addf %921, %923 : vector<1x128xf32>
    %cst_198 = arith.constant 0.000000e+00 : f32
    %925 = vector.broadcast %cst_198 : f32 to vector<1x128xf32>
    %926 = arith.maximumf %924, %925 : vector<1x128xf32>
    %927 = vector.broadcast %101 : f32 to vector<1x128xf32>
    %928 = arith.mulf %884, %927 : vector<1x128xf32>
    %929 = vector.broadcast %106 : f32 to vector<1x128xf32>
    %930 = arith.addf %928, %929 : vector<1x128xf32>
    %931 = vector.broadcast %102 : f32 to vector<1x128xf32>
    %932 = arith.mulf %893, %931 : vector<1x128xf32>
    %933 = arith.addf %930, %932 : vector<1x128xf32>
    %934 = vector.broadcast %103 : f32 to vector<1x128xf32>
    %935 = arith.mulf %902, %934 : vector<1x128xf32>
    %936 = arith.addf %933, %935 : vector<1x128xf32>
    %937 = vector.broadcast %104 : f32 to vector<1x128xf32>
    %938 = arith.mulf %911, %937 : vector<1x128xf32>
    %939 = arith.addf %936, %938 : vector<1x128xf32>
    %cst_199 = arith.constant 0.000000e+00 : f32
    %940 = vector.broadcast %cst_199 : f32 to vector<1x128xf32>
    %941 = arith.maximumf %939, %940 : vector<1x128xf32>
    %942 = vector.broadcast %107 : f32 to vector<1x128xf32>
    %943 = arith.mulf %926, %942 : vector<1x128xf32>
    %944 = vector.broadcast %108 : f32 to vector<1x128xf32>
    %945 = arith.mulf %941, %944 : vector<1x128xf32>
    %946 = arith.addf %943, %945 : vector<1x128xf32>
    %947 = vector.broadcast %115 : f32 to vector<1x128xf32>
    %948 = arith.addf %946, %947 : vector<1x128xf32>
    %c1_200 = arith.constant 1 : index
    %c0_201 = arith.constant 0 : index
    %c0_202 = arith.constant 0 : index
    %949 = vector.load %arg5[%c1_200, %c0_201, %c0_202] : memref<4x4x128xf32, #tpu.memory_space<vmem>>, vector<1x1x128xf32>
    %950 = vector.shape_cast %949 : vector<1x1x128xf32> to vector<1x128xf32>
    %951 = vector.shape_cast %948 : vector<1x128xf32> to vector<1x1x128xf32>
    tpu.vector_store %arg5[%c1_200, %c0_201, %c0_202], %951 {strides = array<i32>} : memref<4x4x128xf32, #tpu.memory_space<vmem>>, vector<1x1x128xf32>,
    %952 = vector.broadcast %109 : f32 to vector<1x128xf32>
    %953 = arith.mulf %926, %952 : vector<1x128xf32>
    %954 = vector.broadcast %110 : f32 to vector<1x128xf32>
    %955 = arith.mulf %941, %954 : vector<1x128xf32>
    %956 = arith.addf %953, %955 : vector<1x128xf32>
    %957 = vector.broadcast %116 : f32 to vector<1x128xf32>
    %958 = arith.addf %956, %957 : vector<1x128xf32>
    %c1_203 = arith.constant 1 : index
    %c1_204 = arith.constant 1 : index
    %c0_205 = arith.constant 0 : index
    %959 = vector.load %arg5[%c1_203, %c1_204, %c0_205] : memref<4x4x128xf32, #tpu.memory_space<vmem>>, vector<1x1x128xf32>
    %960 = vector.shape_cast %959 : vector<1x1x128xf32> to vector<1x128xf32>
    %961 = vector.shape_cast %958 : vector<1x128xf32> to vector<1x1x128xf32>
    tpu.vector_store %arg5[%c1_203, %c1_204, %c0_205], %961 {strides = array<i32>} : memref<4x4x128xf32, #tpu.memory_space<vmem>>, vector<1x1x128xf32>,
    %962 = vector.broadcast %111 : f32 to vector<1x128xf32>
    %963 = arith.mulf %926, %962 : vector<1x128xf32>
    %964 = vector.broadcast %112 : f32 to vector<1x128xf32>
    %965 = arith.mulf %941, %964 : vector<1x128xf32>
    %966 = arith.addf %963, %965 : vector<1x128xf32>
    %967 = vector.broadcast %117 : f32 to vector<1x128xf32>
    %968 = arith.addf %966, %967 : vector<1x128xf32>
    %c1_206 = arith.constant 1 : index
    %c2_207 = arith.constant 2 : index
    %c0_208 = arith.constant 0 : index
    %969 = vector.load %arg5[%c1_206, %c2_207, %c0_208] : memref<4x4x128xf32, #tpu.memory_space<vmem>>, vector<1x1x128xf32>
    %970 = vector.shape_cast %969 : vector<1x1x128xf32> to vector<1x128xf32>
    %971 = vector.shape_cast %968 : vector<1x128xf32> to vector<1x1x128xf32>
    tpu.vector_store %arg5[%c1_206, %c2_207, %c0_208], %971 {strides = array<i32>} : memref<4x4x128xf32, #tpu.memory_space<vmem>>, vector<1x1x128xf32>,
    %972 = vector.broadcast %113 : f32 to vector<1x128xf32>
    %973 = arith.mulf %926, %972 : vector<1x128xf32>
    %974 = vector.broadcast %114 : f32 to vector<1x128xf32>
    %975 = arith.mulf %941, %974 : vector<1x128xf32>
    %976 = arith.addf %973, %975 : vector<1x128xf32>
    %977 = vector.broadcast %118 : f32 to vector<1x128xf32>
    %978 = arith.addf %976, %977 : vector<1x128xf32>
    %c1_209 = arith.constant 1 : index
    %c3_210 = arith.constant 3 : index
    %c0_211 = arith.constant 0 : index
    %979 = vector.load %arg5[%c1_209, %c3_210, %c0_211] : memref<4x4x128xf32, #tpu.memory_space<vmem>>, vector<1x1x128xf32>
    %980 = vector.shape_cast %979 : vector<1x1x128xf32> to vector<1x128xf32>
    %981 = vector.shape_cast %978 : vector<1x128xf32> to vector<1x1x128xf32>
    tpu.vector_store %arg5[%c1_209, %c3_210, %c0_211], %981 {strides = array<i32>} : memref<4x4x128xf32, #tpu.memory_space<vmem>>, vector<1x1x128xf32>,
    %982 = arith.extui %554 : i1 to i32
    %c0_i32_212 = arith.constant 0 : i32
    %983 = arith.cmpi ne, %982, %c0_i32_212 : i32
    scf.if %983 {
      %c0_425 = arith.constant 0 : index
      %c0_426 = arith.constant 0 : index
      %1848 = vector.load %arg6[%c0_425, %c0_426] : memref<8x128xf32, #tpu.memory_space<vmem>>, vector<1x128xf32>
      tpu.vector_store %arg6[%c0_425, %c0_426], %726 {strides = array<i32>} : memref<8x128xf32, #tpu.memory_space<vmem>>, vector<1x128xf32>,
      %c1_427 = arith.constant 1 : index
      %c0_428 = arith.constant 0 : index
      %1849 = vector.load %arg6[%c1_427, %c0_428] : memref<8x128xf32, #tpu.memory_space<vmem>>, vector<1x128xf32>
      tpu.vector_store %arg6[%c1_427, %c0_428], %724 {strides = array<i32>} : memref<8x128xf32, #tpu.memory_space<vmem>>, vector<1x128xf32>,
      %c2_429 = arith.constant 2 : index
      %c0_430 = arith.constant 0 : index
      %1850 = vector.load %arg6[%c2_429, %c0_430] : memref<8x128xf32, #tpu.memory_space<vmem>>, vector<2x128xf32>
      tpu.vector_store %arg6[%c2_429, %c0_430], %873 {strides = array<i32>} : memref<8x128xf32, #tpu.memory_space<vmem>>, vector<2x128xf32>,
      %c4_431 = arith.constant 4 : index
      %c0_432 = arith.constant 0 : index
      %1851 = vector.load %arg6[%c4_431, %c0_432] : memref<8x128xf32, #tpu.memory_space<vmem>>, vector<2x128xf32>
      tpu.vector_store %arg6[%c4_431, %c0_432], %871 {strides = array<i32>} : memref<8x128xf32, #tpu.memory_space<vmem>>, vector<2x128xf32>,
    } else {
    }
    %c4_i32_213 = arith.constant 4 : i32
    %984 = arith.muli %arg0, %c4_i32_213 : i32
    %c2_i32 = arith.constant 2 : i32
    %985 = arith.addi %984, %c2_i32 : i32
    %986 = arith.cmpi slt, %985, %119 : i32
    %c2_214 = arith.constant 2 : index
    %c0_215 = arith.constant 0 : index
    %c0_216 = arith.constant 0 : index
    %987 = vector.load %arg4[%c2_214, %c0_215, %c0_216] : memref<4x16x128xf32, #tpu.memory_space<vmem>>, vector<1x1x128xf32>
    %988 = vector.shape_cast %987 : vector<1x1x128xf32> to vector<1x128xf32>
    %c2_217 = arith.constant 2 : index
    %c1_218 = arith.constant 1 : index
    %c0_219 = arith.constant 0 : index
    %989 = vector.load %arg4[%c2_217, %c1_218, %c0_219] : memref<4x16x128xf32, #tpu.memory_space<vmem>>, vector<1x1x128xf32>
    %990 = vector.shape_cast %989 : vector<1x1x128xf32> to vector<1x128xf32>
    %c2_220 = arith.constant 2 : index
    %c2_221 = arith.constant 2 : index
    %c0_222 = arith.constant 0 : index
    %991 = vector.load %arg4[%c2_220, %c2_221, %c0_222] : memref<4x16x128xf32, #tpu.memory_space<vmem>>, vector<1x1x128xf32>
    %992 = vector.shape_cast %991 : vector<1x1x128xf32> to vector<1x128xf32>
    %c2_223 = arith.constant 2 : index
    %c3_224 = arith.constant 3 : index
    %c0_225 = arith.constant 0 : index
    %993 = vector.load %arg4[%c2_223, %c3_224, %c0_225] : memref<4x16x128xf32, #tpu.memory_space<vmem>>, vector<1x1x128xf32>
    %994 = vector.shape_cast %993 : vector<1x1x128xf32> to vector<1x128xf32>
    %c2_226 = arith.constant 2 : index
    %c4_227 = arith.constant 4 : index
    %c0_228 = arith.constant 0 : index
    %995 = vector.load %arg4[%c2_226, %c4_227, %c0_228] : memref<4x16x128xf32, #tpu.memory_space<vmem>>, vector<1x1x128xf32>
    %996 = vector.shape_cast %995 : vector<1x1x128xf32> to vector<1x128xf32>
    %c2_229 = arith.constant 2 : index
    %c5_230 = arith.constant 5 : index
    %c0_231 = arith.constant 0 : index
    %997 = vector.load %arg4[%c2_229, %c5_230, %c0_231] : memref<4x16x128xf32, #tpu.memory_space<vmem>>, vector<1x1x128xf32>
    %998 = vector.shape_cast %997 : vector<1x1x128xf32> to vector<1x128xf32>
    %c2_232 = arith.constant 2 : index
    %c6_233 = arith.constant 6 : index
    %c0_234 = arith.constant 0 : index
    %999 = vector.load %arg4[%c2_232, %c6_233, %c0_234] : memref<4x16x128xf32, #tpu.memory_space<vmem>>, vector<1x1x128xf32>
    %1000 = vector.shape_cast %999 : vector<1x1x128xf32> to vector<1x128xf32>
    %c2_235 = arith.constant 2 : index
    %c7_236 = arith.constant 7 : index
    %c0_237 = arith.constant 0 : index
    %1001 = vector.load %arg4[%c2_235, %c7_236, %c0_237] : memref<4x16x128xf32, #tpu.memory_space<vmem>>, vector<1x1x128xf32>
    %1002 = vector.shape_cast %1001 : vector<1x1x128xf32> to vector<1x128xf32>
    %c2_238 = arith.constant 2 : index
    %c8_239 = arith.constant 8 : index
    %c0_240 = arith.constant 0 : index
    %1003 = vector.load %arg4[%c2_238, %c8_239, %c0_240] : memref<4x16x128xf32, #tpu.memory_space<vmem>>, vector<1x1x128xf32>
    %1004 = vector.shape_cast %1003 : vector<1x1x128xf32> to vector<1x128xf32>
    %c0_241 = arith.constant 0 : index
    %c0_242 = arith.constant 0 : index
    %1005 = vector.load %arg6[%c0_241, %c0_242] : memref<8x128xf32, #tpu.memory_space<vmem>>, vector<1x128xf32>
    %c1_243 = arith.constant 1 : index
    %c0_244 = arith.constant 0 : index
    %1006 = vector.load %arg6[%c1_243, %c0_244] : memref<8x128xf32, #tpu.memory_space<vmem>>, vector<1x128xf32>
    %c2_245 = arith.constant 2 : index
    %c0_246 = arith.constant 0 : index
    %1007 = vector.load %arg6[%c2_245, %c0_246] : memref<8x128xf32, #tpu.memory_space<vmem>>, vector<1x128xf32>
    %c3_247 = arith.constant 3 : index
    %c0_248 = arith.constant 0 : index
    %1008 = vector.load %arg6[%c3_247, %c0_248] : memref<8x128xf32, #tpu.memory_space<vmem>>, vector<1x128xf32>
    %c4_249 = arith.constant 4 : index
    %c0_250 = arith.constant 0 : index
    %1009 = vector.load %arg6[%c4_249, %c0_250] : memref<8x128xf32, #tpu.memory_space<vmem>>, vector<2x128xf32>
    %1010 = vector.broadcast %3 : f32 to vector<1x128xf32>
    %1011 = arith.mulf %1004, %1010 : vector<1x128xf32>
    %1012 = vector.broadcast %4 : f32 to vector<1x128xf32>
    %1013 = arith.addf %1011, %1012 : vector<1x128xf32>
    %1014 = vector.broadcast %5 : f32 to vector<1x128xf32>
    %1015 = arith.mulf %988, %1014 : vector<1x128xf32>
    %1016 = vector.broadcast %6 : f32 to vector<1x128xf32>
    %1017 = arith.mulf %990, %1016 : vector<1x128xf32>
    %1018 = arith.addf %1015, %1017 : vector<1x128xf32>
    %1019 = vector.broadcast %7 : f32 to vector<1x128xf32>
    %1020 = arith.mulf %992, %1019 : vector<1x128xf32>
    %1021 = arith.addf %1018, %1020 : vector<1x128xf32>
    %1022 = vector.broadcast %8 : f32 to vector<1x128xf32>
    %1023 = arith.mulf %994, %1022 : vector<1x128xf32>
    %1024 = arith.addf %1021, %1023 : vector<1x128xf32>
    %1025 = vector.broadcast %9 : f32 to vector<1x128xf32>
    %1026 = arith.mulf %996, %1025 : vector<1x128xf32>
    %1027 = arith.addf %1024, %1026 : vector<1x128xf32>
    %1028 = vector.broadcast %10 : f32 to vector<1x128xf32>
    %1029 = arith.mulf %998, %1028 : vector<1x128xf32>
    %1030 = arith.addf %1027, %1029 : vector<1x128xf32>
    %1031 = vector.broadcast %11 : f32 to vector<1x128xf32>
    %1032 = arith.mulf %1000, %1031 : vector<1x128xf32>
    %1033 = arith.addf %1030, %1032 : vector<1x128xf32>
    %1034 = vector.broadcast %12 : f32 to vector<1x128xf32>
    %1035 = arith.mulf %1002, %1034 : vector<1x128xf32>
    %1036 = arith.addf %1033, %1035 : vector<1x128xf32>
    %1037 = vector.broadcast %37 : f32 to vector<1x128xf32>
    %1038 = arith.mulf %1005, %1037 : vector<1x128xf32>
    %1039 = arith.addf %1036, %1038 : vector<1x128xf32>
    %1040 = vector.broadcast %41 : f32 to vector<1x128xf32>
    %1041 = arith.addf %1039, %1040 : vector<1x128xf32>
    %cst_251 = arith.constant 5.000000e-01 : f32
    %1042 = vector.broadcast %cst_251 : f32 to vector<1x128xf32>
    %1043 = arith.mulf %1041, %1042 : vector<1x128xf32>
    %c0_252 = arith.constant 0 : index
    %c0_253 = arith.constant 0 : index
    %1044 = vector.load %arg7[%c0_252, %c0_253] : memref<8x128xf32, #tpu.memory_space<vmem>>, vector<1x128xf32>
    tpu.vector_store %arg7[%c0_252, %c0_253], %1043 {strides = array<i32>} : memref<8x128xf32, #tpu.memory_space<vmem>>, vector<1x128xf32>,
    %1045 = vector.broadcast %13 : f32 to vector<1x128xf32>
    %1046 = arith.mulf %988, %1045 : vector<1x128xf32>
    %1047 = vector.broadcast %14 : f32 to vector<1x128xf32>
    %1048 = arith.mulf %990, %1047 : vector<1x128xf32>
    %1049 = arith.addf %1046, %1048 : vector<1x128xf32>
    %1050 = vector.broadcast %15 : f32 to vector<1x128xf32>
    %1051 = arith.mulf %992, %1050 : vector<1x128xf32>
    %1052 = arith.addf %1049, %1051 : vector<1x128xf32>
    %1053 = vector.broadcast %16 : f32 to vector<1x128xf32>
    %1054 = arith.mulf %994, %1053 : vector<1x128xf32>
    %1055 = arith.addf %1052, %1054 : vector<1x128xf32>
    %1056 = vector.broadcast %17 : f32 to vector<1x128xf32>
    %1057 = arith.mulf %996, %1056 : vector<1x128xf32>
    %1058 = arith.addf %1055, %1057 : vector<1x128xf32>
    %1059 = vector.broadcast %18 : f32 to vector<1x128xf32>
    %1060 = arith.mulf %998, %1059 : vector<1x128xf32>
    %1061 = arith.addf %1058, %1060 : vector<1x128xf32>
    %1062 = vector.broadcast %19 : f32 to vector<1x128xf32>
    %1063 = arith.mulf %1000, %1062 : vector<1x128xf32>
    %1064 = arith.addf %1061, %1063 : vector<1x128xf32>
    %1065 = vector.broadcast %20 : f32 to vector<1x128xf32>
    %1066 = arith.mulf %1002, %1065 : vector<1x128xf32>
    %1067 = arith.addf %1064, %1066 : vector<1x128xf32>
    %1068 = vector.broadcast %38 : f32 to vector<1x128xf32>
    %1069 = arith.mulf %1005, %1068 : vector<1x128xf32>
    %1070 = arith.addf %1067, %1069 : vector<1x128xf32>
    %1071 = vector.broadcast %42 : f32 to vector<1x128xf32>
    %1072 = arith.addf %1070, %1071 : vector<1x128xf32>
    %cst_254 = arith.constant 5.000000e-01 : f32
    %1073 = vector.broadcast %cst_254 : f32 to vector<1x128xf32>
    %1074 = arith.mulf %1072, %1073 : vector<1x128xf32>
    %c1_255 = arith.constant 1 : index
    %c0_256 = arith.constant 0 : index
    %1075 = vector.load %arg7[%c1_255, %c0_256] : memref<8x128xf32, #tpu.memory_space<vmem>>, vector<1x128xf32>
    tpu.vector_store %arg7[%c1_255, %c0_256], %1074 {strides = array<i32>} : memref<8x128xf32, #tpu.memory_space<vmem>>, vector<1x128xf32>,
    %1076 = vector.broadcast %21 : f32 to vector<1x128xf32>
    %1077 = arith.mulf %988, %1076 : vector<1x128xf32>
    %1078 = vector.broadcast %22 : f32 to vector<1x128xf32>
    %1079 = arith.mulf %990, %1078 : vector<1x128xf32>
    %1080 = arith.addf %1077, %1079 : vector<1x128xf32>
    %1081 = vector.broadcast %23 : f32 to vector<1x128xf32>
    %1082 = arith.mulf %992, %1081 : vector<1x128xf32>
    %1083 = arith.addf %1080, %1082 : vector<1x128xf32>
    %1084 = vector.broadcast %24 : f32 to vector<1x128xf32>
    %1085 = arith.mulf %994, %1084 : vector<1x128xf32>
    %1086 = arith.addf %1083, %1085 : vector<1x128xf32>
    %1087 = vector.broadcast %25 : f32 to vector<1x128xf32>
    %1088 = arith.mulf %996, %1087 : vector<1x128xf32>
    %1089 = arith.addf %1086, %1088 : vector<1x128xf32>
    %1090 = vector.broadcast %26 : f32 to vector<1x128xf32>
    %1091 = arith.mulf %998, %1090 : vector<1x128xf32>
    %1092 = arith.addf %1089, %1091 : vector<1x128xf32>
    %1093 = vector.broadcast %27 : f32 to vector<1x128xf32>
    %1094 = arith.mulf %1000, %1093 : vector<1x128xf32>
    %1095 = arith.addf %1092, %1094 : vector<1x128xf32>
    %1096 = vector.broadcast %28 : f32 to vector<1x128xf32>
    %1097 = arith.mulf %1002, %1096 : vector<1x128xf32>
    %1098 = arith.addf %1095, %1097 : vector<1x128xf32>
    %1099 = vector.broadcast %39 : f32 to vector<1x128xf32>
    %1100 = arith.mulf %1005, %1099 : vector<1x128xf32>
    %1101 = arith.addf %1098, %1100 : vector<1x128xf32>
    %1102 = vector.broadcast %43 : f32 to vector<1x128xf32>
    %1103 = arith.addf %1101, %1102 : vector<1x128xf32>
    %c2_257 = arith.constant 2 : index
    %c0_258 = arith.constant 0 : index
    %1104 = vector.load %arg7[%c2_257, %c0_258] : memref<8x128xf32, #tpu.memory_space<vmem>>, vector<1x128xf32>
    tpu.vector_store %arg7[%c2_257, %c0_258], %1103 {strides = array<i32>} : memref<8x128xf32, #tpu.memory_space<vmem>>, vector<1x128xf32>,
    %1105 = vector.broadcast %29 : f32 to vector<1x128xf32>
    %1106 = arith.mulf %988, %1105 : vector<1x128xf32>
    %1107 = vector.broadcast %30 : f32 to vector<1x128xf32>
    %1108 = arith.mulf %990, %1107 : vector<1x128xf32>
    %1109 = arith.addf %1106, %1108 : vector<1x128xf32>
    %1110 = vector.broadcast %31 : f32 to vector<1x128xf32>
    %1111 = arith.mulf %992, %1110 : vector<1x128xf32>
    %1112 = arith.addf %1109, %1111 : vector<1x128xf32>
    %1113 = vector.broadcast %32 : f32 to vector<1x128xf32>
    %1114 = arith.mulf %994, %1113 : vector<1x128xf32>
    %1115 = arith.addf %1112, %1114 : vector<1x128xf32>
    %1116 = vector.broadcast %33 : f32 to vector<1x128xf32>
    %1117 = arith.mulf %996, %1116 : vector<1x128xf32>
    %1118 = arith.addf %1115, %1117 : vector<1x128xf32>
    %1119 = vector.broadcast %34 : f32 to vector<1x128xf32>
    %1120 = arith.mulf %998, %1119 : vector<1x128xf32>
    %1121 = arith.addf %1118, %1120 : vector<1x128xf32>
    %1122 = vector.broadcast %35 : f32 to vector<1x128xf32>
    %1123 = arith.mulf %1000, %1122 : vector<1x128xf32>
    %1124 = arith.addf %1121, %1123 : vector<1x128xf32>
    %1125 = vector.broadcast %36 : f32 to vector<1x128xf32>
    %1126 = arith.mulf %1002, %1125 : vector<1x128xf32>
    %1127 = arith.addf %1124, %1126 : vector<1x128xf32>
    %1128 = vector.broadcast %40 : f32 to vector<1x128xf32>
    %1129 = arith.mulf %1005, %1128 : vector<1x128xf32>
    %1130 = arith.addf %1127, %1129 : vector<1x128xf32>
    %1131 = vector.broadcast %44 : f32 to vector<1x128xf32>
    %1132 = arith.addf %1130, %1131 : vector<1x128xf32>
    %cst_259 = arith.constant 5.000000e-01 : f32
    %1133 = vector.broadcast %cst_259 : f32 to vector<1x128xf32>
    %1134 = arith.mulf %1132, %1133 : vector<1x128xf32>
    %c3_260 = arith.constant 3 : index
    %c0_261 = arith.constant 0 : index
    %1135 = vector.load %arg7[%c3_260, %c0_261] : memref<8x128xf32, #tpu.memory_space<vmem>>, vector<1x128xf32>
    tpu.vector_store %arg7[%c3_260, %c0_261], %1134 {strides = array<i32>} : memref<8x128xf32, #tpu.memory_space<vmem>>, vector<1x128xf32>,
    %c0_262 = arith.constant 0 : index
    %c0_263 = arith.constant 0 : index
    %1136 = vector.load %arg7[%c0_262, %c0_263] : memref<8x128xf32, #tpu.memory_space<vmem>>, vector<4x128xf32>
    %1137 = math.tanh %1136 : vector<4x128xf32>
    %1138 = vector.extract_strided_slice %1137 {offsets = [0, 0], sizes = [1, 128], strides = [1, 1]} : vector<4x128xf32> to vector<1x128xf32>
    %cst_264 = arith.constant 5.000000e-01 : f32
    %1139 = vector.broadcast %cst_264 : f32 to vector<1x128xf32>
    %1140 = arith.mulf %1139, %1138 : vector<1x128xf32>
    %cst_265 = arith.constant 5.000000e-01 : f32
    %1141 = vector.broadcast %cst_265 : f32 to vector<1x128xf32>
    %1142 = arith.addf %1140, %1141 : vector<1x128xf32>
    %1143 = vector.extract_strided_slice %1137 {offsets = [1, 0], sizes = [1, 128], strides = [1, 1]} : vector<4x128xf32> to vector<1x128xf32>
    %cst_266 = arith.constant 5.000000e-01 : f32
    %1144 = vector.broadcast %cst_266 : f32 to vector<1x128xf32>
    %1145 = arith.mulf %1144, %1143 : vector<1x128xf32>
    %cst_267 = arith.constant 5.000000e-01 : f32
    %1146 = vector.broadcast %cst_267 : f32 to vector<1x128xf32>
    %1147 = arith.addf %1145, %1146 : vector<1x128xf32>
    %1148 = vector.extract_strided_slice %1137 {offsets = [2, 0], sizes = [1, 128], strides = [1, 1]} : vector<4x128xf32> to vector<1x128xf32>
    %1149 = vector.extract_strided_slice %1137 {offsets = [3, 0], sizes = [1, 128], strides = [1, 1]} : vector<4x128xf32> to vector<1x128xf32>
    %cst_268 = arith.constant 5.000000e-01 : f32
    %1150 = vector.broadcast %cst_268 : f32 to vector<1x128xf32>
    %1151 = arith.mulf %1150, %1149 : vector<1x128xf32>
    %cst_269 = arith.constant 5.000000e-01 : f32
    %1152 = vector.broadcast %cst_269 : f32 to vector<1x128xf32>
    %1153 = arith.addf %1151, %1152 : vector<1x128xf32>
    %1154 = arith.mulf %1147, %1006 : vector<1x128xf32>
    %1155 = arith.mulf %1142, %1148 : vector<1x128xf32>
    %1156 = arith.addf %1154, %1155 : vector<1x128xf32>
    %1157 = math.tanh %1156 : vector<1x128xf32>
    %1158 = arith.mulf %1153, %1157 : vector<1x128xf32>
    %1159 = vector.broadcast %45 : f32 to vector<1x128xf32>
    %1160 = arith.mulf %1013, %1159 : vector<1x128xf32>
    %1161 = vector.broadcast %46 : f32 to vector<1x128xf32>
    %1162 = arith.mulf %1158, %1161 : vector<1x128xf32>
    %1163 = arith.addf %1160, %1162 : vector<1x128xf32>
    %1164 = vector.broadcast %61 : f32 to vector<1x128xf32>
    %1165 = arith.mulf %1007, %1164 : vector<1x128xf32>
    %1166 = arith.addf %1163, %1165 : vector<1x128xf32>
    %1167 = vector.broadcast %62 : f32 to vector<1x128xf32>
    %1168 = arith.mulf %1008, %1167 : vector<1x128xf32>
    %1169 = arith.addf %1166, %1168 : vector<1x128xf32>
    %1170 = vector.broadcast %77 : f32 to vector<1x128xf32>
    %1171 = arith.addf %1169, %1170 : vector<1x128xf32>
    %cst_270 = arith.constant 5.000000e-01 : f32
    %1172 = vector.broadcast %cst_270 : f32 to vector<1x128xf32>
    %1173 = arith.mulf %1171, %1172 : vector<1x128xf32>
    %c0_271 = arith.constant 0 : index
    %c0_272 = arith.constant 0 : index
    %1174 = vector.load %arg7[%c0_271, %c0_272] : memref<8x128xf32, #tpu.memory_space<vmem>>, vector<1x128xf32>
    tpu.vector_store %arg7[%c0_271, %c0_272], %1173 {strides = array<i32>} : memref<8x128xf32, #tpu.memory_space<vmem>>, vector<1x128xf32>,
    %1175 = vector.broadcast %47 : f32 to vector<1x128xf32>
    %1176 = arith.mulf %1013, %1175 : vector<1x128xf32>
    %1177 = vector.broadcast %48 : f32 to vector<1x128xf32>
    %1178 = arith.mulf %1158, %1177 : vector<1x128xf32>
    %1179 = arith.addf %1176, %1178 : vector<1x128xf32>
    %1180 = vector.broadcast %63 : f32 to vector<1x128xf32>
    %1181 = arith.mulf %1007, %1180 : vector<1x128xf32>
    %1182 = arith.addf %1179, %1181 : vector<1x128xf32>
    %1183 = vector.broadcast %64 : f32 to vector<1x128xf32>
    %1184 = arith.mulf %1008, %1183 : vector<1x128xf32>
    %1185 = arith.addf %1182, %1184 : vector<1x128xf32>
    %1186 = vector.broadcast %78 : f32 to vector<1x128xf32>
    %1187 = arith.addf %1185, %1186 : vector<1x128xf32>
    %cst_273 = arith.constant 5.000000e-01 : f32
    %1188 = vector.broadcast %cst_273 : f32 to vector<1x128xf32>
    %1189 = arith.mulf %1187, %1188 : vector<1x128xf32>
    %c1_274 = arith.constant 1 : index
    %c0_275 = arith.constant 0 : index
    %1190 = vector.load %arg7[%c1_274, %c0_275] : memref<8x128xf32, #tpu.memory_space<vmem>>, vector<1x128xf32>
    tpu.vector_store %arg7[%c1_274, %c0_275], %1189 {strides = array<i32>} : memref<8x128xf32, #tpu.memory_space<vmem>>, vector<1x128xf32>,
    %1191 = vector.broadcast %49 : f32 to vector<1x128xf32>
    %1192 = arith.mulf %1013, %1191 : vector<1x128xf32>
    %1193 = vector.broadcast %50 : f32 to vector<1x128xf32>
    %1194 = arith.mulf %1158, %1193 : vector<1x128xf32>
    %1195 = arith.addf %1192, %1194 : vector<1x128xf32>
    %1196 = vector.broadcast %65 : f32 to vector<1x128xf32>
    %1197 = arith.mulf %1007, %1196 : vector<1x128xf32>
    %1198 = arith.addf %1195, %1197 : vector<1x128xf32>
    %1199 = vector.broadcast %66 : f32 to vector<1x128xf32>
    %1200 = arith.mulf %1008, %1199 : vector<1x128xf32>
    %1201 = arith.addf %1198, %1200 : vector<1x128xf32>
    %1202 = vector.broadcast %79 : f32 to vector<1x128xf32>
    %1203 = arith.addf %1201, %1202 : vector<1x128xf32>
    %cst_276 = arith.constant 5.000000e-01 : f32
    %1204 = vector.broadcast %cst_276 : f32 to vector<1x128xf32>
    %1205 = arith.mulf %1203, %1204 : vector<1x128xf32>
    %c2_277 = arith.constant 2 : index
    %c0_278 = arith.constant 0 : index
    %1206 = vector.load %arg7[%c2_277, %c0_278] : memref<8x128xf32, #tpu.memory_space<vmem>>, vector<1x128xf32>
    tpu.vector_store %arg7[%c2_277, %c0_278], %1205 {strides = array<i32>} : memref<8x128xf32, #tpu.memory_space<vmem>>, vector<1x128xf32>,
    %1207 = vector.broadcast %51 : f32 to vector<1x128xf32>
    %1208 = arith.mulf %1013, %1207 : vector<1x128xf32>
    %1209 = vector.broadcast %52 : f32 to vector<1x128xf32>
    %1210 = arith.mulf %1158, %1209 : vector<1x128xf32>
    %1211 = arith.addf %1208, %1210 : vector<1x128xf32>
    %1212 = vector.broadcast %67 : f32 to vector<1x128xf32>
    %1213 = arith.mulf %1007, %1212 : vector<1x128xf32>
    %1214 = arith.addf %1211, %1213 : vector<1x128xf32>
    %1215 = vector.broadcast %68 : f32 to vector<1x128xf32>
    %1216 = arith.mulf %1008, %1215 : vector<1x128xf32>
    %1217 = arith.addf %1214, %1216 : vector<1x128xf32>
    %1218 = vector.broadcast %80 : f32 to vector<1x128xf32>
    %1219 = arith.addf %1217, %1218 : vector<1x128xf32>
    %cst_279 = arith.constant 5.000000e-01 : f32
    %1220 = vector.broadcast %cst_279 : f32 to vector<1x128xf32>
    %1221 = arith.mulf %1219, %1220 : vector<1x128xf32>
    %c3_280 = arith.constant 3 : index
    %c0_281 = arith.constant 0 : index
    %1222 = vector.load %arg7[%c3_280, %c0_281] : memref<8x128xf32, #tpu.memory_space<vmem>>, vector<1x128xf32>
    tpu.vector_store %arg7[%c3_280, %c0_281], %1221 {strides = array<i32>} : memref<8x128xf32, #tpu.memory_space<vmem>>, vector<1x128xf32>,
    %1223 = vector.broadcast %53 : f32 to vector<1x128xf32>
    %1224 = arith.mulf %1013, %1223 : vector<1x128xf32>
    %1225 = vector.broadcast %54 : f32 to vector<1x128xf32>
    %1226 = arith.mulf %1158, %1225 : vector<1x128xf32>
    %1227 = arith.addf %1224, %1226 : vector<1x128xf32>
    %1228 = vector.broadcast %69 : f32 to vector<1x128xf32>
    %1229 = arith.mulf %1007, %1228 : vector<1x128xf32>
    %1230 = arith.addf %1227, %1229 : vector<1x128xf32>
    %1231 = vector.broadcast %70 : f32 to vector<1x128xf32>
    %1232 = arith.mulf %1008, %1231 : vector<1x128xf32>
    %1233 = arith.addf %1230, %1232 : vector<1x128xf32>
    %1234 = vector.broadcast %81 : f32 to vector<1x128xf32>
    %1235 = arith.addf %1233, %1234 : vector<1x128xf32>
    %c4_282 = arith.constant 4 : index
    %c0_283 = arith.constant 0 : index
    %1236 = vector.load %arg7[%c4_282, %c0_283] : memref<8x128xf32, #tpu.memory_space<vmem>>, vector<1x128xf32>
    tpu.vector_store %arg7[%c4_282, %c0_283], %1235 {strides = array<i32>} : memref<8x128xf32, #tpu.memory_space<vmem>>, vector<1x128xf32>,
    %1237 = vector.broadcast %55 : f32 to vector<1x128xf32>
    %1238 = arith.mulf %1013, %1237 : vector<1x128xf32>
    %1239 = vector.broadcast %56 : f32 to vector<1x128xf32>
    %1240 = arith.mulf %1158, %1239 : vector<1x128xf32>
    %1241 = arith.addf %1238, %1240 : vector<1x128xf32>
    %1242 = vector.broadcast %71 : f32 to vector<1x128xf32>
    %1243 = arith.mulf %1007, %1242 : vector<1x128xf32>
    %1244 = arith.addf %1241, %1243 : vector<1x128xf32>
    %1245 = vector.broadcast %72 : f32 to vector<1x128xf32>
    %1246 = arith.mulf %1008, %1245 : vector<1x128xf32>
    %1247 = arith.addf %1244, %1246 : vector<1x128xf32>
    %1248 = vector.broadcast %82 : f32 to vector<1x128xf32>
    %1249 = arith.addf %1247, %1248 : vector<1x128xf32>
    %c5_284 = arith.constant 5 : index
    %c0_285 = arith.constant 0 : index
    %1250 = vector.load %arg7[%c5_284, %c0_285] : memref<8x128xf32, #tpu.memory_space<vmem>>, vector<1x128xf32>
    tpu.vector_store %arg7[%c5_284, %c0_285], %1249 {strides = array<i32>} : memref<8x128xf32, #tpu.memory_space<vmem>>, vector<1x128xf32>,
    %1251 = vector.broadcast %57 : f32 to vector<1x128xf32>
    %1252 = arith.mulf %1013, %1251 : vector<1x128xf32>
    %1253 = vector.broadcast %58 : f32 to vector<1x128xf32>
    %1254 = arith.mulf %1158, %1253 : vector<1x128xf32>
    %1255 = arith.addf %1252, %1254 : vector<1x128xf32>
    %1256 = vector.broadcast %73 : f32 to vector<1x128xf32>
    %1257 = arith.mulf %1007, %1256 : vector<1x128xf32>
    %1258 = arith.addf %1255, %1257 : vector<1x128xf32>
    %1259 = vector.broadcast %74 : f32 to vector<1x128xf32>
    %1260 = arith.mulf %1008, %1259 : vector<1x128xf32>
    %1261 = arith.addf %1258, %1260 : vector<1x128xf32>
    %1262 = vector.broadcast %83 : f32 to vector<1x128xf32>
    %1263 = arith.addf %1261, %1262 : vector<1x128xf32>
    %cst_286 = arith.constant 5.000000e-01 : f32
    %1264 = vector.broadcast %cst_286 : f32 to vector<1x128xf32>
    %1265 = arith.mulf %1263, %1264 : vector<1x128xf32>
    %c6_287 = arith.constant 6 : index
    %c0_288 = arith.constant 0 : index
    %1266 = vector.load %arg7[%c6_287, %c0_288] : memref<8x128xf32, #tpu.memory_space<vmem>>, vector<1x128xf32>
    tpu.vector_store %arg7[%c6_287, %c0_288], %1265 {strides = array<i32>} : memref<8x128xf32, #tpu.memory_space<vmem>>, vector<1x128xf32>,
    %1267 = vector.broadcast %59 : f32 to vector<1x128xf32>
    %1268 = arith.mulf %1013, %1267 : vector<1x128xf32>
    %1269 = vector.broadcast %60 : f32 to vector<1x128xf32>
    %1270 = arith.mulf %1158, %1269 : vector<1x128xf32>
    %1271 = arith.addf %1268, %1270 : vector<1x128xf32>
    %1272 = vector.broadcast %75 : f32 to vector<1x128xf32>
    %1273 = arith.mulf %1007, %1272 : vector<1x128xf32>
    %1274 = arith.addf %1271, %1273 : vector<1x128xf32>
    %1275 = vector.broadcast %76 : f32 to vector<1x128xf32>
    %1276 = arith.mulf %1008, %1275 : vector<1x128xf32>
    %1277 = arith.addf %1274, %1276 : vector<1x128xf32>
    %1278 = vector.broadcast %84 : f32 to vector<1x128xf32>
    %1279 = arith.addf %1277, %1278 : vector<1x128xf32>
    %cst_289 = arith.constant 5.000000e-01 : f32
    %1280 = vector.broadcast %cst_289 : f32 to vector<1x128xf32>
    %1281 = arith.mulf %1279, %1280 : vector<1x128xf32>
    %c7_290 = arith.constant 7 : index
    %c0_291 = arith.constant 0 : index
    %1282 = vector.load %arg7[%c7_290, %c0_291] : memref<8x128xf32, #tpu.memory_space<vmem>>, vector<1x128xf32>
    tpu.vector_store %arg7[%c7_290, %c0_291], %1281 {strides = array<i32>} : memref<8x128xf32, #tpu.memory_space<vmem>>, vector<1x128xf32>,
    %c0_292 = arith.constant 0 : index
    %c0_293 = arith.constant 0 : index
    %1283 = vector.load %arg7[%c0_292, %c0_293] : memref<8x128xf32, #tpu.memory_space<vmem>>, vector<8x128xf32>
    %1284 = math.tanh %1283 : vector<8x128xf32>
    %1285 = vector.extract_strided_slice %1284 {offsets = [0, 0], sizes = [2, 128], strides = [1, 1]} : vector<8x128xf32> to vector<2x128xf32>
    %cst_294 = arith.constant 5.000000e-01 : f32
    %1286 = vector.broadcast %cst_294 : f32 to vector<2x128xf32>
    %1287 = arith.mulf %1286, %1285 : vector<2x128xf32>
    %cst_295 = arith.constant 5.000000e-01 : f32
    %1288 = vector.broadcast %cst_295 : f32 to vector<2x128xf32>
    %1289 = arith.addf %1287, %1288 : vector<2x128xf32>
    %1290 = vector.extract_strided_slice %1284 {offsets = [2, 0], sizes = [2, 128], strides = [1, 1]} : vector<8x128xf32> to vector<2x128xf32>
    %cst_296 = arith.constant 5.000000e-01 : f32
    %1291 = vector.broadcast %cst_296 : f32 to vector<2x128xf32>
    %1292 = arith.mulf %1291, %1290 : vector<2x128xf32>
    %cst_297 = arith.constant 5.000000e-01 : f32
    %1293 = vector.broadcast %cst_297 : f32 to vector<2x128xf32>
    %1294 = arith.addf %1292, %1293 : vector<2x128xf32>
    %1295 = vector.extract_strided_slice %1284 {offsets = [4, 0], sizes = [2, 128], strides = [1, 1]} : vector<8x128xf32> to vector<2x128xf32>
    %1296 = vector.extract_strided_slice %1284 {offsets = [6, 0], sizes = [2, 128], strides = [1, 1]} : vector<8x128xf32> to vector<2x128xf32>
    %cst_298 = arith.constant 5.000000e-01 : f32
    %1297 = vector.broadcast %cst_298 : f32 to vector<2x128xf32>
    %1298 = arith.mulf %1297, %1296 : vector<2x128xf32>
    %cst_299 = arith.constant 5.000000e-01 : f32
    %1299 = vector.broadcast %cst_299 : f32 to vector<2x128xf32>
    %1300 = arith.addf %1298, %1299 : vector<2x128xf32>
    %1301 = arith.mulf %1294, %1009 : vector<2x128xf32>
    %1302 = arith.mulf %1289, %1295 : vector<2x128xf32>
    %1303 = arith.addf %1301, %1302 : vector<2x128xf32>
    %1304 = math.tanh %1303 : vector<2x128xf32>
    %1305 = arith.mulf %1300, %1304 : vector<2x128xf32>
    %1306 = vector.extract_strided_slice %1305 {offsets = [0, 0], sizes = [1, 128], strides = [1, 1]} : vector<2x128xf32> to vector<1x128xf32>
    %1307 = vector.extract_strided_slice %1305 {offsets = [1, 0], sizes = [1, 128], strides = [1, 1]} : vector<2x128xf32> to vector<1x128xf32>
    %1308 = vector.broadcast %85 : f32 to vector<1x128xf32>
    %1309 = arith.mulf %1306, %1308 : vector<1x128xf32>
    %1310 = vector.broadcast %86 : f32 to vector<1x128xf32>
    %1311 = arith.mulf %1307, %1310 : vector<1x128xf32>
    %1312 = arith.addf %1309, %1311 : vector<1x128xf32>
    %1313 = vector.broadcast %93 : f32 to vector<1x128xf32>
    %1314 = arith.addf %1312, %1313 : vector<1x128xf32>
    %cst_300 = arith.constant 0.000000e+00 : f32
    %1315 = vector.broadcast %cst_300 : f32 to vector<1x128xf32>
    %1316 = arith.maximumf %1314, %1315 : vector<1x128xf32>
    %1317 = vector.broadcast %87 : f32 to vector<1x128xf32>
    %1318 = arith.mulf %1306, %1317 : vector<1x128xf32>
    %1319 = vector.broadcast %88 : f32 to vector<1x128xf32>
    %1320 = arith.mulf %1307, %1319 : vector<1x128xf32>
    %1321 = arith.addf %1318, %1320 : vector<1x128xf32>
    %1322 = vector.broadcast %94 : f32 to vector<1x128xf32>
    %1323 = arith.addf %1321, %1322 : vector<1x128xf32>
    %cst_301 = arith.constant 0.000000e+00 : f32
    %1324 = vector.broadcast %cst_301 : f32 to vector<1x128xf32>
    %1325 = arith.maximumf %1323, %1324 : vector<1x128xf32>
    %1326 = vector.broadcast %89 : f32 to vector<1x128xf32>
    %1327 = arith.mulf %1306, %1326 : vector<1x128xf32>
    %1328 = vector.broadcast %90 : f32 to vector<1x128xf32>
    %1329 = arith.mulf %1307, %1328 : vector<1x128xf32>
    %1330 = arith.addf %1327, %1329 : vector<1x128xf32>
    %1331 = vector.broadcast %95 : f32 to vector<1x128xf32>
    %1332 = arith.addf %1330, %1331 : vector<1x128xf32>
    %cst_302 = arith.constant 0.000000e+00 : f32
    %1333 = vector.broadcast %cst_302 : f32 to vector<1x128xf32>
    %1334 = arith.maximumf %1332, %1333 : vector<1x128xf32>
    %1335 = vector.broadcast %91 : f32 to vector<1x128xf32>
    %1336 = arith.mulf %1306, %1335 : vector<1x128xf32>
    %1337 = vector.broadcast %92 : f32 to vector<1x128xf32>
    %1338 = arith.mulf %1307, %1337 : vector<1x128xf32>
    %1339 = arith.addf %1336, %1338 : vector<1x128xf32>
    %1340 = vector.broadcast %96 : f32 to vector<1x128xf32>
    %1341 = arith.addf %1339, %1340 : vector<1x128xf32>
    %cst_303 = arith.constant 0.000000e+00 : f32
    %1342 = vector.broadcast %cst_303 : f32 to vector<1x128xf32>
    %1343 = arith.maximumf %1341, %1342 : vector<1x128xf32>
    %1344 = vector.broadcast %97 : f32 to vector<1x128xf32>
    %1345 = arith.mulf %1316, %1344 : vector<1x128xf32>
    %1346 = vector.broadcast %105 : f32 to vector<1x128xf32>
    %1347 = arith.addf %1345, %1346 : vector<1x128xf32>
    %1348 = vector.broadcast %98 : f32 to vector<1x128xf32>
    %1349 = arith.mulf %1325, %1348 : vector<1x128xf32>
    %1350 = arith.addf %1347, %1349 : vector<1x128xf32>
    %1351 = vector.broadcast %99 : f32 to vector<1x128xf32>
    %1352 = arith.mulf %1334, %1351 : vector<1x128xf32>
    %1353 = arith.addf %1350, %1352 : vector<1x128xf32>
    %1354 = vector.broadcast %100 : f32 to vector<1x128xf32>
    %1355 = arith.mulf %1343, %1354 : vector<1x128xf32>
    %1356 = arith.addf %1353, %1355 : vector<1x128xf32>
    %cst_304 = arith.constant 0.000000e+00 : f32
    %1357 = vector.broadcast %cst_304 : f32 to vector<1x128xf32>
    %1358 = arith.maximumf %1356, %1357 : vector<1x128xf32>
    %1359 = vector.broadcast %101 : f32 to vector<1x128xf32>
    %1360 = arith.mulf %1316, %1359 : vector<1x128xf32>
    %1361 = vector.broadcast %106 : f32 to vector<1x128xf32>
    %1362 = arith.addf %1360, %1361 : vector<1x128xf32>
    %1363 = vector.broadcast %102 : f32 to vector<1x128xf32>
    %1364 = arith.mulf %1325, %1363 : vector<1x128xf32>
    %1365 = arith.addf %1362, %1364 : vector<1x128xf32>
    %1366 = vector.broadcast %103 : f32 to vector<1x128xf32>
    %1367 = arith.mulf %1334, %1366 : vector<1x128xf32>
    %1368 = arith.addf %1365, %1367 : vector<1x128xf32>
    %1369 = vector.broadcast %104 : f32 to vector<1x128xf32>
    %1370 = arith.mulf %1343, %1369 : vector<1x128xf32>
    %1371 = arith.addf %1368, %1370 : vector<1x128xf32>
    %cst_305 = arith.constant 0.000000e+00 : f32
    %1372 = vector.broadcast %cst_305 : f32 to vector<1x128xf32>
    %1373 = arith.maximumf %1371, %1372 : vector<1x128xf32>
    %1374 = vector.broadcast %107 : f32 to vector<1x128xf32>
    %1375 = arith.mulf %1358, %1374 : vector<1x128xf32>
    %1376 = vector.broadcast %108 : f32 to vector<1x128xf32>
    %1377 = arith.mulf %1373, %1376 : vector<1x128xf32>
    %1378 = arith.addf %1375, %1377 : vector<1x128xf32>
    %1379 = vector.broadcast %115 : f32 to vector<1x128xf32>
    %1380 = arith.addf %1378, %1379 : vector<1x128xf32>
    %c2_306 = arith.constant 2 : index
    %c0_307 = arith.constant 0 : index
    %c0_308 = arith.constant 0 : index
    %1381 = vector.load %arg5[%c2_306, %c0_307, %c0_308] : memref<4x4x128xf32, #tpu.memory_space<vmem>>, vector<1x1x128xf32>
    %1382 = vector.shape_cast %1381 : vector<1x1x128xf32> to vector<1x128xf32>
    %1383 = vector.shape_cast %1380 : vector<1x128xf32> to vector<1x1x128xf32>
    tpu.vector_store %arg5[%c2_306, %c0_307, %c0_308], %1383 {strides = array<i32>} : memref<4x4x128xf32, #tpu.memory_space<vmem>>, vector<1x1x128xf32>,
    %1384 = vector.broadcast %109 : f32 to vector<1x128xf32>
    %1385 = arith.mulf %1358, %1384 : vector<1x128xf32>
    %1386 = vector.broadcast %110 : f32 to vector<1x128xf32>
    %1387 = arith.mulf %1373, %1386 : vector<1x128xf32>
    %1388 = arith.addf %1385, %1387 : vector<1x128xf32>
    %1389 = vector.broadcast %116 : f32 to vector<1x128xf32>
    %1390 = arith.addf %1388, %1389 : vector<1x128xf32>
    %c2_309 = arith.constant 2 : index
    %c1_310 = arith.constant 1 : index
    %c0_311 = arith.constant 0 : index
    %1391 = vector.load %arg5[%c2_309, %c1_310, %c0_311] : memref<4x4x128xf32, #tpu.memory_space<vmem>>, vector<1x1x128xf32>
    %1392 = vector.shape_cast %1391 : vector<1x1x128xf32> to vector<1x128xf32>
    %1393 = vector.shape_cast %1390 : vector<1x128xf32> to vector<1x1x128xf32>
    tpu.vector_store %arg5[%c2_309, %c1_310, %c0_311], %1393 {strides = array<i32>} : memref<4x4x128xf32, #tpu.memory_space<vmem>>, vector<1x1x128xf32>,
    %1394 = vector.broadcast %111 : f32 to vector<1x128xf32>
    %1395 = arith.mulf %1358, %1394 : vector<1x128xf32>
    %1396 = vector.broadcast %112 : f32 to vector<1x128xf32>
    %1397 = arith.mulf %1373, %1396 : vector<1x128xf32>
    %1398 = arith.addf %1395, %1397 : vector<1x128xf32>
    %1399 = vector.broadcast %117 : f32 to vector<1x128xf32>
    %1400 = arith.addf %1398, %1399 : vector<1x128xf32>
    %c2_312 = arith.constant 2 : index
    %c2_313 = arith.constant 2 : index
    %c0_314 = arith.constant 0 : index
    %1401 = vector.load %arg5[%c2_312, %c2_313, %c0_314] : memref<4x4x128xf32, #tpu.memory_space<vmem>>, vector<1x1x128xf32>
    %1402 = vector.shape_cast %1401 : vector<1x1x128xf32> to vector<1x128xf32>
    %1403 = vector.shape_cast %1400 : vector<1x128xf32> to vector<1x1x128xf32>
    tpu.vector_store %arg5[%c2_312, %c2_313, %c0_314], %1403 {strides = array<i32>} : memref<4x4x128xf32, #tpu.memory_space<vmem>>, vector<1x1x128xf32>,
    %1404 = vector.broadcast %113 : f32 to vector<1x128xf32>
    %1405 = arith.mulf %1358, %1404 : vector<1x128xf32>
    %1406 = vector.broadcast %114 : f32 to vector<1x128xf32>
    %1407 = arith.mulf %1373, %1406 : vector<1x128xf32>
    %1408 = arith.addf %1405, %1407 : vector<1x128xf32>
    %1409 = vector.broadcast %118 : f32 to vector<1x128xf32>
    %1410 = arith.addf %1408, %1409 : vector<1x128xf32>
    %c2_315 = arith.constant 2 : index
    %c3_316 = arith.constant 3 : index
    %c0_317 = arith.constant 0 : index
    %1411 = vector.load %arg5[%c2_315, %c3_316, %c0_317] : memref<4x4x128xf32, #tpu.memory_space<vmem>>, vector<1x1x128xf32>
    %1412 = vector.shape_cast %1411 : vector<1x1x128xf32> to vector<1x128xf32>
    %1413 = vector.shape_cast %1410 : vector<1x128xf32> to vector<1x1x128xf32>
    tpu.vector_store %arg5[%c2_315, %c3_316, %c0_317], %1413 {strides = array<i32>} : memref<4x4x128xf32, #tpu.memory_space<vmem>>, vector<1x1x128xf32>,
    %1414 = arith.extui %986 : i1 to i32
    %c0_i32_318 = arith.constant 0 : i32
    %1415 = arith.cmpi ne, %1414, %c0_i32_318 : i32
    scf.if %1415 {
      %c0_425 = arith.constant 0 : index
      %c0_426 = arith.constant 0 : index
      %1848 = vector.load %arg6[%c0_425, %c0_426] : memref<8x128xf32, #tpu.memory_space<vmem>>, vector<1x128xf32>
      tpu.vector_store %arg6[%c0_425, %c0_426], %1158 {strides = array<i32>} : memref<8x128xf32, #tpu.memory_space<vmem>>, vector<1x128xf32>,
      %c1_427 = arith.constant 1 : index
      %c0_428 = arith.constant 0 : index
      %1849 = vector.load %arg6[%c1_427, %c0_428] : memref<8x128xf32, #tpu.memory_space<vmem>>, vector<1x128xf32>
      tpu.vector_store %arg6[%c1_427, %c0_428], %1156 {strides = array<i32>} : memref<8x128xf32, #tpu.memory_space<vmem>>, vector<1x128xf32>,
      %c2_429 = arith.constant 2 : index
      %c0_430 = arith.constant 0 : index
      %1850 = vector.load %arg6[%c2_429, %c0_430] : memref<8x128xf32, #tpu.memory_space<vmem>>, vector<2x128xf32>
      tpu.vector_store %arg6[%c2_429, %c0_430], %1305 {strides = array<i32>} : memref<8x128xf32, #tpu.memory_space<vmem>>, vector<2x128xf32>,
      %c4_431 = arith.constant 4 : index
      %c0_432 = arith.constant 0 : index
      %1851 = vector.load %arg6[%c4_431, %c0_432] : memref<8x128xf32, #tpu.memory_space<vmem>>, vector<2x128xf32>
      tpu.vector_store %arg6[%c4_431, %c0_432], %1303 {strides = array<i32>} : memref<8x128xf32, #tpu.memory_space<vmem>>, vector<2x128xf32>,
    } else {
    }
    %c4_i32_319 = arith.constant 4 : i32
    %1416 = arith.muli %arg0, %c4_i32_319 : i32
    %c3_i32 = arith.constant 3 : i32
    %1417 = arith.addi %1416, %c3_i32 : i32
    %1418 = arith.cmpi slt, %1417, %119 : i32
    %c3_320 = arith.constant 3 : index
    %c0_321 = arith.constant 0 : index
    %c0_322 = arith.constant 0 : index
    %1419 = vector.load %arg4[%c3_320, %c0_321, %c0_322] : memref<4x16x128xf32, #tpu.memory_space<vmem>>, vector<1x1x128xf32>
    %1420 = vector.shape_cast %1419 : vector<1x1x128xf32> to vector<1x128xf32>
    %c3_323 = arith.constant 3 : index
    %c1_324 = arith.constant 1 : index
    %c0_325 = arith.constant 0 : index
    %1421 = vector.load %arg4[%c3_323, %c1_324, %c0_325] : memref<4x16x128xf32, #tpu.memory_space<vmem>>, vector<1x1x128xf32>
    %1422 = vector.shape_cast %1421 : vector<1x1x128xf32> to vector<1x128xf32>
    %c3_326 = arith.constant 3 : index
    %c2_327 = arith.constant 2 : index
    %c0_328 = arith.constant 0 : index
    %1423 = vector.load %arg4[%c3_326, %c2_327, %c0_328] : memref<4x16x128xf32, #tpu.memory_space<vmem>>, vector<1x1x128xf32>
    %1424 = vector.shape_cast %1423 : vector<1x1x128xf32> to vector<1x128xf32>
    %c3_329 = arith.constant 3 : index
    %c3_330 = arith.constant 3 : index
    %c0_331 = arith.constant 0 : index
    %1425 = vector.load %arg4[%c3_329, %c3_330, %c0_331] : memref<4x16x128xf32, #tpu.memory_space<vmem>>, vector<1x1x128xf32>
    %1426 = vector.shape_cast %1425 : vector<1x1x128xf32> to vector<1x128xf32>
    %c3_332 = arith.constant 3 : index
    %c4_333 = arith.constant 4 : index
    %c0_334 = arith.constant 0 : index
    %1427 = vector.load %arg4[%c3_332, %c4_333, %c0_334] : memref<4x16x128xf32, #tpu.memory_space<vmem>>, vector<1x1x128xf32>
    %1428 = vector.shape_cast %1427 : vector<1x1x128xf32> to vector<1x128xf32>
    %c3_335 = arith.constant 3 : index
    %c5_336 = arith.constant 5 : index
    %c0_337 = arith.constant 0 : index
    %1429 = vector.load %arg4[%c3_335, %c5_336, %c0_337] : memref<4x16x128xf32, #tpu.memory_space<vmem>>, vector<1x1x128xf32>
    %1430 = vector.shape_cast %1429 : vector<1x1x128xf32> to vector<1x128xf32>
    %c3_338 = arith.constant 3 : index
    %c6_339 = arith.constant 6 : index
    %c0_340 = arith.constant 0 : index
    %1431 = vector.load %arg4[%c3_338, %c6_339, %c0_340] : memref<4x16x128xf32, #tpu.memory_space<vmem>>, vector<1x1x128xf32>
    %1432 = vector.shape_cast %1431 : vector<1x1x128xf32> to vector<1x128xf32>
    %c3_341 = arith.constant 3 : index
    %c7_342 = arith.constant 7 : index
    %c0_343 = arith.constant 0 : index
    %1433 = vector.load %arg4[%c3_341, %c7_342, %c0_343] : memref<4x16x128xf32, #tpu.memory_space<vmem>>, vector<1x1x128xf32>
    %1434 = vector.shape_cast %1433 : vector<1x1x128xf32> to vector<1x128xf32>
    %c3_344 = arith.constant 3 : index
    %c8_345 = arith.constant 8 : index
    %c0_346 = arith.constant 0 : index
    %1435 = vector.load %arg4[%c3_344, %c8_345, %c0_346] : memref<4x16x128xf32, #tpu.memory_space<vmem>>, vector<1x1x128xf32>
    %1436 = vector.shape_cast %1435 : vector<1x1x128xf32> to vector<1x128xf32>
    %c0_347 = arith.constant 0 : index
    %c0_348 = arith.constant 0 : index
    %1437 = vector.load %arg6[%c0_347, %c0_348] : memref<8x128xf32, #tpu.memory_space<vmem>>, vector<1x128xf32>
    %c1_349 = arith.constant 1 : index
    %c0_350 = arith.constant 0 : index
    %1438 = vector.load %arg6[%c1_349, %c0_350] : memref<8x128xf32, #tpu.memory_space<vmem>>, vector<1x128xf32>
    %c2_351 = arith.constant 2 : index
    %c0_352 = arith.constant 0 : index
    %1439 = vector.load %arg6[%c2_351, %c0_352] : memref<8x128xf32, #tpu.memory_space<vmem>>, vector<1x128xf32>
    %c3_353 = arith.constant 3 : index
    %c0_354 = arith.constant 0 : index
    %1440 = vector.load %arg6[%c3_353, %c0_354] : memref<8x128xf32, #tpu.memory_space<vmem>>, vector<1x128xf32>
    %c4_355 = arith.constant 4 : index
    %c0_356 = arith.constant 0 : index
    %1441 = vector.load %arg6[%c4_355, %c0_356] : memref<8x128xf32, #tpu.memory_space<vmem>>, vector<2x128xf32>
    %1442 = vector.broadcast %3 : f32 to vector<1x128xf32>
    %1443 = arith.mulf %1436, %1442 : vector<1x128xf32>
    %1444 = vector.broadcast %4 : f32 to vector<1x128xf32>
    %1445 = arith.addf %1443, %1444 : vector<1x128xf32>
    %1446 = vector.broadcast %5 : f32 to vector<1x128xf32>
    %1447 = arith.mulf %1420, %1446 : vector<1x128xf32>
    %1448 = vector.broadcast %6 : f32 to vector<1x128xf32>
    %1449 = arith.mulf %1422, %1448 : vector<1x128xf32>
    %1450 = arith.addf %1447, %1449 : vector<1x128xf32>
    %1451 = vector.broadcast %7 : f32 to vector<1x128xf32>
    %1452 = arith.mulf %1424, %1451 : vector<1x128xf32>
    %1453 = arith.addf %1450, %1452 : vector<1x128xf32>
    %1454 = vector.broadcast %8 : f32 to vector<1x128xf32>
    %1455 = arith.mulf %1426, %1454 : vector<1x128xf32>
    %1456 = arith.addf %1453, %1455 : vector<1x128xf32>
    %1457 = vector.broadcast %9 : f32 to vector<1x128xf32>
    %1458 = arith.mulf %1428, %1457 : vector<1x128xf32>
    %1459 = arith.addf %1456, %1458 : vector<1x128xf32>
    %1460 = vector.broadcast %10 : f32 to vector<1x128xf32>
    %1461 = arith.mulf %1430, %1460 : vector<1x128xf32>
    %1462 = arith.addf %1459, %1461 : vector<1x128xf32>
    %1463 = vector.broadcast %11 : f32 to vector<1x128xf32>
    %1464 = arith.mulf %1432, %1463 : vector<1x128xf32>
    %1465 = arith.addf %1462, %1464 : vector<1x128xf32>
    %1466 = vector.broadcast %12 : f32 to vector<1x128xf32>
    %1467 = arith.mulf %1434, %1466 : vector<1x128xf32>
    %1468 = arith.addf %1465, %1467 : vector<1x128xf32>
    %1469 = vector.broadcast %37 : f32 to vector<1x128xf32>
    %1470 = arith.mulf %1437, %1469 : vector<1x128xf32>
    %1471 = arith.addf %1468, %1470 : vector<1x128xf32>
    %1472 = vector.broadcast %41 : f32 to vector<1x128xf32>
    %1473 = arith.addf %1471, %1472 : vector<1x128xf32>
    %cst_357 = arith.constant 5.000000e-01 : f32
    %1474 = vector.broadcast %cst_357 : f32 to vector<1x128xf32>
    %1475 = arith.mulf %1473, %1474 : vector<1x128xf32>
    %c0_358 = arith.constant 0 : index
    %c0_359 = arith.constant 0 : index
    %1476 = vector.load %arg7[%c0_358, %c0_359] : memref<8x128xf32, #tpu.memory_space<vmem>>, vector<1x128xf32>
    tpu.vector_store %arg7[%c0_358, %c0_359], %1475 {strides = array<i32>} : memref<8x128xf32, #tpu.memory_space<vmem>>, vector<1x128xf32>,
    %1477 = vector.broadcast %13 : f32 to vector<1x128xf32>
    %1478 = arith.mulf %1420, %1477 : vector<1x128xf32>
    %1479 = vector.broadcast %14 : f32 to vector<1x128xf32>
    %1480 = arith.mulf %1422, %1479 : vector<1x128xf32>
    %1481 = arith.addf %1478, %1480 : vector<1x128xf32>
    %1482 = vector.broadcast %15 : f32 to vector<1x128xf32>
    %1483 = arith.mulf %1424, %1482 : vector<1x128xf32>
    %1484 = arith.addf %1481, %1483 : vector<1x128xf32>
    %1485 = vector.broadcast %16 : f32 to vector<1x128xf32>
    %1486 = arith.mulf %1426, %1485 : vector<1x128xf32>
    %1487 = arith.addf %1484, %1486 : vector<1x128xf32>
    %1488 = vector.broadcast %17 : f32 to vector<1x128xf32>
    %1489 = arith.mulf %1428, %1488 : vector<1x128xf32>
    %1490 = arith.addf %1487, %1489 : vector<1x128xf32>
    %1491 = vector.broadcast %18 : f32 to vector<1x128xf32>
    %1492 = arith.mulf %1430, %1491 : vector<1x128xf32>
    %1493 = arith.addf %1490, %1492 : vector<1x128xf32>
    %1494 = vector.broadcast %19 : f32 to vector<1x128xf32>
    %1495 = arith.mulf %1432, %1494 : vector<1x128xf32>
    %1496 = arith.addf %1493, %1495 : vector<1x128xf32>
    %1497 = vector.broadcast %20 : f32 to vector<1x128xf32>
    %1498 = arith.mulf %1434, %1497 : vector<1x128xf32>
    %1499 = arith.addf %1496, %1498 : vector<1x128xf32>
    %1500 = vector.broadcast %38 : f32 to vector<1x128xf32>
    %1501 = arith.mulf %1437, %1500 : vector<1x128xf32>
    %1502 = arith.addf %1499, %1501 : vector<1x128xf32>
    %1503 = vector.broadcast %42 : f32 to vector<1x128xf32>
    %1504 = arith.addf %1502, %1503 : vector<1x128xf32>
    %cst_360 = arith.constant 5.000000e-01 : f32
    %1505 = vector.broadcast %cst_360 : f32 to vector<1x128xf32>
    %1506 = arith.mulf %1504, %1505 : vector<1x128xf32>
    %c1_361 = arith.constant 1 : index
    %c0_362 = arith.constant 0 : index
    %1507 = vector.load %arg7[%c1_361, %c0_362] : memref<8x128xf32, #tpu.memory_space<vmem>>, vector<1x128xf32>
    tpu.vector_store %arg7[%c1_361, %c0_362], %1506 {strides = array<i32>} : memref<8x128xf32, #tpu.memory_space<vmem>>, vector<1x128xf32>,
    %1508 = vector.broadcast %21 : f32 to vector<1x128xf32>
    %1509 = arith.mulf %1420, %1508 : vector<1x128xf32>
    %1510 = vector.broadcast %22 : f32 to vector<1x128xf32>
    %1511 = arith.mulf %1422, %1510 : vector<1x128xf32>
    %1512 = arith.addf %1509, %1511 : vector<1x128xf32>
    %1513 = vector.broadcast %23 : f32 to vector<1x128xf32>
    %1514 = arith.mulf %1424, %1513 : vector<1x128xf32>
    %1515 = arith.addf %1512, %1514 : vector<1x128xf32>
    %1516 = vector.broadcast %24 : f32 to vector<1x128xf32>
    %1517 = arith.mulf %1426, %1516 : vector<1x128xf32>
    %1518 = arith.addf %1515, %1517 : vector<1x128xf32>
    %1519 = vector.broadcast %25 : f32 to vector<1x128xf32>
    %1520 = arith.mulf %1428, %1519 : vector<1x128xf32>
    %1521 = arith.addf %1518, %1520 : vector<1x128xf32>
    %1522 = vector.broadcast %26 : f32 to vector<1x128xf32>
    %1523 = arith.mulf %1430, %1522 : vector<1x128xf32>
    %1524 = arith.addf %1521, %1523 : vector<1x128xf32>
    %1525 = vector.broadcast %27 : f32 to vector<1x128xf32>
    %1526 = arith.mulf %1432, %1525 : vector<1x128xf32>
    %1527 = arith.addf %1524, %1526 : vector<1x128xf32>
    %1528 = vector.broadcast %28 : f32 to vector<1x128xf32>
    %1529 = arith.mulf %1434, %1528 : vector<1x128xf32>
    %1530 = arith.addf %1527, %1529 : vector<1x128xf32>
    %1531 = vector.broadcast %39 : f32 to vector<1x128xf32>
    %1532 = arith.mulf %1437, %1531 : vector<1x128xf32>
    %1533 = arith.addf %1530, %1532 : vector<1x128xf32>
    %1534 = vector.broadcast %43 : f32 to vector<1x128xf32>
    %1535 = arith.addf %1533, %1534 : vector<1x128xf32>
    %c2_363 = arith.constant 2 : index
    %c0_364 = arith.constant 0 : index
    %1536 = vector.load %arg7[%c2_363, %c0_364] : memref<8x128xf32, #tpu.memory_space<vmem>>, vector<1x128xf32>
    tpu.vector_store %arg7[%c2_363, %c0_364], %1535 {strides = array<i32>} : memref<8x128xf32, #tpu.memory_space<vmem>>, vector<1x128xf32>,
    %1537 = vector.broadcast %29 : f32 to vector<1x128xf32>
    %1538 = arith.mulf %1420, %1537 : vector<1x128xf32>
    %1539 = vector.broadcast %30 : f32 to vector<1x128xf32>
    %1540 = arith.mulf %1422, %1539 : vector<1x128xf32>
    %1541 = arith.addf %1538, %1540 : vector<1x128xf32>
    %1542 = vector.broadcast %31 : f32 to vector<1x128xf32>
    %1543 = arith.mulf %1424, %1542 : vector<1x128xf32>
    %1544 = arith.addf %1541, %1543 : vector<1x128xf32>
    %1545 = vector.broadcast %32 : f32 to vector<1x128xf32>
    %1546 = arith.mulf %1426, %1545 : vector<1x128xf32>
    %1547 = arith.addf %1544, %1546 : vector<1x128xf32>
    %1548 = vector.broadcast %33 : f32 to vector<1x128xf32>
    %1549 = arith.mulf %1428, %1548 : vector<1x128xf32>
    %1550 = arith.addf %1547, %1549 : vector<1x128xf32>
    %1551 = vector.broadcast %34 : f32 to vector<1x128xf32>
    %1552 = arith.mulf %1430, %1551 : vector<1x128xf32>
    %1553 = arith.addf %1550, %1552 : vector<1x128xf32>
    %1554 = vector.broadcast %35 : f32 to vector<1x128xf32>
    %1555 = arith.mulf %1432, %1554 : vector<1x128xf32>
    %1556 = arith.addf %1553, %1555 : vector<1x128xf32>
    %1557 = vector.broadcast %36 : f32 to vector<1x128xf32>
    %1558 = arith.mulf %1434, %1557 : vector<1x128xf32>
    %1559 = arith.addf %1556, %1558 : vector<1x128xf32>
    %1560 = vector.broadcast %40 : f32 to vector<1x128xf32>
    %1561 = arith.mulf %1437, %1560 : vector<1x128xf32>
    %1562 = arith.addf %1559, %1561 : vector<1x128xf32>
    %1563 = vector.broadcast %44 : f32 to vector<1x128xf32>
    %1564 = arith.addf %1562, %1563 : vector<1x128xf32>
    %cst_365 = arith.constant 5.000000e-01 : f32
    %1565 = vector.broadcast %cst_365 : f32 to vector<1x128xf32>
    %1566 = arith.mulf %1564, %1565 : vector<1x128xf32>
    %c3_366 = arith.constant 3 : index
    %c0_367 = arith.constant 0 : index
    %1567 = vector.load %arg7[%c3_366, %c0_367] : memref<8x128xf32, #tpu.memory_space<vmem>>, vector<1x128xf32>
    tpu.vector_store %arg7[%c3_366, %c0_367], %1566 {strides = array<i32>} : memref<8x128xf32, #tpu.memory_space<vmem>>, vector<1x128xf32>,
    %c0_368 = arith.constant 0 : index
    %c0_369 = arith.constant 0 : index
    %1568 = vector.load %arg7[%c0_368, %c0_369] : memref<8x128xf32, #tpu.memory_space<vmem>>, vector<4x128xf32>
    %1569 = math.tanh %1568 : vector<4x128xf32>
    %1570 = vector.extract_strided_slice %1569 {offsets = [0, 0], sizes = [1, 128], strides = [1, 1]} : vector<4x128xf32> to vector<1x128xf32>
    %cst_370 = arith.constant 5.000000e-01 : f32
    %1571 = vector.broadcast %cst_370 : f32 to vector<1x128xf32>
    %1572 = arith.mulf %1571, %1570 : vector<1x128xf32>
    %cst_371 = arith.constant 5.000000e-01 : f32
    %1573 = vector.broadcast %cst_371 : f32 to vector<1x128xf32>
    %1574 = arith.addf %1572, %1573 : vector<1x128xf32>
    %1575 = vector.extract_strided_slice %1569 {offsets = [1, 0], sizes = [1, 128], strides = [1, 1]} : vector<4x128xf32> to vector<1x128xf32>
    %cst_372 = arith.constant 5.000000e-01 : f32
    %1576 = vector.broadcast %cst_372 : f32 to vector<1x128xf32>
    %1577 = arith.mulf %1576, %1575 : vector<1x128xf32>
    %cst_373 = arith.constant 5.000000e-01 : f32
    %1578 = vector.broadcast %cst_373 : f32 to vector<1x128xf32>
    %1579 = arith.addf %1577, %1578 : vector<1x128xf32>
    %1580 = vector.extract_strided_slice %1569 {offsets = [2, 0], sizes = [1, 128], strides = [1, 1]} : vector<4x128xf32> to vector<1x128xf32>
    %1581 = vector.extract_strided_slice %1569 {offsets = [3, 0], sizes = [1, 128], strides = [1, 1]} : vector<4x128xf32> to vector<1x128xf32>
    %cst_374 = arith.constant 5.000000e-01 : f32
    %1582 = vector.broadcast %cst_374 : f32 to vector<1x128xf32>
    %1583 = arith.mulf %1582, %1581 : vector<1x128xf32>
    %cst_375 = arith.constant 5.000000e-01 : f32
    %1584 = vector.broadcast %cst_375 : f32 to vector<1x128xf32>
    %1585 = arith.addf %1583, %1584 : vector<1x128xf32>
    %1586 = arith.mulf %1579, %1438 : vector<1x128xf32>
    %1587 = arith.mulf %1574, %1580 : vector<1x128xf32>
    %1588 = arith.addf %1586, %1587 : vector<1x128xf32>
    %1589 = math.tanh %1588 : vector<1x128xf32>
    %1590 = arith.mulf %1585, %1589 : vector<1x128xf32>
    %1591 = vector.broadcast %45 : f32 to vector<1x128xf32>
    %1592 = arith.mulf %1445, %1591 : vector<1x128xf32>
    %1593 = vector.broadcast %46 : f32 to vector<1x128xf32>
    %1594 = arith.mulf %1590, %1593 : vector<1x128xf32>
    %1595 = arith.addf %1592, %1594 : vector<1x128xf32>
    %1596 = vector.broadcast %61 : f32 to vector<1x128xf32>
    %1597 = arith.mulf %1439, %1596 : vector<1x128xf32>
    %1598 = arith.addf %1595, %1597 : vector<1x128xf32>
    %1599 = vector.broadcast %62 : f32 to vector<1x128xf32>
    %1600 = arith.mulf %1440, %1599 : vector<1x128xf32>
    %1601 = arith.addf %1598, %1600 : vector<1x128xf32>
    %1602 = vector.broadcast %77 : f32 to vector<1x128xf32>
    %1603 = arith.addf %1601, %1602 : vector<1x128xf32>
    %cst_376 = arith.constant 5.000000e-01 : f32
    %1604 = vector.broadcast %cst_376 : f32 to vector<1x128xf32>
    %1605 = arith.mulf %1603, %1604 : vector<1x128xf32>
    %c0_377 = arith.constant 0 : index
    %c0_378 = arith.constant 0 : index
    %1606 = vector.load %arg7[%c0_377, %c0_378] : memref<8x128xf32, #tpu.memory_space<vmem>>, vector<1x128xf32>
    tpu.vector_store %arg7[%c0_377, %c0_378], %1605 {strides = array<i32>} : memref<8x128xf32, #tpu.memory_space<vmem>>, vector<1x128xf32>,
    %1607 = vector.broadcast %47 : f32 to vector<1x128xf32>
    %1608 = arith.mulf %1445, %1607 : vector<1x128xf32>
    %1609 = vector.broadcast %48 : f32 to vector<1x128xf32>
    %1610 = arith.mulf %1590, %1609 : vector<1x128xf32>
    %1611 = arith.addf %1608, %1610 : vector<1x128xf32>
    %1612 = vector.broadcast %63 : f32 to vector<1x128xf32>
    %1613 = arith.mulf %1439, %1612 : vector<1x128xf32>
    %1614 = arith.addf %1611, %1613 : vector<1x128xf32>
    %1615 = vector.broadcast %64 : f32 to vector<1x128xf32>
    %1616 = arith.mulf %1440, %1615 : vector<1x128xf32>
    %1617 = arith.addf %1614, %1616 : vector<1x128xf32>
    %1618 = vector.broadcast %78 : f32 to vector<1x128xf32>
    %1619 = arith.addf %1617, %1618 : vector<1x128xf32>
    %cst_379 = arith.constant 5.000000e-01 : f32
    %1620 = vector.broadcast %cst_379 : f32 to vector<1x128xf32>
    %1621 = arith.mulf %1619, %1620 : vector<1x128xf32>
    %c1_380 = arith.constant 1 : index
    %c0_381 = arith.constant 0 : index
    %1622 = vector.load %arg7[%c1_380, %c0_381] : memref<8x128xf32, #tpu.memory_space<vmem>>, vector<1x128xf32>
    tpu.vector_store %arg7[%c1_380, %c0_381], %1621 {strides = array<i32>} : memref<8x128xf32, #tpu.memory_space<vmem>>, vector<1x128xf32>,
    %1623 = vector.broadcast %49 : f32 to vector<1x128xf32>
    %1624 = arith.mulf %1445, %1623 : vector<1x128xf32>
    %1625 = vector.broadcast %50 : f32 to vector<1x128xf32>
    %1626 = arith.mulf %1590, %1625 : vector<1x128xf32>
    %1627 = arith.addf %1624, %1626 : vector<1x128xf32>
    %1628 = vector.broadcast %65 : f32 to vector<1x128xf32>
    %1629 = arith.mulf %1439, %1628 : vector<1x128xf32>
    %1630 = arith.addf %1627, %1629 : vector<1x128xf32>
    %1631 = vector.broadcast %66 : f32 to vector<1x128xf32>
    %1632 = arith.mulf %1440, %1631 : vector<1x128xf32>
    %1633 = arith.addf %1630, %1632 : vector<1x128xf32>
    %1634 = vector.broadcast %79 : f32 to vector<1x128xf32>
    %1635 = arith.addf %1633, %1634 : vector<1x128xf32>
    %cst_382 = arith.constant 5.000000e-01 : f32
    %1636 = vector.broadcast %cst_382 : f32 to vector<1x128xf32>
    %1637 = arith.mulf %1635, %1636 : vector<1x128xf32>
    %c2_383 = arith.constant 2 : index
    %c0_384 = arith.constant 0 : index
    %1638 = vector.load %arg7[%c2_383, %c0_384] : memref<8x128xf32, #tpu.memory_space<vmem>>, vector<1x128xf32>
    tpu.vector_store %arg7[%c2_383, %c0_384], %1637 {strides = array<i32>} : memref<8x128xf32, #tpu.memory_space<vmem>>, vector<1x128xf32>,
    %1639 = vector.broadcast %51 : f32 to vector<1x128xf32>
    %1640 = arith.mulf %1445, %1639 : vector<1x128xf32>
    %1641 = vector.broadcast %52 : f32 to vector<1x128xf32>
    %1642 = arith.mulf %1590, %1641 : vector<1x128xf32>
    %1643 = arith.addf %1640, %1642 : vector<1x128xf32>
    %1644 = vector.broadcast %67 : f32 to vector<1x128xf32>
    %1645 = arith.mulf %1439, %1644 : vector<1x128xf32>
    %1646 = arith.addf %1643, %1645 : vector<1x128xf32>
    %1647 = vector.broadcast %68 : f32 to vector<1x128xf32>
    %1648 = arith.mulf %1440, %1647 : vector<1x128xf32>
    %1649 = arith.addf %1646, %1648 : vector<1x128xf32>
    %1650 = vector.broadcast %80 : f32 to vector<1x128xf32>
    %1651 = arith.addf %1649, %1650 : vector<1x128xf32>
    %cst_385 = arith.constant 5.000000e-01 : f32
    %1652 = vector.broadcast %cst_385 : f32 to vector<1x128xf32>
    %1653 = arith.mulf %1651, %1652 : vector<1x128xf32>
    %c3_386 = arith.constant 3 : index
    %c0_387 = arith.constant 0 : index
    %1654 = vector.load %arg7[%c3_386, %c0_387] : memref<8x128xf32, #tpu.memory_space<vmem>>, vector<1x128xf32>
    tpu.vector_store %arg7[%c3_386, %c0_387], %1653 {strides = array<i32>} : memref<8x128xf32, #tpu.memory_space<vmem>>, vector<1x128xf32>,
    %1655 = vector.broadcast %53 : f32 to vector<1x128xf32>
    %1656 = arith.mulf %1445, %1655 : vector<1x128xf32>
    %1657 = vector.broadcast %54 : f32 to vector<1x128xf32>
    %1658 = arith.mulf %1590, %1657 : vector<1x128xf32>
    %1659 = arith.addf %1656, %1658 : vector<1x128xf32>
    %1660 = vector.broadcast %69 : f32 to vector<1x128xf32>
    %1661 = arith.mulf %1439, %1660 : vector<1x128xf32>
    %1662 = arith.addf %1659, %1661 : vector<1x128xf32>
    %1663 = vector.broadcast %70 : f32 to vector<1x128xf32>
    %1664 = arith.mulf %1440, %1663 : vector<1x128xf32>
    %1665 = arith.addf %1662, %1664 : vector<1x128xf32>
    %1666 = vector.broadcast %81 : f32 to vector<1x128xf32>
    %1667 = arith.addf %1665, %1666 : vector<1x128xf32>
    %c4_388 = arith.constant 4 : index
    %c0_389 = arith.constant 0 : index
    %1668 = vector.load %arg7[%c4_388, %c0_389] : memref<8x128xf32, #tpu.memory_space<vmem>>, vector<1x128xf32>
    tpu.vector_store %arg7[%c4_388, %c0_389], %1667 {strides = array<i32>} : memref<8x128xf32, #tpu.memory_space<vmem>>, vector<1x128xf32>,
    %1669 = vector.broadcast %55 : f32 to vector<1x128xf32>
    %1670 = arith.mulf %1445, %1669 : vector<1x128xf32>
    %1671 = vector.broadcast %56 : f32 to vector<1x128xf32>
    %1672 = arith.mulf %1590, %1671 : vector<1x128xf32>
    %1673 = arith.addf %1670, %1672 : vector<1x128xf32>
    %1674 = vector.broadcast %71 : f32 to vector<1x128xf32>
    %1675 = arith.mulf %1439, %1674 : vector<1x128xf32>
    %1676 = arith.addf %1673, %1675 : vector<1x128xf32>
    %1677 = vector.broadcast %72 : f32 to vector<1x128xf32>
    %1678 = arith.mulf %1440, %1677 : vector<1x128xf32>
    %1679 = arith.addf %1676, %1678 : vector<1x128xf32>
    %1680 = vector.broadcast %82 : f32 to vector<1x128xf32>
    %1681 = arith.addf %1679, %1680 : vector<1x128xf32>
    %c5_390 = arith.constant 5 : index
    %c0_391 = arith.constant 0 : index
    %1682 = vector.load %arg7[%c5_390, %c0_391] : memref<8x128xf32, #tpu.memory_space<vmem>>, vector<1x128xf32>
    tpu.vector_store %arg7[%c5_390, %c0_391], %1681 {strides = array<i32>} : memref<8x128xf32, #tpu.memory_space<vmem>>, vector<1x128xf32>,
    %1683 = vector.broadcast %57 : f32 to vector<1x128xf32>
    %1684 = arith.mulf %1445, %1683 : vector<1x128xf32>
    %1685 = vector.broadcast %58 : f32 to vector<1x128xf32>
    %1686 = arith.mulf %1590, %1685 : vector<1x128xf32>
    %1687 = arith.addf %1684, %1686 : vector<1x128xf32>
    %1688 = vector.broadcast %73 : f32 to vector<1x128xf32>
    %1689 = arith.mulf %1439, %1688 : vector<1x128xf32>
    %1690 = arith.addf %1687, %1689 : vector<1x128xf32>
    %1691 = vector.broadcast %74 : f32 to vector<1x128xf32>
    %1692 = arith.mulf %1440, %1691 : vector<1x128xf32>
    %1693 = arith.addf %1690, %1692 : vector<1x128xf32>
    %1694 = vector.broadcast %83 : f32 to vector<1x128xf32>
    %1695 = arith.addf %1693, %1694 : vector<1x128xf32>
    %cst_392 = arith.constant 5.000000e-01 : f32
    %1696 = vector.broadcast %cst_392 : f32 to vector<1x128xf32>
    %1697 = arith.mulf %1695, %1696 : vector<1x128xf32>
    %c6_393 = arith.constant 6 : index
    %c0_394 = arith.constant 0 : index
    %1698 = vector.load %arg7[%c6_393, %c0_394] : memref<8x128xf32, #tpu.memory_space<vmem>>, vector<1x128xf32>
    tpu.vector_store %arg7[%c6_393, %c0_394], %1697 {strides = array<i32>} : memref<8x128xf32, #tpu.memory_space<vmem>>, vector<1x128xf32>,
    %1699 = vector.broadcast %59 : f32 to vector<1x128xf32>
    %1700 = arith.mulf %1445, %1699 : vector<1x128xf32>
    %1701 = vector.broadcast %60 : f32 to vector<1x128xf32>
    %1702 = arith.mulf %1590, %1701 : vector<1x128xf32>
    %1703 = arith.addf %1700, %1702 : vector<1x128xf32>
    %1704 = vector.broadcast %75 : f32 to vector<1x128xf32>
    %1705 = arith.mulf %1439, %1704 : vector<1x128xf32>
    %1706 = arith.addf %1703, %1705 : vector<1x128xf32>
    %1707 = vector.broadcast %76 : f32 to vector<1x128xf32>
    %1708 = arith.mulf %1440, %1707 : vector<1x128xf32>
    %1709 = arith.addf %1706, %1708 : vector<1x128xf32>
    %1710 = vector.broadcast %84 : f32 to vector<1x128xf32>
    %1711 = arith.addf %1709, %1710 : vector<1x128xf32>
    %cst_395 = arith.constant 5.000000e-01 : f32
    %1712 = vector.broadcast %cst_395 : f32 to vector<1x128xf32>
    %1713 = arith.mulf %1711, %1712 : vector<1x128xf32>
    %c7_396 = arith.constant 7 : index
    %c0_397 = arith.constant 0 : index
    %1714 = vector.load %arg7[%c7_396, %c0_397] : memref<8x128xf32, #tpu.memory_space<vmem>>, vector<1x128xf32>
    tpu.vector_store %arg7[%c7_396, %c0_397], %1713 {strides = array<i32>} : memref<8x128xf32, #tpu.memory_space<vmem>>, vector<1x128xf32>,
    %c0_398 = arith.constant 0 : index
    %c0_399 = arith.constant 0 : index
    %1715 = vector.load %arg7[%c0_398, %c0_399] : memref<8x128xf32, #tpu.memory_space<vmem>>, vector<8x128xf32>
    %1716 = math.tanh %1715 : vector<8x128xf32>
    %1717 = vector.extract_strided_slice %1716 {offsets = [0, 0], sizes = [2, 128], strides = [1, 1]} : vector<8x128xf32> to vector<2x128xf32>
    %cst_400 = arith.constant 5.000000e-01 : f32
    %1718 = vector.broadcast %cst_400 : f32 to vector<2x128xf32>
    %1719 = arith.mulf %1718, %1717 : vector<2x128xf32>
    %cst_401 = arith.constant 5.000000e-01 : f32
    %1720 = vector.broadcast %cst_401 : f32 to vector<2x128xf32>
    %1721 = arith.addf %1719, %1720 : vector<2x128xf32>
    %1722 = vector.extract_strided_slice %1716 {offsets = [2, 0], sizes = [2, 128], strides = [1, 1]} : vector<8x128xf32> to vector<2x128xf32>
    %cst_402 = arith.constant 5.000000e-01 : f32
    %1723 = vector.broadcast %cst_402 : f32 to vector<2x128xf32>
    %1724 = arith.mulf %1723, %1722 : vector<2x128xf32>
    %cst_403 = arith.constant 5.000000e-01 : f32
    %1725 = vector.broadcast %cst_403 : f32 to vector<2x128xf32>
    %1726 = arith.addf %1724, %1725 : vector<2x128xf32>
    %1727 = vector.extract_strided_slice %1716 {offsets = [4, 0], sizes = [2, 128], strides = [1, 1]} : vector<8x128xf32> to vector<2x128xf32>
    %1728 = vector.extract_strided_slice %1716 {offsets = [6, 0], sizes = [2, 128], strides = [1, 1]} : vector<8x128xf32> to vector<2x128xf32>
    %cst_404 = arith.constant 5.000000e-01 : f32
    %1729 = vector.broadcast %cst_404 : f32 to vector<2x128xf32>
    %1730 = arith.mulf %1729, %1728 : vector<2x128xf32>
    %cst_405 = arith.constant 5.000000e-01 : f32
    %1731 = vector.broadcast %cst_405 : f32 to vector<2x128xf32>
    %1732 = arith.addf %1730, %1731 : vector<2x128xf32>
    %1733 = arith.mulf %1726, %1441 : vector<2x128xf32>
    %1734 = arith.mulf %1721, %1727 : vector<2x128xf32>
    %1735 = arith.addf %1733, %1734 : vector<2x128xf32>
    %1736 = math.tanh %1735 : vector<2x128xf32>
    %1737 = arith.mulf %1732, %1736 : vector<2x128xf32>
    %1738 = vector.extract_strided_slice %1737 {offsets = [0, 0], sizes = [1, 128], strides = [1, 1]} : vector<2x128xf32> to vector<1x128xf32>
    %1739 = vector.extract_strided_slice %1737 {offsets = [1, 0], sizes = [1, 128], strides = [1, 1]} : vector<2x128xf32> to vector<1x128xf32>
    %1740 = vector.broadcast %85 : f32 to vector<1x128xf32>
    %1741 = arith.mulf %1738, %1740 : vector<1x128xf32>
    %1742 = vector.broadcast %86 : f32 to vector<1x128xf32>
    %1743 = arith.mulf %1739, %1742 : vector<1x128xf32>
    %1744 = arith.addf %1741, %1743 : vector<1x128xf32>
    %1745 = vector.broadcast %93 : f32 to vector<1x128xf32>
    %1746 = arith.addf %1744, %1745 : vector<1x128xf32>
    %cst_406 = arith.constant 0.000000e+00 : f32
    %1747 = vector.broadcast %cst_406 : f32 to vector<1x128xf32>
    %1748 = arith.maximumf %1746, %1747 : vector<1x128xf32>
    %1749 = vector.broadcast %87 : f32 to vector<1x128xf32>
    %1750 = arith.mulf %1738, %1749 : vector<1x128xf32>
    %1751 = vector.broadcast %88 : f32 to vector<1x128xf32>
    %1752 = arith.mulf %1739, %1751 : vector<1x128xf32>
    %1753 = arith.addf %1750, %1752 : vector<1x128xf32>
    %1754 = vector.broadcast %94 : f32 to vector<1x128xf32>
    %1755 = arith.addf %1753, %1754 : vector<1x128xf32>
    %cst_407 = arith.constant 0.000000e+00 : f32
    %1756 = vector.broadcast %cst_407 : f32 to vector<1x128xf32>
    %1757 = arith.maximumf %1755, %1756 : vector<1x128xf32>
    %1758 = vector.broadcast %89 : f32 to vector<1x128xf32>
    %1759 = arith.mulf %1738, %1758 : vector<1x128xf32>
    %1760 = vector.broadcast %90 : f32 to vector<1x128xf32>
    %1761 = arith.mulf %1739, %1760 : vector<1x128xf32>
    %1762 = arith.addf %1759, %1761 : vector<1x128xf32>
    %1763 = vector.broadcast %95 : f32 to vector<1x128xf32>
    %1764 = arith.addf %1762, %1763 : vector<1x128xf32>
    %cst_408 = arith.constant 0.000000e+00 : f32
    %1765 = vector.broadcast %cst_408 : f32 to vector<1x128xf32>
    %1766 = arith.maximumf %1764, %1765 : vector<1x128xf32>
    %1767 = vector.broadcast %91 : f32 to vector<1x128xf32>
    %1768 = arith.mulf %1738, %1767 : vector<1x128xf32>
    %1769 = vector.broadcast %92 : f32 to vector<1x128xf32>
    %1770 = arith.mulf %1739, %1769 : vector<1x128xf32>
    %1771 = arith.addf %1768, %1770 : vector<1x128xf32>
    %1772 = vector.broadcast %96 : f32 to vector<1x128xf32>
    %1773 = arith.addf %1771, %1772 : vector<1x128xf32>
    %cst_409 = arith.constant 0.000000e+00 : f32
    %1774 = vector.broadcast %cst_409 : f32 to vector<1x128xf32>
    %1775 = arith.maximumf %1773, %1774 : vector<1x128xf32>
    %1776 = vector.broadcast %97 : f32 to vector<1x128xf32>
    %1777 = arith.mulf %1748, %1776 : vector<1x128xf32>
    %1778 = vector.broadcast %105 : f32 to vector<1x128xf32>
    %1779 = arith.addf %1777, %1778 : vector<1x128xf32>
    %1780 = vector.broadcast %98 : f32 to vector<1x128xf32>
    %1781 = arith.mulf %1757, %1780 : vector<1x128xf32>
    %1782 = arith.addf %1779, %1781 : vector<1x128xf32>
    %1783 = vector.broadcast %99 : f32 to vector<1x128xf32>
    %1784 = arith.mulf %1766, %1783 : vector<1x128xf32>
    %1785 = arith.addf %1782, %1784 : vector<1x128xf32>
    %1786 = vector.broadcast %100 : f32 to vector<1x128xf32>
    %1787 = arith.mulf %1775, %1786 : vector<1x128xf32>
    %1788 = arith.addf %1785, %1787 : vector<1x128xf32>
    %cst_410 = arith.constant 0.000000e+00 : f32
    %1789 = vector.broadcast %cst_410 : f32 to vector<1x128xf32>
    %1790 = arith.maximumf %1788, %1789 : vector<1x128xf32>
    %1791 = vector.broadcast %101 : f32 to vector<1x128xf32>
    %1792 = arith.mulf %1748, %1791 : vector<1x128xf32>
    %1793 = vector.broadcast %106 : f32 to vector<1x128xf32>
    %1794 = arith.addf %1792, %1793 : vector<1x128xf32>
    %1795 = vector.broadcast %102 : f32 to vector<1x128xf32>
    %1796 = arith.mulf %1757, %1795 : vector<1x128xf32>
    %1797 = arith.addf %1794, %1796 : vector<1x128xf32>
    %1798 = vector.broadcast %103 : f32 to vector<1x128xf32>
    %1799 = arith.mulf %1766, %1798 : vector<1x128xf32>
    %1800 = arith.addf %1797, %1799 : vector<1x128xf32>
    %1801 = vector.broadcast %104 : f32 to vector<1x128xf32>
    %1802 = arith.mulf %1775, %1801 : vector<1x128xf32>
    %1803 = arith.addf %1800, %1802 : vector<1x128xf32>
    %cst_411 = arith.constant 0.000000e+00 : f32
    %1804 = vector.broadcast %cst_411 : f32 to vector<1x128xf32>
    %1805 = arith.maximumf %1803, %1804 : vector<1x128xf32>
    %1806 = vector.broadcast %107 : f32 to vector<1x128xf32>
    %1807 = arith.mulf %1790, %1806 : vector<1x128xf32>
    %1808 = vector.broadcast %108 : f32 to vector<1x128xf32>
    %1809 = arith.mulf %1805, %1808 : vector<1x128xf32>
    %1810 = arith.addf %1807, %1809 : vector<1x128xf32>
    %1811 = vector.broadcast %115 : f32 to vector<1x128xf32>
    %1812 = arith.addf %1810, %1811 : vector<1x128xf32>
    %c3_412 = arith.constant 3 : index
    %c0_413 = arith.constant 0 : index
    %c0_414 = arith.constant 0 : index
    %1813 = vector.load %arg5[%c3_412, %c0_413, %c0_414] : memref<4x4x128xf32, #tpu.memory_space<vmem>>, vector<1x1x128xf32>
    %1814 = vector.shape_cast %1813 : vector<1x1x128xf32> to vector<1x128xf32>
    %1815 = vector.shape_cast %1812 : vector<1x128xf32> to vector<1x1x128xf32>
    tpu.vector_store %arg5[%c3_412, %c0_413, %c0_414], %1815 {strides = array<i32>} : memref<4x4x128xf32, #tpu.memory_space<vmem>>, vector<1x1x128xf32>,
    %1816 = vector.broadcast %109 : f32 to vector<1x128xf32>
    %1817 = arith.mulf %1790, %1816 : vector<1x128xf32>
    %1818 = vector.broadcast %110 : f32 to vector<1x128xf32>
    %1819 = arith.mulf %1805, %1818 : vector<1x128xf32>
    %1820 = arith.addf %1817, %1819 : vector<1x128xf32>
    %1821 = vector.broadcast %116 : f32 to vector<1x128xf32>
    %1822 = arith.addf %1820, %1821 : vector<1x128xf32>
    %c3_415 = arith.constant 3 : index
    %c1_416 = arith.constant 1 : index
    %c0_417 = arith.constant 0 : index
    %1823 = vector.load %arg5[%c3_415, %c1_416, %c0_417] : memref<4x4x128xf32, #tpu.memory_space<vmem>>, vector<1x1x128xf32>
    %1824 = vector.shape_cast %1823 : vector<1x1x128xf32> to vector<1x128xf32>
    %1825 = vector.shape_cast %1822 : vector<1x128xf32> to vector<1x1x128xf32>
    tpu.vector_store %arg5[%c3_415, %c1_416, %c0_417], %1825 {strides = array<i32>} : memref<4x4x128xf32, #tpu.memory_space<vmem>>, vector<1x1x128xf32>,
    %1826 = vector.broadcast %111 : f32 to vector<1x128xf32>
    %1827 = arith.mulf %1790, %1826 : vector<1x128xf32>
    %1828 = vector.broadcast %112 : f32 to vector<1x128xf32>
    %1829 = arith.mulf %1805, %1828 : vector<1x128xf32>
    %1830 = arith.addf %1827, %1829 : vector<1x128xf32>
    %1831 = vector.broadcast %117 : f32 to vector<1x128xf32>
    %1832 = arith.addf %1830, %1831 : vector<1x128xf32>
    %c3_418 = arith.constant 3 : index
    %c2_419 = arith.constant 2 : index
    %c0_420 = arith.constant 0 : index
    %1833 = vector.load %arg5[%c3_418, %c2_419, %c0_420] : memref<4x4x128xf32, #tpu.memory_space<vmem>>, vector<1x1x128xf32>
    %1834 = vector.shape_cast %1833 : vector<1x1x128xf32> to vector<1x128xf32>
    %1835 = vector.shape_cast %1832 : vector<1x128xf32> to vector<1x1x128xf32>
    tpu.vector_store %arg5[%c3_418, %c2_419, %c0_420], %1835 {strides = array<i32>} : memref<4x4x128xf32, #tpu.memory_space<vmem>>, vector<1x1x128xf32>,
    %1836 = vector.broadcast %113 : f32 to vector<1x128xf32>
    %1837 = arith.mulf %1790, %1836 : vector<1x128xf32>
    %1838 = vector.broadcast %114 : f32 to vector<1x128xf32>
    %1839 = arith.mulf %1805, %1838 : vector<1x128xf32>
    %1840 = arith.addf %1837, %1839 : vector<1x128xf32>
    %1841 = vector.broadcast %118 : f32 to vector<1x128xf32>
    %1842 = arith.addf %1840, %1841 : vector<1x128xf32>
    %c3_421 = arith.constant 3 : index
    %c3_422 = arith.constant 3 : index
    %c0_423 = arith.constant 0 : index
    %1843 = vector.load %arg5[%c3_421, %c3_422, %c0_423] : memref<4x4x128xf32, #tpu.memory_space<vmem>>, vector<1x1x128xf32>
    %1844 = vector.shape_cast %1843 : vector<1x1x128xf32> to vector<1x128xf32>
    %1845 = vector.shape_cast %1842 : vector<1x128xf32> to vector<1x1x128xf32>
    tpu.vector_store %arg5[%c3_421, %c3_422, %c0_423], %1845 {strides = array<i32>} : memref<4x4x128xf32, #tpu.memory_space<vmem>>, vector<1x1x128xf32>,
    %1846 = arith.extui %1418 : i1 to i32
    %c0_i32_424 = arith.constant 0 : i32
    %1847 = arith.cmpi ne, %1846, %c0_i32_424 : i32
    scf.if %1847 {
      %c0_425 = arith.constant 0 : index
      %c0_426 = arith.constant 0 : index
      %1848 = vector.load %arg6[%c0_425, %c0_426] : memref<8x128xf32, #tpu.memory_space<vmem>>, vector<1x128xf32>
      tpu.vector_store %arg6[%c0_425, %c0_426], %1590 {strides = array<i32>} : memref<8x128xf32, #tpu.memory_space<vmem>>, vector<1x128xf32>,
      %c1_427 = arith.constant 1 : index
      %c0_428 = arith.constant 0 : index
      %1849 = vector.load %arg6[%c1_427, %c0_428] : memref<8x128xf32, #tpu.memory_space<vmem>>, vector<1x128xf32>
      tpu.vector_store %arg6[%c1_427, %c0_428], %1588 {strides = array<i32>} : memref<8x128xf32, #tpu.memory_space<vmem>>, vector<1x128xf32>,
      %c2_429 = arith.constant 2 : index
      %c0_430 = arith.constant 0 : index
      %1850 = vector.load %arg6[%c2_429, %c0_430] : memref<8x128xf32, #tpu.memory_space<vmem>>, vector<2x128xf32>
      tpu.vector_store %arg6[%c2_429, %c0_430], %1737 {strides = array<i32>} : memref<8x128xf32, #tpu.memory_space<vmem>>, vector<2x128xf32>,
      %c4_431 = arith.constant 4 : index
      %c0_432 = arith.constant 0 : index
      %1851 = vector.load %arg6[%c4_431, %c0_432] : memref<8x128xf32, #tpu.memory_space<vmem>>, vector<2x128xf32>
      tpu.vector_store %arg6[%c4_431, %c0_432], %1735 {strides = array<i32>} : memref<8x128xf32, #tpu.memory_space<vmem>>, vector<2x128xf32>,
    } else {
    }
    return
  }
  func.func @transform_0(%arg0: i32) -> i32 {
    %c0_i32 = arith.constant 0 : i32
    %c0_i32_0 = arith.constant 0 : i32
    return %c0_i32 : i32
  }
  func.func @transform_1(%arg0: i32) -> i32 {
    %c0_i32 = arith.constant 0 : i32
    %c0_i32_0 = arith.constant 0 : i32
    return %c0_i32 : i32
  }
  func.func @transform_2(%arg0: i32) -> (i32, i32) {
    %c0_i32 = arith.constant 0 : i32
    %c0_i32_0 = arith.constant 0 : i32
    %c0_i32_1 = arith.constant 0 : i32
    return %c0_i32, %c0_i32_0 : i32, i32
  }
  func.func @transform_3(%arg0: i32) -> (i32, i32, i32) {
    %c0_i32 = arith.constant 0 : i32
    %c0_i32_0 = arith.constant 0 : i32
    %c0_i32_1 = arith.constant 0 : i32
    return %arg0, %c0_i32, %c0_i32_0 : i32, i32, i32
  }
  func.func @transform_4(%arg0: i32) -> (i32, i32, i32) {
    %c0_i32 = arith.constant 0 : i32
    %c0_i32_0 = arith.constant 0 : i32
    %c0_i32_1 = arith.constant 0 : i32
    return %arg0, %c0_i32, %c0_i32_0 : i32, i32, i32
  }
  func.func @transform_5(%arg0: i32) -> (i32, i32) {
    %c0_i32 = arith.constant 0 : i32
    %c0_i32_0 = arith.constant 0 : i32
    %c0_i32_1 = arith.constant 0 : i32
    return %c0_i32, %c0_i32_0 : i32, i32
  }
}

</mosaic_0001>

<llo_original>
// kernel: traffic_rollout.1
$region0: #{traffic_rollout.1}
  #allocation0 [shape = 'u32[]', space=smem, size = 0x4, offset = 0x4, fixed_abs, tag = 'smem constant byte address 0x4 - core index']
  #allocation1 [shape = 'u32[144,128]{1,0:T(1,128)}', space=vmem, size = 0x12000, scoped, tag = 'internal scratch']
  #allocation2 [shape = 'f32[8,128]{1,0:T(8,128)}', space=vmem, size = 0x1000, scoped, tag = 'scratch operand']
  #allocation3 [shape = 's32[1]{0:T(128)S(6)}', space=smem, size = 0x200, scoped, tag = 'scoped memory for traffic_rollout.1']
  %s0 = inlined_call_operand.vmem [shape: f32[128], index: 0, kind: input, shape index: {}]
  %s1 = inlined_call_operand.<no memory space> [shape: s32[1], index: 1, kind: input, shape index: {}]
  %s2 = inlined_call_operand.vmem [shape: f32[8,128], index: 2, kind: input, shape index: {}]
  %s3 = inlined_call_operand.vmem [shape: f32[12,16,128], index: 3, kind: input, shape index: {}]
  %s4 = inlined_call_operand.vmem [shape: f32[12,4,128], index: 4, kind: output, shape index: {0}]
  %s5 = inlined_call_operand.hbm [shape: f32[8,128], index: 5, kind: output, shape index: {1}]
  %6 = xla_tuple %s4, %s5
  %s7 = sld [smem:[#allocation0]]
  $region81: #{traffic_rollout.1} parent=0
    _
  %s9 = ssub.s32 1, %s7
  %s10 = scalar_select 0, %s9, %s7
  %11 = sst [smem:[#allocation3]] %s1
  $region1: #{traffic_rollout.1} parent=0
    #allocation4 [shape = 'u8[512]{0}', space=smem, size = 0x200, scoped, tag = 'input window, operand 0, single buffered']
    #allocation5 [shape = 's32[2]{0}', space=sflag, size = 0x8, scoped, tag = 'scoped memory for traffic_rollout.1']
    #allocation6 [shape = 's32[2]{0}', space=sflag, size = 0x8, scoped, tag = 'scoped memory for traffic_rollout.1']
    #allocation7 [shape = 'u8[4096]{0}', space=vmem, size = 0x1000, scoped, tag = 'output window, operand 1, single buffered']
    %12 = vsyncpa [#allocation6], 0
    %13 = vsyncpa [#allocation5], 0
    loop: start=0, step=1, limit=5
    $region2: #{traffic_rollout.1} parent=1 // loop_pre_header
      _
    $region3: #{traffic_rollout.1} parent=1 // loop_header
      %s15 = sphi 0, %s19
      %p16 = scmp.ge.s32.totalorder %s15, 5
      %s23 = sphi 0, %s23
      %s25 = sphi 0, %s23
      %s26 = sphi 0, %s25
      %s40 = sphi 0, %s26
      %s44 = sphi 0, %s44
      %s46 = sphi 0, %s44
      %s47 = sphi 0, %s46
      %s61 = sphi 0, %s47
      %s65 = sphi 0, %s65
      %s67 = sphi 0, %s65
      %s68 = sphi 0, %s67
      %s82 = sphi 0, %s68
      %s88 = sphi 0, %s90
      %s91 = sphi 0, %s88
      %s92 = sphi 0, %s91
      %s108 = sphi 0, %s92
      %s114 = sphi 0, %s116
      %s117 = sphi 0, %s114
      %s118 = sphi 0, %s117
      %s134 = sphi 0, %s118
      %s138 = sphi 0, %s138
      %s140 = sphi 0, %s138
      %s141 = sphi 0, %s140
      %s155 = sphi 0, %s141
    $region4: #{traffic_rollout.1} parent=1 // loop_header_branch
      %18 = sbr.rel (%p16) target = $region8
    $region5: #{traffic_rollout.1} parent=1 // loop_body
      %s20 = ssub.s32 %s15, 1
      %s21 = ssub.s32 %s15, 2
      %s22 = sadd.s32 %s15, 1
      %s24 = sadd.s32 %s23, 1
      %p27 = scmp.eq.s32.totalorder %s15, 2
      %p28 = scmp.ne.s32.totalorder %s23, %s25
      %p29 = scmp.eq.s32.totalorder %s15, 0
      %p30 = por %p28, %p29
      %p31 = scmp.ne.s32.totalorder %s23, %s25
      %p32 = scmp.eq.s32.totalorder %s20, 2
      %p33 = por %p31, %p32
      %p34 = scmp.ne.s32.totalorder %s25, %s26
      %p35 = scmp.eq.s32.totalorder %s20, 0
      %p36 = por %p34, %p35
      %p37 = scmp.ne.s32.totalorder %s25, %s26
      %p38 = scmp.eq.s32.totalorder %s21, 2
      %p39 = por %p37, %p38
      %p41 = scmp.ne.s32.totalorder %s26, %s40
      %p42 = scmp.eq.s32.totalorder %s21, 0
      %p43 = por %p41, %p42
      %s45 = sadd.s32 %s44, 1
      %p48 = scmp.eq.s32.totalorder %s15, 2
      %p49 = scmp.ne.s32.totalorder %s44, %s46
      %p50 = scmp.eq.s32.totalorder %s15, 0
      %p51 = por %p49, %p50
      %p52 = scmp.ne.s32.totalorder %s44, %s46
      %p53 = scmp.eq.s32.totalorder %s20, 2
      %p54 = por %p52, %p53
      %p55 = scmp.ne.s32.totalorder %s46, %s47
      %p56 = scmp.eq.s32.totalorder %s20, 0
      %p57 = por %p55, %p56
      %p58 = scmp.ne.s32.totalorder %s46, %s47
      %p59 = scmp.eq.s32.totalorder %s21, 2
      %p60 = por %p58, %p59
      %p62 = scmp.ne.s32.totalorder %s47, %s61
      %p63 = scmp.eq.s32.totalorder %s21, 0
      %p64 = por %p62, %p63
      %s66 = sadd.s32 %s65, 1
      %p69 = scmp.eq.s32.totalorder %s15, 2
      %p70 = scmp.ne.s32.totalorder %s65, %s67
      %p71 = scmp.eq.s32.totalorder %s15, 0
      %p72 = por %p70, %p71
      %p73 = scmp.ne.s32.totalorder %s65, %s67
      %p74 = scmp.eq.s32.totalorder %s20, 2
      %p75 = por %p73, %p74
      %p76 = scmp.ne.s32.totalorder %s67, %s68
      %p77 = scmp.eq.s32.totalorder %s20, 0
      %p78 = por %p76, %p77
      %p79 = scmp.ne.s32.totalorder %s67, %s68
      %p80 = scmp.eq.s32.totalorder %s21, 2
      %p81 = por %p79, %p80
      %p83 = scmp.ne.s32.totalorder %s68, %s82
      %p84 = scmp.eq.s32.totalorder %s21, 0
      %p85 = por %p83, %p84
      %s86 = ssub.s32 %s15, %s22
      %p87 = scmp.eq.s32.totalorder %s86, 0
      %s89 = sadd.s32 %s88, 1
      %s90 = scalar_select %p87, %s88, %s89
      %p93 = pneg %p87
      %p94 = scmp.eq.s32.totalorder %s15, 2
      %p95 = por %p93, %p94
      %p96 = scmp.ne.s32.totalorder %s88, %s91
      %p97 = scmp.eq.s32.totalorder %s15, 0
      %p98 = por %p96, %p97
      %p99 = scmp.ne.s32.totalorder %s88, %s91
      %p100 = scmp.eq.s32.totalorder %s20, 2
      %p101 = por %p99, %p100
      %p102 = scmp.ne.s32.totalorder %s91, %s92
      %p103 = scmp.eq.s32.totalorder %s20, 0
      %p104 = por %p102, %p103
      %p105 = scmp.ne.s32.totalorder %s91, %s92
      %p106 = scmp.eq.s32.totalorder %s21, 2
      %p107 = por %p105, %p106
      %p109 = scmp.ne.s32.totalorder %s92, %s108
      %p110 = scmp.eq.s32.totalorder %s21, 0
      %p111 = por %p109, %p110
      %s112 = ssub.s32 %s15, %s22
      %p113 = scmp.eq.s32.totalorder %s112, 0
      %s115 = sadd.s32 %s114, 1
      %s116 = scalar_select %p113, %s114, %s115
      %p119 = pneg %p113
      %p120 = scmp.eq.s32.totalorder %s15, 2
      %p121 = por %p119, %p120
      %p122 = scmp.ne.s32.totalorder %s114, %s117
      %p123 = scmp.eq.s32.totalorder %s15, 0
      %p124 = por %p122, %p123
      %p125 = scmp.ne.s32.totalorder %s114, %s117
      %p126 = scmp.eq.s32.totalorder %s20, 2
      %p127 = por %p125, %p126
      %p128 = scmp.ne.s32.totalorder %s117, %s118
      %p129 = scmp.eq.s32.totalorder %s20, 0
      %p130 = por %p128, %p129
      %p131 = scmp.ne.s32.totalorder %s117, %s118
      %p132 = scmp.eq.s32.totalorder %s21, 2
      %p133 = por %p131, %p132
      %p135 = scmp.ne.s32.totalorder %s118, %s134
      %p136 = scmp.eq.s32.totalorder %s21, 0
      %p137 = por %p135, %p136
      %s139 = sadd.s32 %s138, 1
      %p142 = scmp.eq.s32.totalorder %s15, 2
      %p143 = scmp.ne.s32.totalorder %s138, %s140
      %p144 = scmp.eq.s32.totalorder %s15, 0
      %p145 = por %p143, %p144
      %p146 = scmp.ne.s32.totalorder %s138, %s140
      %p147 = scmp.eq.s32.totalorder %s20, 2
      %p148 = por %p146, %p147
      %p149 = scmp.ne.s32.totalorder %s140, %s141
      %p150 = scmp.eq.s32.totalorder %s20, 0
      %p151 = por %p149, %p150
      %p152 = scmp.ne.s32.totalorder %s140, %s141
      %p153 = scmp.eq.s32.totalorder %s21, 2
      %p154 = por %p152, %p153
      %p156 = scmp.ne.s32.totalorder %s141, %s155
      %p157 = scmp.eq.s32.totalorder %s21, 0
      %p158 = por %p156, %p157
      %p159 = scmp.le.s32.totalorder 1, %s15
      %p160 = scmp.lt.s32.totalorder %s15, 4
      %p161 = pnand %p159, %p160
      %p162 = pneg %p161
      // Predicated region
      $region9: #{traffic_rollout.1} parent=5 // pred_check
        _
      $region10: #{traffic_rollout.1} parent=5 // pred_check_branch
        %164 = sbr.rel (%p161) target = $region12
      $region11: #{traffic_rollout.1} parent=5 // pred_region
        %s165 = ssub.s32 %s15, 1
        // Predicated region
        $region13: #{traffic_rollout.1} parent=11 // pred_check
          %p166 = pneg %p36
        $region14: #{traffic_rollout.1} parent=11 // pred_check_branch
          %168 = sbr.rel (%p166) target = $region16
        $region15: #{traffic_rollout.1} parent=11 // pred_region
          %s170 = ssub.s32 16, 16
          %171 = vsyncadd [#allocation6], %s170
          %s173 = sshll.u32 %s0, 4
          %s174 = int_to_ptr.vmem [resolvable:$true] %s173
          %176 = dma.vmem_to_smem %s174, 16, [#allocation4], [#allocation6]
        $region16: #{traffic_rollout.1} parent=11 // pred_fallthru
          _
        // Predicated region
        $region17: #{traffic_rollout.1} parent=11 // pred_check
          %p177 = pneg %p57
        $region18: #{traffic_rollout.1} parent=11 // pred_check_branch
          %179 = sbr.rel (%p177) target = $region20
        $region19: #{traffic_rollout.1} parent=11 // pred_region
          _
        $region20: #{traffic_rollout.1} parent=11 // pred_fallthru
          _
        // Predicated region
        $region21: #{traffic_rollout.1} parent=11 // pred_check
          %p180 = pneg %p78
        $region22: #{traffic_rollout.1} parent=11 // pred_check_branch
          %182 = sbr.rel (%p180) target = $region24
        $region23: #{traffic_rollout.1} parent=11 // pred_region
          _
        $region24: #{traffic_rollout.1} parent=11 // pred_fallthru
          _
      $region12: #{traffic_rollout.1} parent=5 // pred_fallthru
        _
      %p183 = scmp.lt.s32.totalorder %s15, 3
      // Predicated region
      $region25: #{traffic_rollout.1} parent=5 // pred_check
        %p184 = pneg %p183
      $region26: #{traffic_rollout.1} parent=5 // pred_check_branch
        %186 = sbr.rel (%p184) target = $region28
      $region27: #{traffic_rollout.1} parent=5 // pred_region
        // Predicated region
        $region29: #{traffic_rollout.1} parent=27 // pred_check
          %p187 = pneg %p98
        $region30: #{traffic_rollout.1} parent=27 // pred_check_branch
          %189 = sbr.rel (%p187) target = $region32
        $region31: #{traffic_rollout.1} parent=27 // pred_region
          %s190 = smul.u32 4, %s15
          %p191 = scmp.lt.s32.totalorder %s190, 11
          %s192 = scalar_select %p191, %s190, 11
          %s193 = smul.addr %s192, 2
          %s194 = smul.addr %s193, 8
          %s195 = scalar_lea.vmem %s3, %s194
          %s196 = smul.u32 4, %s15
        $region32: #{traffic_rollout.1} parent=27 // pred_fallthru
          _
      $region28: #{traffic_rollout.1} parent=5 // pred_fallthru
        _
      %p197 = scmp.le.s32.totalorder 1, %s15
      %p198 = scmp.lt.s32.totalorder %s15, 4
      %p199 = pnand %p197, %p198
      %p200 = pneg %p199
      // Predicated region
      $region33: #{traffic_rollout.1} parent=5 // pred_check
        _
      $region34: #{traffic_rollout.1} parent=5 // pred_check_branch
        %202 = sbr.rel (%p199) target = $region36
      $region35: #{traffic_rollout.1} parent=5 // pred_region
        %s203 = ssub.s32 %s15, 1
        // Predicated region
        $region37: #{traffic_rollout.1} parent=35 // pred_check
          %p204 = pneg %p36
        $region38: #{traffic_rollout.1} parent=35 // pred_check_branch
          %206 = sbr.rel (%p204) target = $region40
        $region39: #{traffic_rollout.1} parent=35 // pred_region
          %207 = dma.done [#allocation6], 16
        $region40: #{traffic_rollout.1} parent=35 // pred_fallthru
          _
        %208 = sfence
        %p209 = pneg %p36
        %p210 = pneg %p33
        %p211 = pneg %p57
        %p212 = pneg %p54
        %p213 = pneg %p78
        %p214 = pneg %p75
        %s215 = smul.u32 4, %s20
        %p216 = scmp.lt.s32.totalorder %s215, 11
        %s217 = scalar_select %p216, %s215, 11
        %s218 = smul.addr %s217, 2
        %s219 = smul.addr %s218, 8
        %s220 = scalar_lea.vmem %s3, %s219
        %p221 = pneg %p104
        %p222 = pneg %p101
        %p223 = pneg %p130
        %p224 = pneg %p127
        %s225 = smul.u32 4, %s20
        %p226 = scmp.lt.s32.totalorder %s225, 11
        %s227 = scalar_select %p226, %s225, 11
        %s228 = smul.addr %s227, 4
        %s229 = scalar_lea.vmem %s4, %s228
        %p230 = pneg %p151
        %p231 = pneg %p148
        %s232 = smul.u32 4, %s20
        %p233 = scmp.lt.s32.totalorder %s232, 11
        %s234 = scalar_select %p233, %s232, 11
        %s235 = smul.addr %s234, 2
        %s236 = smul.addr %s235, 8
        %s237 = scalar_lea.vmem %s3, %s236
        %s238 = smul.u32 4, %s20
        %s239 = smul.u32 4, %s20
        %p240 = scmp.lt.s32.totalorder %s239, 11
        %s241 = scalar_select %p240, %s239, 11
        %s242 = smul.addr %s241, 4
        %s243 = scalar_lea.vmem %s4, %s242
        %s244 = smul.u32 4, %s20
        %p245 = scmp.eq.s32.totalorder %s20, 0
        // Predicated region
        $region41: #{traffic_rollout.1} parent=35 // pred_check
          %p246 = pneg %p245
        $region42: #{traffic_rollout.1} parent=35 // pred_check_branch
          %248 = sbr.rel (%p246) target = $region44
        $region43: #{traffic_rollout.1} parent=35 // pred_region
          %v249 = vld [vmem:[%s2] sm:$0xff]
          %250 = vst [vmem:[#allocation7] sm:$0xff] %v249
        $region44: #{traffic_rollout.1} parent=35 // pred_fallthru
          _
        %s251 = sld [smem:[#allocation4]]
        %s252 = sld [smem:[#allocation4 + $0x1]]
        %s253 = sld [smem:[#allocation4 + $0x2]]
        %s254 = sld [smem:[#allocation4 + $0x3]]
        %s255 = sld [smem:[#allocation4 + $0x4]]
        %s256 = sld [smem:[#allocation4 + $0x5]]
        %s257 = sld [smem:[#allocation4 + $0x6]]
        %s258 = sld [smem:[#allocation4 + $0x7]]
        %s259 = sld [smem:[#allocation4 + $0x8]]
        %s260 = sld [smem:[#allocation4 + $0x9]]
        %s261 = sld [smem:[#allocation4 + $0xa]]
        %s262 = sld [smem:[#allocation4 + $0xb]]
        %s263 = sld [smem:[#allocation4 + $0xc]]
        %s264 = sld [smem:[#allocation4 + $0xd]]
        %s265 = sld [smem:[#allocation4 + $0xe]]
        %s266 = sld [smem:[#allocation4 + $0xf]]
        %s267 = sld [smem:[#allocation4 + $0x10]]
        %s268 = sld [smem:[#allocation4 + $0x11]]
        %s269 = sld [smem:[#allocation4 + $0x12]]
        %s270 = sld [smem:[#allocation4 + $0x13]]
        %s271 = sld [smem:[#allocation4 + $0x14]]
        %s272 = sld [smem:[#allocation4 + $0x15]]
        %s273 = sld [smem:[#allocation4 + $0x16]]
        %s274 = sld [smem:[#allocation4 + $0x17]]
        %s275 = sld [smem:[#allocation4 + $0x18]]
        %s276 = sld [smem:[#allocation4 + $0x19]]
        %s277 = sld [smem:[#allocation4 + $0x1a]]
        %s278 = sld [smem:[#allocation4 + $0x1b]]
        %s279 = sld [smem:[#allocation4 + $0x1c]]
        %s280 = sld [smem:[#allocation4 + $0x1d]]
        %s281 = sld [smem:[#allocation4 + $0x1e]]
        %s282 = sld [smem:[#allocation4 + $0x1f]]
        %s283 = sld [smem:[#allocation4 + $0x20]]
        %s284 = sld [smem:[#allocation4 + $0x21]]
        %s285 = sld [smem:[#allocation4 + $0x22]]
        %s286 = sld [smem:[#allocation4 + $0x23]]
        %s287 = sld [smem:[#allocation4 + $0x24]]
        %s288 = sld [smem:[#allocation4 + $0x25]]
        %s289 = sld [smem:[#allocation4 + $0x26]]
        %s290 = sld [smem:[#allocation4 + $0x27]]
        %s291 = sld [smem:[#allocation4 + $0x28]]
        %s292 = sld [smem:[#allocation4 + $0x29]]
        %s293 = sld [smem:[#allocation4 + $0x2a]]
        %s294 = sld [smem:[#allocation4 + $0x2b]]
        %s295 = sld [smem:[#allocation4 + $0x2c]]
        %s296 = sld [smem:[#allocation4 + $0x2d]]
        %s297 = sld [smem:[#allocation4 + $0x2e]]
        %s298 = sld [smem:[#allocation4 + $0x2f]]
        %s299 = sld [smem:[#allocation4 + $0x30]]
        %s300 = sld [smem:[#allocation4 + $0x31]]
        %s301 = sld [smem:[#allocation4 + $0x32]]
        %s302 = sld [smem:[#allocation4 + $0x33]]
        %s303 = sld [smem:[#allocation4 + $0x34]]
        %s304 = sld [smem:[#allocation4 + $0x35]]
        %s305 = sld [smem:[#allocation4 + $0x36]]
        %s306 = sld [smem:[#allocation4 + $0x37]]
        %s307 = sld [smem:[#allocation4 + $0x38]]
        %s308 = sld [smem:[#allocation4 + $0x39]]
        %s309 = sld [smem:[#allocation4 + $0x3a]]
        %s310 = sld [smem:[#allocation4 + $0x3b]]
        %s311 = sld [smem:[#allocation4 + $0x3c]]
        %s312 = sld [smem:[#allocation4 + $0x3d]]
        %s313 = sld [smem:[#allocation4 + $0x3e]]
        %s314 = sld [smem:[#allocation4 + $0x3f]]
        %s315 = sld [smem:[#allocation4 + $0x40]]
        %s316 = sld [smem:[#allocation4 + $0x41]]
        %s317 = sld [smem:[#allocation4 + $0x42]]
        %s318 = sld [smem:[#allocation4 + $0x43]]
        %s319 = sld [smem:[#allocation4 + $0x44]]
        %s320 = sld [smem:[#allocation4 + $0x45]]
        %s321 = sld [smem:[#allocation4 + $0x46]]
        %s322 = sld [smem:[#allocation4 + $0x47]]
        %s323 = sld [smem:[#allocation4 + $0x48]]
        %s324 = sld [smem:[#allocation4 + $0x49]]
        %s325 = sld [smem:[#allocation4 + $0x4a]]
        %s326 = sld [smem:[#allocation4 + $0x4b]]
        %s327 = sld [smem:[#allocation4 + $0x4c]]
        %s328 = sld [smem:[#allocation4 + $0x4d]]
        %s329 = sld [smem:[#allocation4 + $0x4e]]
        %s330 = sld [smem:[#allocation4 + $0x4f]]
        %s331 = sld [smem:[#allocation4 + $0x50]]
        %s332 = sld [smem:[#allocation4 + $0x51]]
        %s333 = sld [smem:[#allocation4 + $0x52]]
        %s334 = sld [smem:[#allocation4 + $0x53]]
        %s335 = sld [smem:[#allocation4 + $0x54]]
        %s336 = sld [smem:[#allocation4 + $0x55]]
        %s337 = sld [smem:[#allocation4 + $0x56]]
        %s338 = sld [smem:[#allocation4 + $0x57]]
        %s339 = sld [smem:[#allocation4 + $0x58]]
        %s340 = sld [smem:[#allocation4 + $0x59]]
        %s341 = sld [smem:[#allocation4 + $0x5a]]
        %s342 = sld [smem:[#allocation4 + $0x5b]]
        %s343 = sld [smem:[#allocation4 + $0x5c]]
        %s344 = sld [smem:[#allocation4 + $0x5d]]
        %s345 = sld [smem:[#allocation4 + $0x5e]]
        %s346 = sld [smem:[#allocation4 + $0x5f]]
        %s347 = sld [smem:[#allocation4 + $0x60]]
        %s348 = sld [smem:[#allocation4 + $0x61]]
        %s349 = sld [smem:[#allocation4 + $0x62]]
        %s350 = sld [smem:[#allocation4 + $0x63]]
        %s351 = sld [smem:[#allocation4 + $0x64]]
        %s352 = sld [smem:[#allocation4 + $0x65]]
        %s353 = sld [smem:[#allocation4 + $0x66]]
        %s354 = sld [smem:[#allocation4 + $0x67]]
        %s355 = sld [smem:[#allocation4 + $0x68]]
        %s356 = sld [smem:[#allocation4 + $0x69]]
        %s357 = sld [smem:[#allocation4 + $0x6a]]
        %s358 = sld [smem:[#allocation4 + $0x6b]]
        %s359 = sld [smem:[#allocation4 + $0x6c]]
        %s360 = sld [smem:[#allocation4 + $0x6d]]
        %s361 = sld [smem:[#allocation4 + $0x6e]]
        %s362 = sld [smem:[#allocation4 + $0x6f]]
        %s363 = sld [smem:[#allocation4 + $0x70]]
        %s364 = sld [smem:[#allocation4 + $0x71]]
        %s365 = sld [smem:[#allocation4 + $0x72]]
        %s366 = sld [smem:[#allocation4 + $0x73]]
        %s367 = sld [smem:[#allocation3]]
        %s368 = smul.u32 %s20, 4
        %p369 = scmp.lt.s32.totalorder %s368, %s367
        %v370 = vld [vmem:[%s237] sm:$0x1]
        %v371 = vld [vmem:[%s237 + $0x1] sm:$0x1]
        %v372 = vld [vmem:[%s237 + $0x2] sm:$0x1]
        %v373 = vld [vmem:[%s237 + $0x3] sm:$0x1]
        %v374 = vld [vmem:[%s237 + $0x4] sm:$0x1]
        %v375 = vld [vmem:[%s237 + $0x5] sm:$0x1]
        %v376 = vld [vmem:[%s237 + $0x6] sm:$0x1]
        %v377 = vld [vmem:[%s237 + $0x7] sm:$0x1]
        %v378 = vld [vmem:[%s237 + $0x8] sm:$0x1]
        %v379 = vld [vmem:[#allocation7] sm:$0x1]
        %v380 = vld [vmem:[#allocation7 + $0x1] sm:$0x1]
        %v381 = vld [vmem:[#allocation7 + $0x2] sm:$0x1]
        %v382 = vld [vmem:[#allocation7 + $0x3] sm:$0x1]
        %v383 = vld [vmem:[#allocation7 + $0x4] sm:$0x3]
        %v384 = vstv %s251
        %v385 = vmul.f32 %v378, %v384
        %v386 = vstv %s252
        %v387 = vadd.f32 %v385, %v386
        %v388 = vstv %s253
        %v389 = vmul.f32 %v370, %v388
        %v390 = vstv %s254
        %v391 = vmul.f32 %v371, %v390
        %v392 = vadd.f32 %v389, %v391
        %v393 = vstv %s255
        %v394 = vmul.f32 %v372, %v393
        %v395 = vadd.f32 %v392, %v394
        %v396 = vstv %s256
        %v397 = vmul.f32 %v373, %v396
        %v398 = vadd.f32 %v395, %v397
        %v399 = vstv %s257
        %v400 = vmul.f32 %v374, %v399
        %v401 = vadd.f32 %v398, %v400
        %v402 = vstv %s258
        %v403 = vmul.f32 %v375, %v402
        %v404 = vadd.f32 %v401, %v403
        %v405 = vstv %s259
        %v406 = vmul.f32 %v376, %v405
        %v407 = vadd.f32 %v404, %v406
        %v408 = vstv %s260
        %v409 = vmul.f32 %v377, %v408
        %v410 = vadd.f32 %v407, %v409
        %v411 = vstv %s285
        %v412 = vmul.f32 %v379, %v411
        %v413 = vadd.f32 %v410, %v412
        %v414 = vstv %s289
        %v415 = vadd.f32 %v413, %v414
        %v416 = vmul.f32 %v415, 0.5
        %417 = vst [vmem:[#allocation2] sm:$0x1] %v416
        %v418 = vstv %s261
        %v419 = vmul.f32 %v370, %v418
        %v420 = vstv %s262
        %v421 = vmul.f32 %v371, %v420
        %v422 = vadd.f32 %v419, %v421
        %v423 = vstv %s263
        %v424 = vmul.f32 %v372, %v423
        %v425 = vadd.f32 %v422, %v424
        %v426 = vstv %s264
        %v427 = vmul.f32 %v373, %v426
        %v428 = vadd.f32 %v425, %v427
        %v429 = vstv %s265
        %v430 = vmul.f32 %v374, %v429
        %v431 = vadd.f32 %v428, %v430
        %v432 = vstv %s266
        %v433 = vmul.f32 %v375, %v432
        %v434 = vadd.f32 %v431, %v433
        %v435 = vstv %s267
        %v436 = vmul.f32 %v376, %v435
        %v437 = vadd.f32 %v434, %v436
        %v438 = vstv %s268
        %v439 = vmul.f32 %v377, %v438
        %v440 = vadd.f32 %v437, %v439
        %v441 = vstv %s286
        %v442 = vmul.f32 %v379, %v441
        %v443 = vadd.f32 %v440, %v442
        %v444 = vstv %s290
        %v445 = vadd.f32 %v443, %v444
        %v446 = vmul.f32 %v445, 0.5
        %447 = vst [vmem:[#allocation2 + $0x1] sm:$0x1] %v446
        %v448 = vstv %s269
        %v449 = vmul.f32 %v370, %v448
        %v450 = vstv %s270
        %v451 = vmul.f32 %v371, %v450
        %v452 = vadd.f32 %v449, %v451
        %v453 = vstv %s271
        %v454 = vmul.f32 %v372, %v453
        %v455 = vadd.f32 %v452, %v454
        %v456 = vstv %s272
        %v457 = vmul.f32 %v373, %v456
        %v458 = vadd.f32 %v455, %v457
        %v459 = vstv %s273
        %v460 = vmul.f32 %v374, %v459
        %v461 = vadd.f32 %v458, %v460
        %v462 = vstv %s274
        %v463 = vmul.f32 %v375, %v462
        %v464 = vadd.f32 %v461, %v463
        %v465 = vstv %s275
        %v466 = vmul.f32 %v376, %v465
        %v467 = vadd.f32 %v464, %v466
        %v468 = vstv %s276
        %v469 = vmul.f32 %v377, %v468
        %v470 = vadd.f32 %v467, %v469
        %v471 = vstv %s287
        %v472 = vmul.f32 %v379, %v471
        %v473 = vadd.f32 %v470, %v472
        %v474 = vstv %s291
        %v475 = vadd.f32 %v473, %v474
        %476 = vst [vmem:[#allocation2 + $0x2] sm:$0x1] %v475
        %v477 = vstv %s277
        %v478 = vmul.f32 %v370, %v477
        %v479 = vstv %s278
        %v480 = vmul.f32 %v371, %v479
        %v481 = vadd.f32 %v478, %v480
        %v482 = vstv %s279
        %v483 = vmul.f32 %v372, %v482
        %v484 = vadd.f32 %v481, %v483
        %v485 = vstv %s280
        %v486 = vmul.f32 %v373, %v485
        %v487 = vadd.f32 %v484, %v486
        %v488 = vstv %s281
        %v489 = vmul.f32 %v374, %v488
        %v490 = vadd.f32 %v487, %v489
        %v491 = vstv %s282
        %v492 = vmul.f32 %v375, %v491
        %v493 = vadd.f32 %v490, %v492
        %v494 = vstv %s283
        %v495 = vmul.f32 %v376, %v494
        %v496 = vadd.f32 %v493, %v495
        %v497 = vstv %s284
        %v498 = vmul.f32 %v377, %v497
        %v499 = vadd.f32 %v496, %v498
        %v500 = vstv %s288
        %v501 = vmul.f32 %v379, %v500
        %v502 = vadd.f32 %v499, %v501
        %v503 = vstv %s292
        %v504 = vadd.f32 %v502, %v503
        %v505 = vmul.f32 %v504, 0.5
        %506 = vst [vmem:[#allocation2 + $0x3] sm:$0x1] %v505
        %v507 = vld [vmem:[#allocation2] sm:$0xf]
        %v508 = vtanh.pop %v507
        %v509 = vmul.f32 %v508, 0.5
        %v510 = vadd.f32 %v509, 0.5
        %v512 = vrot.slane %v380, 7
        %v514 = vmul.f32 %v510, %v512
        %v516 = vrot.slane %v508, 2
        %v518 = vmul.f32 %v510, %v516
        %v520 = vrot.slane %v518, 7
        %v522 = vadd.f32 %v514, %v520
        %v523 = vtanh.pop %v522
        %v525 = vrot.slane %v523, 6
        %v527 = vmul.f32 %v510, %v525
        %v528 = vstv %s293
        %v529 = vmul.f32 %v387, %v528
        %v530 = vstv %s294
        %v531 = vmul.f32 %v527, %v530
        %v533 = vrot.slane %v531, 3
        %v535 = vadd.f32 %v529, %v533
        %v536 = vstv %s309
        %v537 = vmul.f32 %v381, %v536
        %v538 = vadd.f32 %v535, %v537
        %v539 = vstv %s310
        %v540 = vmul.f32 %v382, %v539
        %v541 = vadd.f32 %v538, %v540
        %v542 = vstv %s325
        %v543 = vadd.f32 %v541, %v542
        %v544 = vmul.f32 %v543, 0.5
        %545 = vst [vmem:[#allocation2] sm:$0x1] %v544
        %v546 = vstv %s295
        %v547 = vmul.f32 %v387, %v546
        %v548 = vstv %s296
        %v549 = vmul.f32 %v527, %v548
        %v551 = vrot.slane %v549, 3
        %v553 = vadd.f32 %v547, %v551
        %v554 = vstv %s311
        %v555 = vmul.f32 %v381, %v554
        %v556 = vadd.f32 %v553, %v555
        %v557 = vstv %s312
        %v558 = vmul.f32 %v382, %v557
        %v559 = vadd.f32 %v556, %v558
        %v560 = vstv %s326
        %v561 = vadd.f32 %v559, %v560
        %v562 = vmul.f32 %v561, 0.5
        %563 = vst [vmem:[#allocation2 + $0x1] sm:$0x1] %v562
        %v564 = vstv %s297
        %v565 = vmul.f32 %v387, %v564
        %v566 = vstv %s298
        %v567 = vmul.f32 %v527, %v566
        %v569 = vrot.slane %v567, 3
        %v571 = vadd.f32 %v565, %v569
        %v572 = vstv %s313
        %v573 = vmul.f32 %v381, %v572
        %v574 = vadd.f32 %v571, %v573
        %v575 = vstv %s314
        %v576 = vmul.f32 %v382, %v575
        %v577 = vadd.f32 %v574, %v576
        %v578 = vstv %s327
        %v579 = vadd.f32 %v577, %v578
        %v580 = vmul.f32 %v579, 0.5
        %581 = vst [vmem:[#allocation2 + $0x2] sm:$0x1] %v580
        %v582 = vstv %s299
        %v583 = vmul.f32 %v387, %v582
        %v584 = vstv %s300
        %v585 = vmul.f32 %v527, %v584
        %v587 = vrot.slane %v585, 3
        %v589 = vadd.f32 %v583, %v587
        %v590 = vstv %s315
        %v591 = vmul.f32 %v381, %v590
        %v592 = vadd.f32 %v589, %v591
        %v593 = vstv %s316
        %v594 = vmul.f32 %v382, %v593
        %v595 = vadd.f32 %v592, %v594
        %v596 = vstv %s328
        %v597 = vadd.f32 %v595, %v596
        %v598 = vmul.f32 %v597, 0.5
        %599 = vst [vmem:[#allocation2 + $0x3] sm:$0x1] %v598
        %v600 = vstv %s301
        %v601 = vmul.f32 %v387, %v600
        %v602 = vstv %s302
        %v603 = vmul.f32 %v527, %v602
        %v605 = vrot.slane %v603, 3
        %v607 = vadd.f32 %v601, %v605
        %v608 = vstv %s317
        %v609 = vmul.f32 %v381, %v608
        %v610 = vadd.f32 %v607, %v609
        %v611 = vstv %s318
        %v612 = vmul.f32 %v382, %v611
        %v613 = vadd.f32 %v610, %v612
        %v614 = vstv %s329
        %v615 = vadd.f32 %v613, %v614
        %616 = vst [vmem:[#allocation2 + $0x4] sm:$0x1] %v615
        %v617 = vstv %s303
        %v618 = vmul.f32 %v387, %v617
        %v619 = vstv %s304
        %v620 = vmul.f32 %v527, %v619
        %v622 = vrot.slane %v620, 3
        %v624 = vadd.f32 %v618, %v622
        %v625 = vstv %s319
        %v626 = vmul.f32 %v381, %v625
        %v627 = vadd.f32 %v624, %v626
        %v628 = vstv %s320
        %v629 = vmul.f32 %v382, %v628
        %v630 = vadd.f32 %v627, %v629
        %v631 = vstv %s330
        %v632 = vadd.f32 %v630, %v631
        %633 = vst [vmem:[#allocation2 + $0x5] sm:$0x1] %v632
        %v634 = vstv %s305
        %v635 = vmul.f32 %v387, %v634
        %v636 = vstv %s306
        %v637 = vmul.f32 %v527, %v636
        %v639 = vrot.slane %v637, 3
        %v641 = vadd.f32 %v635, %v639
        %v642 = vstv %s321
        %v643 = vmul.f32 %v381, %v642
        %v644 = vadd.f32 %v641, %v643
        %v645 = vstv %s322
        %v646 = vmul.f32 %v382, %v645
        %v647 = vadd.f32 %v644, %v646
        %v648 = vstv %s331
        %v649 = vadd.f32 %v647, %v648
        %v650 = vmul.f32 %v649, 0.5
        %651 = vst [vmem:[#allocation2 + $0x6] sm:$0x1] %v650
        %v652 = vstv %s307
        %v653 = vmul.f32 %v387, %v652
        %v654 = vstv %s308
        %v655 = vmul.f32 %v527, %v654
        %v657 = vrot.slane %v655, 3
        %v659 = vadd.f32 %v653, %v657
        %v660 = vstv %s323
        %v661 = vmul.f32 %v381, %v660
        %v662 = vadd.f32 %v659, %v661
        %v663 = vstv %s324
        %v664 = vmul.f32 %v382, %v663
        %v665 = vadd.f32 %v662, %v664
        %v666 = vstv %s332
        %v667 = vadd.f32 %v665, %v666
        %v668 = vmul.f32 %v667, 0.5
        %669 = vst [vmem:[#allocation2 + $0x7] sm:$0x1] %v668
        %v670 = vld [vmem:[#allocation2] sm:$0xff]
        %v671 = vtanh.pop %v670
        %v672 = vmul.f32 %v671, 0.5
        %v673 = vadd.f32 %v672, 0.5
        %v675 = vrot.slane %v383, 6
        %v677 = vmul.f32 %v673, %v675
        %v679 = vrot.slane %v671, 4
        %v681 = vmul.f32 %v673, %v679
        %v683 = vrot.slane %v681, 6
        %v685 = vadd.f32 %v677, %v683
        %v686 = vtanh.pop %v685
        %v688 = vrot.slane %v686, 4
        %v690 = vmul.f32 %v673, %v688
        %v691 = vstv %s333
        %v692 = vmul.f32 %v690, %v691
        %v693 = vstv %s334
        %v694 = vmul.f32 %v690, %v693
        %v696 = vrot.slane %v694, 1
        %v698 = vadd.f32 %v692, %v696
        %v699 = vstv %s341
        %v700 = vadd.f32 %v698, %v699
        %v701 = vmax.f32 %v700, 0.0
        %v702 = vstv %s335
        %v703 = vmul.f32 %v690, %v702
        %v704 = vstv %s336
        %v705 = vmul.f32 %v690, %v704
        %v707 = vrot.slane %v705, 1
        %v709 = vadd.f32 %v703, %v707
        %v710 = vstv %s342
        %v711 = vadd.f32 %v709, %v710
        %v712 = vmax.f32 %v711, 0.0
        %v713 = vstv %s337
        %v714 = vmul.f32 %v690, %v713
        %v715 = vstv %s338
        %v716 = vmul.f32 %v690, %v715
        %v718 = vrot.slane %v716, 1
        %v720 = vadd.f32 %v714, %v718
        %v721 = vstv %s343
        %v722 = vadd.f32 %v720, %v721
        %v723 = vmax.f32 %v722, 0.0
        %v724 = vstv %s339
        %v725 = vmul.f32 %v690, %v724
        %v726 = vstv %s340
        %v727 = vmul.f32 %v690, %v726
        %v729 = vrot.slane %v727, 1
        %v731 = vadd.f32 %v725, %v729
        %v732 = vstv %s344
        %v733 = vadd.f32 %v731, %v732
        %v734 = vmax.f32 %v733, 0.0
        %v735 = vstv %s345
        %v736 = vmul.f32 %v701, %v735
        %v737 = vstv %s353
        %v738 = vadd.f32 %v736, %v737
        %v739 = vstv %s346
        %v740 = vmul.f32 %v712, %v739
        %v741 = vadd.f32 %v738, %v740
        %v742 = vstv %s347
        %v743 = vmul.f32 %v723, %v742
        %v744 = vadd.f32 %v741, %v743
        %v745 = vstv %s348
        %v746 = vmul.f32 %v734, %v745
        %v747 = vadd.f32 %v744, %v746
        %v748 = vmax.f32 %v747, 0.0
        %v749 = vstv %s349
        %v750 = vmul.f32 %v701, %v749
        %v751 = vstv %s354
        %v752 = vadd.f32 %v750, %v751
        %v753 = vstv %s350
        %v754 = vmul.f32 %v712, %v753
        %v755 = vadd.f32 %v752, %v754
        %v756 = vstv %s351
        %v757 = vmul.f32 %v723, %v756
        %v758 = vadd.f32 %v755, %v757
        %v759 = vstv %s352
        %v760 = vmul.f32 %v734, %v759
        %v761 = vadd.f32 %v758, %v760
        %v762 = vmax.f32 %v761, 0.0
        %v763 = vstv %s355
        %v764 = vmul.f32 %v748, %v763
        %v765 = vstv %s356
        %v766 = vmul.f32 %v762, %v765
        %v767 = vadd.f32 %v764, %v766
        %v768 = vstv %s363
        %v769 = vadd.f32 %v767, %v768
        %770 = vst [vmem:[%s243 - $0x6] sm:$0x40] %v769
        %v771 = vstv %s357
        %v772 = vmul.f32 %v748, %v771
        %v773 = vstv %s358
        %v774 = vmul.f32 %v762, %v773
        %v775 = vadd.f32 %v772, %v774
        %v776 = vstv %s364
        %v777 = vadd.f32 %v775, %v776
        %778 = vst [vmem:[%s243 - $0x5] sm:$0x40] %v777
        %v779 = vstv %s359
        %v780 = vmul.f32 %v748, %v779
        %v781 = vstv %s360
        %v782 = vmul.f32 %v762, %v781
        %v783 = vadd.f32 %v780, %v782
        %v784 = vstv %s365
        %v785 = vadd.f32 %v783, %v784
        %786 = vst [vmem:[%s243 - $0x4] sm:$0x40] %v785
        %v787 = vstv %s361
        %v788 = vmul.f32 %v748, %v787
        %v789 = vstv %s362
        %v790 = vmul.f32 %v762, %v789
        %v791 = vadd.f32 %v788, %v790
        %v792 = vstv %s366
        %v793 = vadd.f32 %v791, %v792
        %794 = vst [vmem:[%s243 - $0x3] sm:$0x40] %v793
        // Predicated region
        $region45: #{traffic_rollout.1} parent=35 // pred_check
          %p795 = pneg %p369
        $region46: #{traffic_rollout.1} parent=35 // pred_check_branch
          %797 = sbr.rel (%p795) target = $region48
        $region47: #{traffic_rollout.1} parent=35 // pred_region
          %798 = vst [vmem:[#allocation7 - $0x3] sm:$0x8] %v527
          %799 = vst [vmem:[#allocation7] sm:$0x2] %v522
          %800 = vst [vmem:[#allocation7 - $0x4] sm:$0xc0] %v690
          %801 = vst [vmem:[#allocation7 + $0x2] sm:$0xc] %v685
        $region48: #{traffic_rollout.1} parent=35 // pred_fallthru
          _
        %s802 = sadd.s32 %s368, 1
        %p803 = scmp.lt.s32.totalorder %s802, %s367
        %s804 = scalar_lea.vmem %s237, 16
        %v805 = vld [vmem:[%s804] sm:$0x1]
        %v806 = vld [vmem:[%s804 + $0x1] sm:$0x1]
        %v807 = vld [vmem:[%s804 + $0x2] sm:$0x1]
        %v808 = vld [vmem:[%s804 + $0x3] sm:$0x1]
        %v809 = vld [vmem:[%s804 + $0x4] sm:$0x1]
        %v810 = vld [vmem:[%s804 + $0x5] sm:$0x1]
        %v811 = vld [vmem:[%s804 + $0x6] sm:$0x1]
        %v812 = vld [vmem:[%s804 + $0x7] sm:$0x1]
        %v813 = vld [vmem:[%s804 + $0x8] sm:$0x1]
        %v814 = vld [vmem:[#allocation7] sm:$0x1]
        %v815 = vld [vmem:[#allocation7 + $0x1] sm:$0x1]
        %v816 = vld [vmem:[#allocation7 + $0x2] sm:$0x1]
        %v817 = vld [vmem:[#allocation7 + $0x3] sm:$0x1]
        %v818 = vld [vmem:[#allocation7 + $0x4] sm:$0x3]
        %v819 = vmul.f32 %v813, %v384
        %v820 = vadd.f32 %v819, %v386
        %v821 = vmul.f32 %v805, %v388
        %v822 = vmul.f32 %v806, %v390
        %v823 = vadd.f32 %v821, %v822
        %v824 = vmul.f32 %v807, %v393
        %v825 = vadd.f32 %v823, %v824
        %v826 = vmul.f32 %v808, %v396
        %v827 = vadd.f32 %v825, %v826
        %v828 = vmul.f32 %v809, %v399
        %v829 = vadd.f32 %v827, %v828
        %v830 = vmul.f32 %v810, %v402
        %v831 = vadd.f32 %v829, %v830
        %v832 = vmul.f32 %v811, %v405
        %v833 = vadd.f32 %v831, %v832
        %v834 = vmul.f32 %v812, %v408
        %v835 = vadd.f32 %v833, %v834
        %v836 = vmul.f32 %v814, %v411
        %v837 = vadd.f32 %v835, %v836
        %v838 = vadd.f32 %v837, %v414
        %v839 = vmul.f32 %v838, 0.5
        %840 = vst [vmem:[#allocation2] sm:$0x1] %v839
        %v841 = vmul.f32 %v805, %v418
        %v842 = vmul.f32 %v806, %v420
        %v843 = vadd.f32 %v841, %v842
        %v844 = vmul.f32 %v807, %v423
        %v845 = vadd.f32 %v843, %v844
        %v846 = vmul.f32 %v808, %v426
        %v847 = vadd.f32 %v845, %v846
        %v848 = vmul.f32 %v809, %v429
        %v849 = vadd.f32 %v847, %v848
        %v850 = vmul.f32 %v810, %v432
        %v851 = vadd.f32 %v849, %v850
        %v852 = vmul.f32 %v811, %v435
        %v853 = vadd.f32 %v851, %v852
        %v854 = vmul.f32 %v812, %v438
        %v855 = vadd.f32 %v853, %v854
        %v856 = vmul.f32 %v814, %v441
        %v857 = vadd.f32 %v855, %v856
        %v858 = vadd.f32 %v857, %v444
        %v859 = vmul.f32 %v858, 0.5
        %860 = vst [vmem:[#allocation2 + $0x1] sm:$0x1] %v859
        %v861 = vmul.f32 %v805, %v448
        %v862 = vmul.f32 %v806, %v450
        %v863 = vadd.f32 %v861, %v862
        %v864 = vmul.f32 %v807, %v453
        %v865 = vadd.f32 %v863, %v864
        %v866 = vmul.f32 %v808, %v456
        %v867 = vadd.f32 %v865, %v866
        %v868 = vmul.f32 %v809, %v459
        %v869 = vadd.f32 %v867, %v868
        %v870 = vmul.f32 %v810, %v462
        %v871 = vadd.f32 %v869, %v870
        %v872 = vmul.f32 %v811, %v465
        %v873 = vadd.f32 %v871, %v872
        %v874 = vmul.f32 %v812, %v468
        %v875 = vadd.f32 %v873, %v874
        %v876 = vmul.f32 %v814, %v471
        %v877 = vadd.f32 %v875, %v876
        %v878 = vadd.f32 %v877, %v474
        %879 = vst [vmem:[#allocation2 + $0x2] sm:$0x1] %v878
        %v880 = vmul.f32 %v805, %v477
        %v881 = vmul.f32 %v806, %v479
        %v882 = vadd.f32 %v880, %v881
        %v883 = vmul.f32 %v807, %v482
        %v884 = vadd.f32 %v882, %v883
        %v885 = vmul.f32 %v808, %v485
        %v886 = vadd.f32 %v884, %v885
        %v887 = vmul.f32 %v809, %v488
        %v888 = vadd.f32 %v886, %v887
        %v889 = vmul.f32 %v810, %v491
        %v890 = vadd.f32 %v888, %v889
        %v891 = vmul.f32 %v811, %v494
        %v892 = vadd.f32 %v890, %v891
        %v893 = vmul.f32 %v812, %v497
        %v894 = vadd.f32 %v892, %v893
        %v895 = vmul.f32 %v814, %v500
        %v896 = vadd.f32 %v894, %v895
        %v897 = vadd.f32 %v896, %v503
        %v898 = vmul.f32 %v897, 0.5
        %899 = vst [vmem:[#allocation2 + $0x3] sm:$0x1] %v898
        %v900 = vld [vmem:[#allocation2] sm:$0xf]
        %v901 = vtanh.pop %v900
        %v902 = vmul.f32 %v901, 0.5
        %v903 = vadd.f32 %v902, 0.5
        %v905 = vrot.slane %v815, 7
        %v907 = vmul.f32 %v903, %v905
        %v909 = vrot.slane %v901, 2
        %v911 = vmul.f32 %v903, %v909
        %v913 = vrot.slane %v911, 7
        %v915 = vadd.f32 %v907, %v913
        %v916 = vtanh.pop %v915
        %v918 = vrot.slane %v916, 6
        %v920 = vmul.f32 %v903, %v918
        %v921 = vmul.f32 %v820, %v528
        %v922 = vmul.f32 %v920, %v530
        %v924 = vrot.slane %v922, 3
        %v926 = vadd.f32 %v921, %v924
        %v927 = vmul.f32 %v816, %v536
        %v928 = vadd.f32 %v926, %v927
        %v929 = vmul.f32 %v817, %v539
        %v930 = vadd.f32 %v928, %v929
        %v931 = vadd.f32 %v930, %v542
        %v932 = vmul.f32 %v931, 0.5
        %933 = vst [vmem:[#allocation2] sm:$0x1] %v932
        %v934 = vmul.f32 %v820, %v546
        %v935 = vmul.f32 %v920, %v548
        %v937 = vrot.slane %v935, 3
        %v939 = vadd.f32 %v934, %v937
        %v940 = vmul.f32 %v816, %v554
        %v941 = vadd.f32 %v939, %v940
        %v942 = vmul.f32 %v817, %v557
        %v943 = vadd.f32 %v941, %v942
        %v944 = vadd.f32 %v943, %v560
        %v945 = vmul.f32 %v944, 0.5
        %946 = vst [vmem:[#allocation2 + $0x1] sm:$0x1] %v945
        %v947 = vmul.f32 %v820, %v564
        %v948 = vmul.f32 %v920, %v566
        %v950 = vrot.slane %v948, 3
        %v952 = vadd.f32 %v947, %v950
        %v953 = vmul.f32 %v816, %v572
        %v954 = vadd.f32 %v952, %v953
        %v955 = vmul.f32 %v817, %v575
        %v956 = vadd.f32 %v954, %v955
        %v957 = vadd.f32 %v956, %v578
        %v958 = vmul.f32 %v957, 0.5
        %959 = vst [vmem:[#allocation2 + $0x2] sm:$0x1] %v958
        %v960 = vmul.f32 %v820, %v582
        %v961 = vmul.f32 %v920, %v584
        %v963 = vrot.slane %v961, 3
        %v965 = vadd.f32 %v960, %v963
        %v966 = vmul.f32 %v816, %v590
        %v967 = vadd.f32 %v965, %v966
        %v968 = vmul.f32 %v817, %v593
        %v969 = vadd.f32 %v967, %v968
        %v970 = vadd.f32 %v969, %v596
        %v971 = vmul.f32 %v970, 0.5
        %972 = vst [vmem:[#allocation2 + $0x3] sm:$0x1] %v971
        %v973 = vmul.f32 %v820, %v600
        %v974 = vmul.f32 %v920, %v602
        %v976 = vrot.slane %v974, 3
        %v978 = vadd.f32 %v973, %v976
        %v979 = vmul.f32 %v816, %v608
        %v980 = vadd.f32 %v978, %v979
        %v981 = vmul.f32 %v817, %v611
        %v982 = vadd.f32 %v980, %v981
        %v983 = vadd.f32 %v982, %v614
        %984 = vst [vmem:[#allocation2 + $0x4] sm:$0x1] %v983
        %v985 = vmul.f32 %v820, %v617
        %v986 = vmul.f32 %v920, %v619
        %v988 = vrot.slane %v986, 3
        %v990 = vadd.f32 %v985, %v988
        %v991 = vmul.f32 %v816, %v625
        %v992 = vadd.f32 %v990, %v991
        %v993 = vmul.f32 %v817, %v628
        %v994 = vadd.f32 %v992, %v993
        %v995 = vadd.f32 %v994, %v631
        %996 = vst [vmem:[#allocation2 + $0x5] sm:$0x1] %v995
        %v997 = vmul.f32 %v820, %v634
        %v998 = vmul.f32 %v920, %v636
        %v1000 = vrot.slane %v998, 3
        %v1002 = vadd.f32 %v997, %v1000
        %v1003 = vmul.f32 %v816, %v642
        %v1004 = vadd.f32 %v1002, %v1003
        %v1005 = vmul.f32 %v817, %v645
        %v1006 = vadd.f32 %v1004, %v1005
        %v1007 = vadd.f32 %v1006, %v648
        %v1008 = vmul.f32 %v1007, 0.5
        %1009 = vst [vmem:[#allocation2 + $0x6] sm:$0x1] %v1008
        %v1010 = vmul.f32 %v820, %v652
        %v1011 = vmul.f32 %v920, %v654
        %v1013 = vrot.slane %v1011, 3
        %v1015 = vadd.f32 %v1010, %v1013
        %v1016 = vmul.f32 %v816, %v660
        %v1017 = vadd.f32 %v1015, %v1016
        %v1018 = vmul.f32 %v817, %v663
        %v1019 = vadd.f32 %v1017, %v1018
        %v1020 = vadd.f32 %v1019, %v666
        %v1021 = vmul.f32 %v1020, 0.5
        %1022 = vst [vmem:[#allocation2 + $0x7] sm:$0x1] %v1021
        %v1023 = vld [vmem:[#allocation2] sm:$0xff]
        %v1024 = vtanh.pop %v1023
        %v1025 = vmul.f32 %v1024, 0.5
        %v1026 = vadd.f32 %v1025, 0.5
        %v1028 = vrot.slane %v818, 6
        %v1030 = vmul.f32 %v1026, %v1028
        %v1032 = vrot.slane %v1024, 4
        %v1034 = vmul.f32 %v1026, %v1032
        %v1036 = vrot.slane %v1034, 6
        %v1038 = vadd.f32 %v1030, %v1036
        %v1039 = vtanh.pop %v1038
        %v1041 = vrot.slane %v1039, 4
        %v1043 = vmul.f32 %v1026, %v1041
        %v1044 = vmul.f32 %v1043, %v691
        %v1045 = vmul.f32 %v1043, %v693
        %v1047 = vrot.slane %v1045, 1
        %v1049 = vadd.f32 %v1044, %v1047
        %v1050 = vadd.f32 %v1049, %v699
        %v1051 = vmax.f32 %v1050, 0.0
        %v1052 = vmul.f32 %v1043, %v702
        %v1053 = vmul.f32 %v1043, %v704
        %v1055 = vrot.slane %v1053, 1
        %v1057 = vadd.f32 %v1052, %v1055
        %v1058 = vadd.f32 %v1057, %v710
        %v1059 = vmax.f32 %v1058, 0.0
        %v1060 = vmul.f32 %v1043, %v713
        %v1061 = vmul.f32 %v1043, %v715
        %v1063 = vrot.slane %v1061, 1
        %v1065 = vadd.f32 %v1060, %v1063
        %v1066 = vadd.f32 %v1065, %v721
        %v1067 = vmax.f32 %v1066, 0.0
        %v1068 = vmul.f32 %v1043, %v724
        %v1069 = vmul.f32 %v1043, %v726
        %v1071 = vrot.slane %v1069, 1
        %v1073 = vadd.f32 %v1068, %v1071
        %v1074 = vadd.f32 %v1073, %v732
        %v1075 = vmax.f32 %v1074, 0.0
        %v1076 = vmul.f32 %v1051, %v735
        %v1077 = vadd.f32 %v1076, %v737
        %v1078 = vmul.f32 %v1059, %v739
        %v1079 = vadd.f32 %v1077, %v1078
        %v1080 = vmul.f32 %v1067, %v742
        %v1081 = vadd.f32 %v1079, %v1080
        %v1082 = vmul.f32 %v1075, %v745
        %v1083 = vadd.f32 %v1081, %v1082
        %v1084 = vmax.f32 %v1083, 0.0
        %v1085 = vmul.f32 %v1051, %v749
        %v1086 = vadd.f32 %v1085, %v751
        %v1087 = vmul.f32 %v1059, %v753
        %v1088 = vadd.f32 %v1086, %v1087
        %v1089 = vmul.f32 %v1067, %v756
        %v1090 = vadd.f32 %v1088, %v1089
        %v1091 = vmul.f32 %v1075, %v759
        %v1092 = vadd.f32 %v1090, %v1091
        %v1093 = vmax.f32 %v1092, 0.0
        %v1094 = vmul.f32 %v1084, %v763
        %v1095 = vmul.f32 %v1093, %v765
        %v1096 = vadd.f32 %v1094, %v1095
        %v1097 = vadd.f32 %v1096, %v768
        %s1098 = scalar_lea.vmem %s243, 4
        %1099 = vst [vmem:[%s1098 - $0x6] sm:$0x40] %v1097
        %v1100 = vmul.f32 %v1084, %v771
        %v1101 = vmul.f32 %v1093, %v773
        %v1102 = vadd.f32 %v1100, %v1101
        %v1103 = vadd.f32 %v1102, %v776
        %1104 = vst [vmem:[%s1098 - $0x5] sm:$0x40] %v1103
        %v1105 = vmul.f32 %v1084, %v779
        %v1106 = vmul.f32 %v1093, %v781
        %v1107 = vadd.f32 %v1105, %v1106
        %v1108 = vadd.f32 %v1107, %v784
        %1109 = vst [vmem:[%s1098 - $0x4] sm:$0x40] %v1108
        %v1110 = vmul.f32 %v1084, %v787
        %v1111 = vmul.f32 %v1093, %v789
        %v1112 = vadd.f32 %v1110, %v1111
        %v1113 = vadd.f32 %v1112, %v792
        %1114 = vst [vmem:[%s1098 - $0x3] sm:$0x40] %v1113
        // Predicated region
        $region49: #{traffic_rollout.1} parent=35 // pred_check
          %p1115 = pneg %p803
        $region50: #{traffic_rollout.1} parent=35 // pred_check_branch
          %1117 = sbr.rel (%p1115) target = $region52
        $region51: #{traffic_rollout.1} parent=35 // pred_region
          %1118 = vst [vmem:[#allocation7 - $0x3] sm:$0x8] %v920
          %1119 = vst [vmem:[#allocation7] sm:$0x2] %v915
          %1120 = vst [vmem:[#allocation7 - $0x4] sm:$0xc0] %v1043
          %1121 = vst [vmem:[#allocation7 + $0x2] sm:$0xc] %v1038
        $region52: #{traffic_rollout.1} parent=35 // pred_fallthru
          _
        %s1122 = sadd.s32 %s368, 2
        %p1123 = scmp.lt.s32.totalorder %s1122, %s367
        %s1124 = scalar_lea.vmem %s237, 32
        %v1125 = vld [vmem:[%s1124] sm:$0x1]
        %v1126 = vld [vmem:[%s1124 + $0x1] sm:$0x1]
        %v1127 = vld [vmem:[%s1124 + $0x2] sm:$0x1]
        %v1128 = vld [vmem:[%s1124 + $0x3] sm:$0x1]
        %v1129 = vld [vmem:[%s1124 + $0x4] sm:$0x1]
        %v1130 = vld [vmem:[%s1124 + $0x5] sm:$0x1]
        %v1131 = vld [vmem:[%s1124 + $0x6] sm:$0x1]
        %v1132 = vld [vmem:[%s1124 + $0x7] sm:$0x1]
        %v1133 = vld [vmem:[%s1124 + $0x8] sm:$0x1]
        %v1134 = vld [vmem:[#allocation7] sm:$0x1]
        %v1135 = vld [vmem:[#allocation7 + $0x1] sm:$0x1]
        %v1136 = vld [vmem:[#allocation7 + $0x2] sm:$0x1]
        %v1137 = vld [vmem:[#allocation7 + $0x3] sm:$0x1]
        %v1138 = vld [vmem:[#allocation7 + $0x4] sm:$0x3]
        %v1139 = vmul.f32 %v1133, %v384
        %v1140 = vadd.f32 %v1139, %v386
        %v1141 = vmul.f32 %v1125, %v388
        %v1142 = vmul.f32 %v1126, %v390
        %v1143 = vadd.f32 %v1141, %v1142
        %v1144 = vmul.f32 %v1127, %v393
        %v1145 = vadd.f32 %v1143, %v1144
        %v1146 = vmul.f32 %v1128, %v396
        %v1147 = vadd.f32 %v1145, %v1146
        %v1148 = vmul.f32 %v1129, %v399
        %v1149 = vadd.f32 %v1147, %v1148
        %v1150 = vmul.f32 %v1130, %v402
        %v1151 = vadd.f32 %v1149, %v1150
        %v1152 = vmul.f32 %v1131, %v405
        %v1153 = vadd.f32 %v1151, %v1152
        %v1154 = vmul.f32 %v1132, %v408
        %v1155 = vadd.f32 %v1153, %v1154
        %v1156 = vmul.f32 %v1134, %v411
        %v1157 = vadd.f32 %v1155, %v1156
        %v1158 = vadd.f32 %v1157, %v414
        %v1159 = vmul.f32 %v1158, 0.5
        %1160 = vst [vmem:[#allocation2] sm:$0x1] %v1159
        %v1161 = vmul.f32 %v1125, %v418
        %v1162 = vmul.f32 %v1126, %v420
        %v1163 = vadd.f32 %v1161, %v1162
        %v1164 = vmul.f32 %v1127, %v423
        %v1165 = vadd.f32 %v1163, %v1164
        %v1166 = vmul.f32 %v1128, %v426
        %v1167 = vadd.f32 %v1165, %v1166
        %v1168 = vmul.f32 %v1129, %v429
        %v1169 = vadd.f32 %v1167, %v1168
        %v1170 = vmul.f32 %v1130, %v432
        %v1171 = vadd.f32 %v1169, %v1170
        %v1172 = vmul.f32 %v1131, %v435
        %v1173 = vadd.f32 %v1171, %v1172
        %v1174 = vmul.f32 %v1132, %v438
        %v1175 = vadd.f32 %v1173, %v1174
        %v1176 = vmul.f32 %v1134, %v441
        %v1177 = vadd.f32 %v1175, %v1176
        %v1178 = vadd.f32 %v1177, %v444
        %v1179 = vmul.f32 %v1178, 0.5
        %1180 = vst [vmem:[#allocation2 + $0x1] sm:$0x1] %v1179
        %v1181 = vmul.f32 %v1125, %v448
        %v1182 = vmul.f32 %v1126, %v450
        %v1183 = vadd.f32 %v1181, %v1182
        %v1184 = vmul.f32 %v1127, %v453
        %v1185 = vadd.f32 %v1183, %v1184
        %v1186 = vmul.f32 %v1128, %v456
        %v1187 = vadd.f32 %v1185, %v1186
        %v1188 = vmul.f32 %v1129, %v459
        %v1189 = vadd.f32 %v1187, %v1188
        %v1190 = vmul.f32 %v1130, %v462
        %v1191 = vadd.f32 %v1189, %v1190
        %v1192 = vmul.f32 %v1131, %v465
        %v1193 = vadd.f32 %v1191, %v1192
        %v1194 = vmul.f32 %v1132, %v468
        %v1195 = vadd.f32 %v1193, %v1194
        %v1196 = vmul.f32 %v1134, %v471
        %v1197 = vadd.f32 %v1195, %v1196
        %v1198 = vadd.f32 %v1197, %v474
        %1199 = vst [vmem:[#allocation2 + $0x2] sm:$0x1] %v1198
        %v1200 = vmul.f32 %v1125, %v477
        %v1201 = vmul.f32 %v1126, %v479
        %v1202 = vadd.f32 %v1200, %v1201
        %v1203 = vmul.f32 %v1127, %v482
        %v1204 = vadd.f32 %v1202, %v1203
        %v1205 = vmul.f32 %v1128, %v485
        %v1206 = vadd.f32 %v1204, %v1205
        %v1207 = vmul.f32 %v1129, %v488
        %v1208 = vadd.f32 %v1206, %v1207
        %v1209 = vmul.f32 %v1130, %v491
        %v1210 = vadd.f32 %v1208, %v1209
        %v1211 = vmul.f32 %v1131, %v494
        %v1212 = vadd.f32 %v1210, %v1211
        %v1213 = vmul.f32 %v1132, %v497
        %v1214 = vadd.f32 %v1212, %v1213
        %v1215 = vmul.f32 %v1134, %v500
        %v1216 = vadd.f32 %v1214, %v1215
        %v1217 = vadd.f32 %v1216, %v503
        %v1218 = vmul.f32 %v1217, 0.5
        %1219 = vst [vmem:[#allocation2 + $0x3] sm:$0x1] %v1218
        %v1220 = vld [vmem:[#allocation2] sm:$0xf]
        %v1221 = vtanh.pop %v1220
        %v1222 = vmul.f32 %v1221, 0.5
        %v1223 = vadd.f32 %v1222, 0.5
        %v1225 = vrot.slane %v1135, 7
        %v1227 = vmul.f32 %v1223, %v1225
        %v1229 = vrot.slane %v1221, 2
        %v1231 = vmul.f32 %v1223, %v1229
        %v1233 = vrot.slane %v1231, 7
        %v1235 = vadd.f32 %v1227, %v1233
        %v1236 = vtanh.pop %v1235
        %v1238 = vrot.slane %v1236, 6
        %v1240 = vmul.f32 %v1223, %v1238
        %v1241 = vmul.f32 %v1140, %v528
        %v1242 = vmul.f32 %v1240, %v530
        %v1244 = vrot.slane %v1242, 3
        %v1246 = vadd.f32 %v1241, %v1244
        %v1247 = vmul.f32 %v1136, %v536
        %v1248 = vadd.f32 %v1246, %v1247
        %v1249 = vmul.f32 %v1137, %v539
        %v1250 = vadd.f32 %v1248, %v1249
        %v1251 = vadd.f32 %v1250, %v542
        %v1252 = vmul.f32 %v1251, 0.5
        %1253 = vst [vmem:[#allocation2] sm:$0x1] %v1252
        %v1254 = vmul.f32 %v1140, %v546
        %v1255 = vmul.f32 %v1240, %v548
        %v1257 = vrot.slane %v1255, 3
        %v1259 = vadd.f32 %v1254, %v1257
        %v1260 = vmul.f32 %v1136, %v554
        %v1261 = vadd.f32 %v1259, %v1260
        %v1262 = vmul.f32 %v1137, %v557
        %v1263 = vadd.f32 %v1261, %v1262
        %v1264 = vadd.f32 %v1263, %v560
        %v1265 = vmul.f32 %v1264, 0.5
        %1266 = vst [vmem:[#allocation2 + $0x1] sm:$0x1] %v1265
        %v1267 = vmul.f32 %v1140, %v564
        %v1268 = vmul.f32 %v1240, %v566
        %v1270 = vrot.slane %v1268, 3
        %v1272 = vadd.f32 %v1267, %v1270
        %v1273 = vmul.f32 %v1136, %v572
        %v1274 = vadd.f32 %v1272, %v1273
        %v1275 = vmul.f32 %v1137, %v575
        %v1276 = vadd.f32 %v1274, %v1275
        %v1277 = vadd.f32 %v1276, %v578
        %v1278 = vmul.f32 %v1277, 0.5
        %1279 = vst [vmem:[#allocation2 + $0x2] sm:$0x1] %v1278
        %v1280 = vmul.f32 %v1140, %v582
        %v1281 = vmul.f32 %v1240, %v584
        %v1283 = vrot.slane %v1281, 3
        %v1285 = vadd.f32 %v1280, %v1283
        %v1286 = vmul.f32 %v1136, %v590
        %v1287 = vadd.f32 %v1285, %v1286
        %v1288 = vmul.f32 %v1137, %v593
        %v1289 = vadd.f32 %v1287, %v1288
        %v1290 = vadd.f32 %v1289, %v596
        %v1291 = vmul.f32 %v1290, 0.5
        %1292 = vst [vmem:[#allocation2 + $0x3] sm:$0x1] %v1291
        %v1293 = vmul.f32 %v1140, %v600
        %v1294 = vmul.f32 %v1240, %v602
        %v1296 = vrot.slane %v1294, 3
        %v1298 = vadd.f32 %v1293, %v1296
        %v1299 = vmul.f32 %v1136, %v608
        %v1300 = vadd.f32 %v1298, %v1299
        %v1301 = vmul.f32 %v1137, %v611
        %v1302 = vadd.f32 %v1300, %v1301
        %v1303 = vadd.f32 %v1302, %v614
        %1304 = vst [vmem:[#allocation2 + $0x4] sm:$0x1] %v1303
        %v1305 = vmul.f32 %v1140, %v617
        %v1306 = vmul.f32 %v1240, %v619
        %v1308 = vrot.slane %v1306, 3
        %v1310 = vadd.f32 %v1305, %v1308
        %v1311 = vmul.f32 %v1136, %v625
        %v1312 = vadd.f32 %v1310, %v1311
        %v1313 = vmul.f32 %v1137, %v628
        %v1314 = vadd.f32 %v1312, %v1313
        %v1315 = vadd.f32 %v1314, %v631
        %1316 = vst [vmem:[#allocation2 + $0x5] sm:$0x1] %v1315
        %v1317 = vmul.f32 %v1140, %v634
        %v1318 = vmul.f32 %v1240, %v636
        %v1320 = vrot.slane %v1318, 3
        %v1322 = vadd.f32 %v1317, %v1320
        %v1323 = vmul.f32 %v1136, %v642
        %v1324 = vadd.f32 %v1322, %v1323
        %v1325 = vmul.f32 %v1137, %v645
        %v1326 = vadd.f32 %v1324, %v1325
        %v1327 = vadd.f32 %v1326, %v648
        %v1328 = vmul.f32 %v1327, 0.5
        %1329 = vst [vmem:[#allocation2 + $0x6] sm:$0x1] %v1328
        %v1330 = vmul.f32 %v1140, %v652
        %v1331 = vmul.f32 %v1240, %v654
        %v1333 = vrot.slane %v1331, 3
        %v1335 = vadd.f32 %v1330, %v1333
        %v1336 = vmul.f32 %v1136, %v660
        %v1337 = vadd.f32 %v1335, %v1336
        %v1338 = vmul.f32 %v1137, %v663
        %v1339 = vadd.f32 %v1337, %v1338
        %v1340 = vadd.f32 %v1339, %v666
        %v1341 = vmul.f32 %v1340, 0.5
        %1342 = vst [vmem:[#allocation2 + $0x7] sm:$0x1] %v1341
        %v1343 = vld [vmem:[#allocation2] sm:$0xff]
        %v1344 = vtanh.pop %v1343
        %v1345 = vmul.f32 %v1344, 0.5
        %v1346 = vadd.f32 %v1345, 0.5
        %v1348 = vrot.slane %v1138, 6
        %v1350 = vmul.f32 %v1346, %v1348
        %v1352 = vrot.slane %v1344, 4
        %v1354 = vmul.f32 %v1346, %v1352
        %v1356 = vrot.slane %v1354, 6
        %v1358 = vadd.f32 %v1350, %v1356
        %v1359 = vtanh.pop %v1358
        %v1361 = vrot.slane %v1359, 4
        %v1363 = vmul.f32 %v1346, %v1361
        %v1364 = vmul.f32 %v1363, %v691
        %v1365 = vmul.f32 %v1363, %v693
        %v1367 = vrot.slane %v1365, 1
        %v1369 = vadd.f32 %v1364, %v1367
        %v1370 = vadd.f32 %v1369, %v699
        %v1371 = vmax.f32 %v1370, 0.0
        %v1372 = vmul.f32 %v1363, %v702
        %v1373 = vmul.f32 %v1363, %v704
        %v1375 = vrot.slane %v1373, 1
        %v1377 = vadd.f32 %v1372, %v1375
        %v1378 = vadd.f32 %v1377, %v710
        %v1379 = vmax.f32 %v1378, 0.0
        %v1380 = vmul.f32 %v1363, %v713
        %v1381 = vmul.f32 %v1363, %v715
        %v1383 = vrot.slane %v1381, 1
        %v1385 = vadd.f32 %v1380, %v1383
        %v1386 = vadd.f32 %v1385, %v721
        %v1387 = vmax.f32 %v1386, 0.0
        %v1388 = vmul.f32 %v1363, %v724
        %v1389 = vmul.f32 %v1363, %v726
        %v1391 = vrot.slane %v1389, 1
        %v1393 = vadd.f32 %v1388, %v1391
        %v1394 = vadd.f32 %v1393, %v732
        %v1395 = vmax.f32 %v1394, 0.0
        %v1396 = vmul.f32 %v1371, %v735
        %v1397 = vadd.f32 %v1396, %v737
        %v1398 = vmul.f32 %v1379, %v739
        %v1399 = vadd.f32 %v1397, %v1398
        %v1400 = vmul.f32 %v1387, %v742
        %v1401 = vadd.f32 %v1399, %v1400
        %v1402 = vmul.f32 %v1395, %v745
        %v1403 = vadd.f32 %v1401, %v1402
        %v1404 = vmax.f32 %v1403, 0.0
        %v1405 = vmul.f32 %v1371, %v749
        %v1406 = vadd.f32 %v1405, %v751
        %v1407 = vmul.f32 %v1379, %v753
        %v1408 = vadd.f32 %v1406, %v1407
        %v1409 = vmul.f32 %v1387, %v756
        %v1410 = vadd.f32 %v1408, %v1409
        %v1411 = vmul.f32 %v1395, %v759
        %v1412 = vadd.f32 %v1410, %v1411
        %v1413 = vmax.f32 %v1412, 0.0
        %v1414 = vmul.f32 %v1404, %v763
        %v1415 = vmul.f32 %v1413, %v765
        %v1416 = vadd.f32 %v1414, %v1415
        %v1417 = vadd.f32 %v1416, %v768
        %s1418 = scalar_lea.vmem %s243, 8
        %1419 = vst [vmem:[%s1418 - $0x6] sm:$0x40] %v1417
        %v1420 = vmul.f32 %v1404, %v771
        %v1421 = vmul.f32 %v1413, %v773
        %v1422 = vadd.f32 %v1420, %v1421
        %v1423 = vadd.f32 %v1422, %v776
        %1424 = vst [vmem:[%s1418 - $0x5] sm:$0x40] %v1423
        %v1425 = vmul.f32 %v1404, %v779
        %v1426 = vmul.f32 %v1413, %v781
        %v1427 = vadd.f32 %v1425, %v1426
        %v1428 = vadd.f32 %v1427, %v784
        %1429 = vst [vmem:[%s1418 - $0x4] sm:$0x40] %v1428
        %v1430 = vmul.f32 %v1404, %v787
        %v1431 = vmul.f32 %v1413, %v789
        %v1432 = vadd.f32 %v1430, %v1431
        %v1433 = vadd.f32 %v1432, %v792
        %1434 = vst [vmem:[%s1418 - $0x3] sm:$0x40] %v1433
        // Predicated region
        $region53: #{traffic_rollout.1} parent=35 // pred_check
          %p1435 = pneg %p1123
        $region54: #{traffic_rollout.1} parent=35 // pred_check_branch
          %1437 = sbr.rel (%p1435) target = $region56
        $region55: #{traffic_rollout.1} parent=35 // pred_region
          %1438 = vst [vmem:[#allocation7 - $0x3] sm:$0x8] %v1240
          %1439 = vst [vmem:[#allocation7] sm:$0x2] %v1235
          %1440 = vst [vmem:[#allocation7 - $0x4] sm:$0xc0] %v1363
          %1441 = vst [vmem:[#allocation7 + $0x2] sm:$0xc] %v1358
        $region56: #{traffic_rollout.1} parent=35 // pred_fallthru
          _
        %s1442 = sadd.s32 %s368, 3
        %p1443 = scmp.lt.s32.totalorder %s1442, %s367
        %s1444 = scalar_lea.vmem %s237, 48
        %v1445 = vld [vmem:[%s1444] sm:$0x1]
        %v1446 = vld [vmem:[%s1444 + $0x1] sm:$0x1]
        %v1447 = vld [vmem:[%s1444 + $0x2] sm:$0x1]
        %v1448 = vld [vmem:[%s1444 + $0x3] sm:$0x1]
        %v1449 = vld [vmem:[%s1444 + $0x4] sm:$0x1]
        %v1450 = vld [vmem:[%s1444 + $0x5] sm:$0x1]
        %v1451 = vld [vmem:[%s1444 + $0x6] sm:$0x1]
        %v1452 = vld [vmem:[%s1444 + $0x7] sm:$0x1]
        %v1453 = vld [vmem:[%s1444 + $0x8] sm:$0x1]
        %v1454 = vld [vmem:[#allocation7] sm:$0x1]
        %v1455 = vld [vmem:[#allocation7 + $0x1] sm:$0x1]
        %v1456 = vld [vmem:[#allocation7 + $0x2] sm:$0x1]
        %v1457 = vld [vmem:[#allocation7 + $0x3] sm:$0x1]
        %v1458 = vld [vmem:[#allocation7 + $0x4] sm:$0x3]
        %v1459 = vmul.f32 %v1453, %v384
        %v1460 = vadd.f32 %v1459, %v386
        %v1461 = vmul.f32 %v1445, %v388
        %v1462 = vmul.f32 %v1446, %v390
        %v1463 = vadd.f32 %v1461, %v1462
        %v1464 = vmul.f32 %v1447, %v393
        %v1465 = vadd.f32 %v1463, %v1464
        %v1466 = vmul.f32 %v1448, %v396
        %v1467 = vadd.f32 %v1465, %v1466
        %v1468 = vmul.f32 %v1449, %v399
        %v1469 = vadd.f32 %v1467, %v1468
        %v1470 = vmul.f32 %v1450, %v402
        %v1471 = vadd.f32 %v1469, %v1470
        %v1472 = vmul.f32 %v1451, %v405
        %v1473 = vadd.f32 %v1471, %v1472
        %v1474 = vmul.f32 %v1452, %v408
        %v1475 = vadd.f32 %v1473, %v1474
        %v1476 = vmul.f32 %v1454, %v411
        %v1477 = vadd.f32 %v1475, %v1476
        %v1478 = vadd.f32 %v1477, %v414
        %v1479 = vmul.f32 %v1478, 0.5
        %1480 = vst [vmem:[#allocation2] sm:$0x1] %v1479
        %v1481 = vmul.f32 %v1445, %v418
        %v1482 = vmul.f32 %v1446, %v420
        %v1483 = vadd.f32 %v1481, %v1482
        %v1484 = vmul.f32 %v1447, %v423
        %v1485 = vadd.f32 %v1483, %v1484
        %v1486 = vmul.f32 %v1448, %v426
        %v1487 = vadd.f32 %v1485, %v1486
        %v1488 = vmul.f32 %v1449, %v429
        %v1489 = vadd.f32 %v1487, %v1488
        %v1490 = vmul.f32 %v1450, %v432
        %v1491 = vadd.f32 %v1489, %v1490
        %v1492 = vmul.f32 %v1451, %v435
        %v1493 = vadd.f32 %v1491, %v1492
        %v1494 = vmul.f32 %v1452, %v438
        %v1495 = vadd.f32 %v1493, %v1494
        %v1496 = vmul.f32 %v1454, %v441
        %v1497 = vadd.f32 %v1495, %v1496
        %v1498 = vadd.f32 %v1497, %v444
        %v1499 = vmul.f32 %v1498, 0.5
        %1500 = vst [vmem:[#allocation2 + $0x1] sm:$0x1] %v1499
        %v1501 = vmul.f32 %v1445, %v448
        %v1502 = vmul.f32 %v1446, %v450
        %v1503 = vadd.f32 %v1501, %v1502
        %v1504 = vmul.f32 %v1447, %v453
        %v1505 = vadd.f32 %v1503, %v1504
        %v1506 = vmul.f32 %v1448, %v456
        %v1507 = vadd.f32 %v1505, %v1506
        %v1508 = vmul.f32 %v1449, %v459
        %v1509 = vadd.f32 %v1507, %v1508
        %v1510 = vmul.f32 %v1450, %v462
        %v1511 = vadd.f32 %v1509, %v1510
        %v1512 = vmul.f32 %v1451, %v465
        %v1513 = vadd.f32 %v1511, %v1512
        %v1514 = vmul.f32 %v1452, %v468
        %v1515 = vadd.f32 %v1513, %v1514
        %v1516 = vmul.f32 %v1454, %v471
        %v1517 = vadd.f32 %v1515, %v1516
        %v1518 = vadd.f32 %v1517, %v474
        %1519 = vst [vmem:[#allocation2 + $0x2] sm:$0x1] %v1518
        %v1520 = vmul.f32 %v1445, %v477
        %v1521 = vmul.f32 %v1446, %v479
        %v1522 = vadd.f32 %v1520, %v1521
        %v1523 = vmul.f32 %v1447, %v482
        %v1524 = vadd.f32 %v1522, %v1523
        %v1525 = vmul.f32 %v1448, %v485
        %v1526 = vadd.f32 %v1524, %v1525
        %v1527 = vmul.f32 %v1449, %v488
        %v1528 = vadd.f32 %v1526, %v1527
        %v1529 = vmul.f32 %v1450, %v491
        %v1530 = vadd.f32 %v1528, %v1529
        %v1531 = vmul.f32 %v1451, %v494
        %v1532 = vadd.f32 %v1530, %v1531
        %v1533 = vmul.f32 %v1452, %v497
        %v1534 = vadd.f32 %v1532, %v1533
        %v1535 = vmul.f32 %v1454, %v500
        %v1536 = vadd.f32 %v1534, %v1535
        %v1537 = vadd.f32 %v1536, %v503
        %v1538 = vmul.f32 %v1537, 0.5
        %1539 = vst [vmem:[#allocation2 + $0x3] sm:$0x1] %v1538
        %v1540 = vld [vmem:[#allocation2] sm:$0xf]
        %v1541 = vtanh.pop %v1540
        %v1542 = vmul.f32 %v1541, 0.5
        %v1543 = vadd.f32 %v1542, 0.5
        %v1545 = vrot.slane %v1455, 7
        %v1547 = vmul.f32 %v1543, %v1545
        %v1549 = vrot.slane %v1541, 2
        %v1551 = vmul.f32 %v1543, %v1549
        %v1553 = vrot.slane %v1551, 7
        %v1555 = vadd.f32 %v1547, %v1553
        %v1556 = vtanh.pop %v1555
        %v1558 = vrot.slane %v1556, 6
        %v1560 = vmul.f32 %v1543, %v1558
        %v1561 = vmul.f32 %v1460, %v528
        %v1562 = vmul.f32 %v1560, %v530
        %v1564 = vrot.slane %v1562, 3
        %v1566 = vadd.f32 %v1561, %v1564
        %v1567 = vmul.f32 %v1456, %v536
        %v1568 = vadd.f32 %v1566, %v1567
        %v1569 = vmul.f32 %v1457, %v539
        %v1570 = vadd.f32 %v1568, %v1569
        %v1571 = vadd.f32 %v1570, %v542
        %v1572 = vmul.f32 %v1571, 0.5
        %1573 = vst [vmem:[#allocation2] sm:$0x1] %v1572
        %v1574 = vmul.f32 %v1460, %v546
        %v1575 = vmul.f32 %v1560, %v548
        %v1577 = vrot.slane %v1575, 3
        %v1579 = vadd.f32 %v1574, %v1577
        %v1580 = vmul.f32 %v1456, %v554
        %v1581 = vadd.f32 %v1579, %v1580
        %v1582 = vmul.f32 %v1457, %v557
        %v1583 = vadd.f32 %v1581, %v1582
        %v1584 = vadd.f32 %v1583, %v560
        %v1585 = vmul.f32 %v1584, 0.5
        %1586 = vst [vmem:[#allocation2 + $0x1] sm:$0x1] %v1585
        %v1587 = vmul.f32 %v1460, %v564
        %v1588 = vmul.f32 %v1560, %v566
        %v1590 = vrot.slane %v1588, 3
        %v1592 = vadd.f32 %v1587, %v1590
        %v1593 = vmul.f32 %v1456, %v572
        %v1594 = vadd.f32 %v1592, %v1593
        %v1595 = vmul.f32 %v1457, %v575
        %v1596 = vadd.f32 %v1594, %v1595
        %v1597 = vadd.f32 %v1596, %v578
        %v1598 = vmul.f32 %v1597, 0.5
        %1599 = vst [vmem:[#allocation2 + $0x2] sm:$0x1] %v1598
        %v1600 = vmul.f32 %v1460, %v582
        %v1601 = vmul.f32 %v1560, %v584
        %v1603 = vrot.slane %v1601, 3
        %v1605 = vadd.f32 %v1600, %v1603
        %v1606 = vmul.f32 %v1456, %v590
        %v1607 = vadd.f32 %v1605, %v1606
        %v1608 = vmul.f32 %v1457, %v593
        %v1609 = vadd.f32 %v1607, %v1608
        %v1610 = vadd.f32 %v1609, %v596
        %v1611 = vmul.f32 %v1610, 0.5
        %1612 = vst [vmem:[#allocation2 + $0x3] sm:$0x1] %v1611
        %v1613 = vmul.f32 %v1460, %v600
        %v1614 = vmul.f32 %v1560, %v602
        %v1616 = vrot.slane %v1614, 3
        %v1618 = vadd.f32 %v1613, %v1616
        %v1619 = vmul.f32 %v1456, %v608
        %v1620 = vadd.f32 %v1618, %v1619
        %v1621 = vmul.f32 %v1457, %v611
        %v1622 = vadd.f32 %v1620, %v1621
        %v1623 = vadd.f32 %v1622, %v614
        %1624 = vst [vmem:[#allocation2 + $0x4] sm:$0x1] %v1623
        %v1625 = vmul.f32 %v1460, %v617
        %v1626 = vmul.f32 %v1560, %v619
        %v1628 = vrot.slane %v1626, 3
        %v1630 = vadd.f32 %v1625, %v1628
        %v1631 = vmul.f32 %v1456, %v625
        %v1632 = vadd.f32 %v1630, %v1631
        %v1633 = vmul.f32 %v1457, %v628
        %v1634 = vadd.f32 %v1632, %v1633
        %v1635 = vadd.f32 %v1634, %v631
        %1636 = vst [vmem:[#allocation2 + $0x5] sm:$0x1] %v1635
        %v1637 = vmul.f32 %v1460, %v634
        %v1638 = vmul.f32 %v1560, %v636
        %v1640 = vrot.slane %v1638, 3
        %v1642 = vadd.f32 %v1637, %v1640
        %v1643 = vmul.f32 %v1456, %v642
        %v1644 = vadd.f32 %v1642, %v1643
        %v1645 = vmul.f32 %v1457, %v645
        %v1646 = vadd.f32 %v1644, %v1645
        %v1647 = vadd.f32 %v1646, %v648
        %v1648 = vmul.f32 %v1647, 0.5
        %1649 = vst [vmem:[#allocation2 + $0x6] sm:$0x1] %v1648
        %v1650 = vmul.f32 %v1460, %v652
        %v1651 = vmul.f32 %v1560, %v654
        %v1653 = vrot.slane %v1651, 3
        %v1655 = vadd.f32 %v1650, %v1653
        %v1656 = vmul.f32 %v1456, %v660
        %v1657 = vadd.f32 %v1655, %v1656
        %v1658 = vmul.f32 %v1457, %v663
        %v1659 = vadd.f32 %v1657, %v1658
        %v1660 = vadd.f32 %v1659, %v666
        %v1661 = vmul.f32 %v1660, 0.5
        %1662 = vst [vmem:[#allocation2 + $0x7] sm:$0x1] %v1661
        %v1663 = vld [vmem:[#allocation2] sm:$0xff]
        %v1664 = vtanh.pop %v1663
        %v1665 = vmul.f32 %v1664, 0.5
        %v1666 = vadd.f32 %v1665, 0.5
        %v1668 = vrot.slane %v1458, 6
        %v1670 = vmul.f32 %v1666, %v1668
        %v1672 = vrot.slane %v1664, 4
        %v1674 = vmul.f32 %v1666, %v1672
        %v1676 = vrot.slane %v1674, 6
        %v1678 = vadd.f32 %v1670, %v1676
        %v1679 = vtanh.pop %v1678
        %v1681 = vrot.slane %v1679, 4
        %v1683 = vmul.f32 %v1666, %v1681
        %v1684 = vmul.f32 %v1683, %v691
        %v1685 = vmul.f32 %v1683, %v693
        %v1687 = vrot.slane %v1685, 1
        %v1689 = vadd.f32 %v1684, %v1687
        %v1690 = vadd.f32 %v1689, %v699
        %v1691 = vmax.f32 %v1690, 0.0
        %v1692 = vmul.f32 %v1683, %v702
        %v1693 = vmul.f32 %v1683, %v704
        %v1695 = vrot.slane %v1693, 1
        %v1697 = vadd.f32 %v1692, %v1695
        %v1698 = vadd.f32 %v1697, %v710
        %v1699 = vmax.f32 %v1698, 0.0
        %v1700 = vmul.f32 %v1683, %v713
        %v1701 = vmul.f32 %v1683, %v715
        %v1703 = vrot.slane %v1701, 1
        %v1705 = vadd.f32 %v1700, %v1703
        %v1706 = vadd.f32 %v1705, %v721
        %v1707 = vmax.f32 %v1706, 0.0
        %v1708 = vmul.f32 %v1683, %v724
        %v1709 = vmul.f32 %v1683, %v726
        %v1711 = vrot.slane %v1709, 1
        %v1713 = vadd.f32 %v1708, %v1711
        %v1714 = vadd.f32 %v1713, %v732
        %v1715 = vmax.f32 %v1714, 0.0
        %v1716 = vmul.f32 %v1691, %v735
        %v1717 = vadd.f32 %v1716, %v737
        %v1718 = vmul.f32 %v1699, %v739
        %v1719 = vadd.f32 %v1717, %v1718
        %v1720 = vmul.f32 %v1707, %v742
        %v1721 = vadd.f32 %v1719, %v1720
        %v1722 = vmul.f32 %v1715, %v745
        %v1723 = vadd.f32 %v1721, %v1722
        %v1724 = vmax.f32 %v1723, 0.0
        %v1725 = vmul.f32 %v1691, %v749
        %v1726 = vadd.f32 %v1725, %v751
        %v1727 = vmul.f32 %v1699, %v753
        %v1728 = vadd.f32 %v1726, %v1727
        %v1729 = vmul.f32 %v1707, %v756
        %v1730 = vadd.f32 %v1728, %v1729
        %v1731 = vmul.f32 %v1715, %v759
        %v1732 = vadd.f32 %v1730, %v1731
        %v1733 = vmax.f32 %v1732, 0.0
        %v1734 = vmul.f32 %v1724, %v763
        %v1735 = vmul.f32 %v1733, %v765
        %v1736 = vadd.f32 %v1734, %v1735
        %v1737 = vadd.f32 %v1736, %v768
        %s1738 = scalar_lea.vmem %s243, 12
        %1739 = vst [vmem:[%s1738 - $0x6] sm:$0x40] %v1737
        %v1740 = vmul.f32 %v1724, %v771
        %v1741 = vmul.f32 %v1733, %v773
        %v1742 = vadd.f32 %v1740, %v1741
        %v1743 = vadd.f32 %v1742, %v776
        %1744 = vst [vmem:[%s1738 - $0x5] sm:$0x40] %v1743
        %v1745 = vmul.f32 %v1724, %v779
        %v1746 = vmul.f32 %v1733, %v781
        %v1747 = vadd.f32 %v1745, %v1746
        %v1748 = vadd.f32 %v1747, %v784
        %1749 = vst [vmem:[%s1738 - $0x4] sm:$0x40] %v1748
        %v1750 = vmul.f32 %v1724, %v787
        %v1751 = vmul.f32 %v1733, %v789
        %v1752 = vadd.f32 %v1750, %v1751
        %v1753 = vadd.f32 %v1752, %v792
        %1754 = vst [vmem:[%s1738 - $0x3] sm:$0x40] %v1753
        // Predicated region
        $region57: #{traffic_rollout.1} parent=35 // pred_check
          %p1755 = pneg %p1443
        $region58: #{traffic_rollout.1} parent=35 // pred_check_branch
          %1757 = sbr.rel (%p1755) target = $region60
        $region59: #{traffic_rollout.1} parent=35 // pred_region
          %1758 = vst [vmem:[#allocation7 - $0x3] sm:$0x8] %v1560
          %1759 = vst [vmem:[#allocation7] sm:$0x2] %v1555
          %1760 = vst [vmem:[#allocation7 - $0x4] sm:$0xc0] %v1683
          %1761 = vst [vmem:[#allocation7 + $0x2] sm:$0xc] %v1678
        $region60: #{traffic_rollout.1} parent=35 // pred_fallthru
          _
        %s1762 = smul.u32 4, %s20
        %p1763 = scmp.lt.s32.totalorder %s1762, 11
        %s1764 = scalar_select %p1763, %s1762, 11
        %s1765 = smul.addr %s1764, 4
        %s1766 = scalar_lea.vmem %s4, %s1765
        // Predicated region
        $region61: #{traffic_rollout.1} parent=35 // pred_check
          %p1767 = pneg %p127
        $region62: #{traffic_rollout.1} parent=35 // pred_check_branch
          %1769 = sbr.rel (%p1767) target = $region64
        $region63: #{traffic_rollout.1} parent=35 // pred_region
          %s1770 = smul.u32 4, %s20
        $region64: #{traffic_rollout.1} parent=35 // pred_fallthru
          _
        // Predicated region
        $region65: #{traffic_rollout.1} parent=35 // pred_check
          %p1771 = pneg %p148
        $region66: #{traffic_rollout.1} parent=35 // pred_check_branch
          %1773 = sbr.rel (%p1771) target = $region68
        $region67: #{traffic_rollout.1} parent=35 // pred_region
          %s1775 = ssub.s32 128, 128
          %1776 = vsyncadd [#allocation5], %s1775
          %s1778 = sshll.u32 [#allocation7], 4
          %s1779 = int_to_ptr.vmem [resolvable:$true] %s1778
          %1781 = dma.vmem_to_hbm [thread:$0]  %s1779, 128, %s5, [#allocation5]
        $region68: #{traffic_rollout.1} parent=35 // pred_fallthru
          _
        // Predicated region
        $region69: #{traffic_rollout.1} parent=35 // pred_check
          %p1782 = pneg %p148
        $region70: #{traffic_rollout.1} parent=35 // pred_check_branch
          %1784 = sbr.rel (%p1782) target = $region72
        $region71: #{traffic_rollout.1} parent=35 // pred_region
          %1785 = dma.done [#allocation5], 128
        $region72: #{traffic_rollout.1} parent=35 // pred_fallthru
          _
      $region36: #{traffic_rollout.1} parent=5 // pred_fallthru
        _
      %p1786 = scmp.le.s32.totalorder 2, %s15
      // Predicated region
      $region73: #{traffic_rollout.1} parent=5 // pred_check
        %p1787 = pneg %p1786
      $region74: #{traffic_rollout.1} parent=5 // pred_check_branch
        %1789 = sbr.rel (%p1787) target = $region76
      $region75: #{traffic_rollout.1} parent=5 // pred_region
        %s1790 = ssub.s32 %s15, 2
        // Predicated region
        $region77: #{traffic_rollout.1} parent=75 // pred_check
          %p1791 = pneg %p133
        $region78: #{traffic_rollout.1} parent=75 // pred_check_branch
          %1793 = sbr.rel (%p1791) target = $region80
        $region79: #{traffic_rollout.1} parent=75 // pred_region
          %s1794 = smul.u32 4, %s21
          %p1795 = scmp.lt.s32.totalorder %s1794, 11
          %s1796 = scalar_select %p1795, %s1794, 11
          %s1797 = smul.addr %s1796, 4
          %s1798 = scalar_lea.vmem %s4, %s1797
        $region80: #{traffic_rollout.1} parent=75 // pred_fallthru
          _
      $region76: #{traffic_rollout.1} parent=5 // pred_fallthru
        _
    $region6: #{traffic_rollout.1} parent=1 // loop_footer
      %s19 = sadd.s32 1, %s15
    $region7: #{traffic_rollout.1} parent=1 // loop_footer_branch
      %14 = sbr.rel target = $region3
    $region8: #{traffic_rollout.1} parent=1 // loop_exit
      _
    %1799 = vsyncpa [#allocation5], 1
    %s1800 = scalar_lea.sflag [#allocation5], 1
    %1801 = vsyncpa %s1800, 1
    %1802 = vsyncpa [#allocation6], 1
    %s1803 = scalar_lea.sflag [#allocation6], 1
    %1804 = vsyncpa %s1803, 1

</llo_original>
